<compile_context>
chip_gen: v7x
topology: tpu7x:2x2x1
jax: 0.10.0
libtpu: 0.0.40
codegen_flags: <defaults>
</compile_context>

<pallas_src>
import functools

import jax
import jax.numpy as jnp
from jax import lax
from jax.experimental import pallas as pl
from jax.experimental.pallas import tpu as pltpu


def lstm_kernel(x_ref, w_ih_ref, w_hh_ref, b_ref, w_out_ref, b_out_ref,
                out_ref, gx_scr, h_scr, c_scr, *, hidden_padded):
    """Full LSTM recurrence + final Linear + Sigmoid in one kernel.

    x_ref:     (T, Bp, I)    input sequence, time-major, batch-padded
    w_ih_ref:  (I, 4Hp)      input->gates weight (per-gate zero-padded, transposed)
    w_hh_ref:  (Hp, 4Hp)     hidden->gates weight (per-gate zero-padded, transposed)
    b_ref:     (1, 4Hp)      combined bias (b_ih + b_hh), zero in padded lanes
    w_out_ref: (Hp, O)       final linear weight (zero rows in padded H lanes)
    b_out_ref: (1, O)        final linear bias
    out_ref:   (Bp, O)       sigmoid(linear(h_T))
    gx_scr:    (T, Bp, 4Hp)  scratch: precomputed input projection
    h_scr:     (Bp, Hp)      hidden-state scratch
    c_scr:     (Bp, Hp)      cell-state scratch
    """
    Hp = hidden_padded
    T, Bp, inp = x_ref.shape

    # ---- input projection for all T timesteps: one big MXU matmul, no
    # ---- loop-carried dependency, bias added once.
    x_all = x_ref[...].reshape(T * Bp, inp)                       # layout no-op
    gx = (jnp.dot(x_all, w_ih_ref[...], preferred_element_type=jnp.float32)
          + b_ref[...])                                           # (T*Bp, 4Hp)
    gx_scr[...] = gx.reshape(T, Bp, 4 * Hp)

    h_scr[...] = jnp.zeros_like(h_scr)
    c_scr[...] = jnp.zeros_like(c_scr)

    def step(t, carry):
        h_prev = h_scr[...]
        c_prev = c_scr[...]
        # Single matmul on the recurrent critical path.
        gates = gx_scr[t] + jnp.dot(h_prev, w_hh_ref[...],
                                    preferred_element_type=jnp.float32)  # (Bp, 4Hp)

        # Each gate is exactly one 128-lane group -> free slices.
        i_g = jax.nn.sigmoid(gates[:, 0 * Hp:1 * Hp])
        f_g = jax.nn.sigmoid(gates[:, 1 * Hp:2 * Hp])
        g_g = jnp.tanh(gates[:, 2 * Hp:3 * Hp])
        o_g = jax.nn.sigmoid(gates[:, 3 * Hp:4 * Hp])

        c_new = f_g * c_prev + i_g * g_g
        h_new = o_g * jnp.tanh(c_new)

        c_scr[...] = c_new
        h_scr[...] = h_new
        return carry

    # T is small and static -> fully unroll for LLO scheduling visibility.
    lax.fori_loop(0, T, step, 0, unroll=True)

    h_last = h_scr[...]                       # == lstmOutput[:, -1, :] (padded)
    logits = (jnp.dot(h_last, w_out_ref[...], preferred_element_type=jnp.float32)
              + b_out_ref[...])               # (Bp, O)
    out_ref[...] = jax.nn.sigmoid(logits).astype(out_ref.dtype)


def _round_up(n, m):
    return (n + m - 1) // m * m


def lstm_model_forward(x, params):
    """x: (B, T, I) float32 (PyTorch batch_first convention). Returns (B, O)."""
    w_ih, w_hh, b_ih, b_hh, w_lin, b_lin = (
        params["w_ih"], params["w_hh"], params["b_ih"], params["b_hh"],
        params["w_lin"], params["b_lin"])

    B, T, I = x.shape
    H = w_hh.shape[1]
    O = w_lin.shape[0]
    Hp = _round_up(H, 128)    # each gate -> one full 128-lane group
    Bp = _round_up(B, 8)      # one full sublane group
    f32 = jnp.float32

    # --- zero-pad each of the 4 gates from H to Hp (must be ZERO padding: ---
    # --- padded lanes then keep c=h=0 and the zero W_out rows keep the     ---
    # --- final linear exact).                                              ---
    def pad_gate_rows(w):                        # (4H, X) -> (4Hp, X)
        w4 = w.reshape(4, H, -1)
        return jnp.pad(w4, ((0, 0), (0, Hp - H), (0, 0))).reshape(4 * Hp, -1)

    def pad_gate_vec(v):                         # (4H,) -> (4Hp,)
        return jnp.pad(v.reshape(4, H), ((0, 0), (0, Hp - H))).reshape(4 * Hp)

    w_ih_p = pad_gate_rows(w_ih.astype(f32))                       # (4Hp, I)
    w_hh_p = pad_gate_rows(w_hh.astype(f32))                       # (4Hp, H)
    w_hh_p = jnp.pad(w_hh_p, ((0, 0), (0, Hp - H)))                # (4Hp, Hp)
    b_comb = pad_gate_vec(b_ih.astype(f32)) + pad_gate_vec(b_hh.astype(f32))

    # Pre-transpose so every in-kernel matmul is a plain row-major MXU matmul.
    w_ih_t = w_ih_p.T                                              # (I, 4Hp)
    w_hh_t = w_hh_p.T                                              # (Hp, 4Hp)
    b = b_comb.reshape(1, 4 * Hp)                                  # (1, 4Hp)
    w_out = jnp.pad(w_lin.astype(f32), ((0, 0), (0, Hp - H))).T    # (Hp, O)
    b_out = b_lin.astype(f32).reshape(1, O)                        # (1, O)

    # Time-major, batch padded to a full sublane group.
    x_tbi = jnp.transpose(x.astype(f32), (1, 0, 2))                # (T, B, I)
    x_tbi = jnp.pad(x_tbi, ((0, 0), (0, Bp - B), (0, 0)))          # (T, Bp, I)

    kernel = functools.partial(lstm_kernel, hidden_padded=Hp)
    vmem = pl.BlockSpec(memory_space=pltpu.MemorySpace.VMEM)

    out_padded = pl.pallas_call(
        kernel,
        out_shape=jax.ShapeDtypeStruct((Bp, O), f32),
        in_specs=[vmem] * 6,
        out_specs=vmem,
        scratch_shapes=[
            pltpu.VMEM((T, Bp, 4 * Hp), f32),   # precomputed input projection
            pltpu.VMEM((Bp, Hp), f32),          # h state
            pltpu.VMEM((Bp, Hp), f32),          # c state
        ],
    )(x_tbi, w_ih_t, w_hh_t, b, w_out, b_out)

    return out_padded[:B]                                          # (B, O)


def init_params(key, input_size=4, hidden_size=100, output_size=1):
    """Deterministic init matching PyTorch shapes (uniform ±1/sqrt(H))."""
    k = jax.random.split(key, 6)
    bound = 1.0 / jnp.sqrt(hidden_size)
    u = lambda kk, shape: jax.random.uniform(kk, shape, jnp.float32, -bound, bound)
    return {
        "w_ih": u(k[0], (4 * hidden_size, input_size)),   # weight_ih_l0
        "w_hh": u(k[1], (4 * hidden_size, hidden_size)),  # weight_hh_l0
        "b_ih": u(k[2], (4 * hidden_size,)),              # bias_ih_l0
        "b_hh": u(k[3], (4 * hidden_size,)),              # bias_hh_l0
        "w_lin": u(k[4], (output_size, hidden_size)),     # linear.weight
        "b_lin": u(k[5], (output_size,)),                 # linear.bias
    }


def _reference_forward(x, params):
    """Pure-JAX reference of the PyTorch forward (for sanity check)."""
    H = params["w_hh"].shape[1]
    w_ih_t = params["w_ih"].T
    w_hh_t = params["w_hh"].T
    b = params["b_ih"] + params["b_hh"]

    def step(carry, x_t):
        h, c = carry
        gates = x_t @ w_ih_t + h @ w_hh_t + b
        i = jax.nn.sigmoid(gates[:, 0 * H:1 * H])
        f = jax.nn.sigmoid(gates[:, 1 * H:2 * H])
        g = jnp.tanh(gates[:, 2 * H:3 * H])
        o = jax.nn.sigmoid(gates[:, 3 * H:4 * H])
        c = f * c + i * g
        h = o * jnp.tanh(c)
        return (h, c), None

    B = x.shape[0]
    h0 = jnp.zeros((B, H), jnp.float32)
    (h_last, _), _ = lax.scan(step, (h0, h0), jnp.transpose(x, (1, 0, 2)))
    return jax.nn.sigmoid(h_last @ params["w_lin"].T + params["b_lin"])


if __name__ == "__main__":
    key = jax.random.PRNGKey(0)
    k_param, k_x = jax.random.split(key)

    B, T, I, H, O = 2, 8, 4, 100, 1   # module defaults: inputSize=4, hidden=100, output=1
    params = init_params(k_param, input_size=I, hidden_size=H, output_size=O)
    x = jax.random.normal(k_x, (B, T, I), dtype=jnp.float32)

    out = jax.block_until_ready(lstm_model_forward(x, params))
    ref = jax.block_until_ready(_reference_forward(x, params))

    assert out.shape == (B, O)
    assert jnp.allclose(out, ref, atol=1e-5, rtol=1e-5)

    print("KERNEL_OK")
</pallas_src>

<mosaic_0001>
module attributes {stable_mosaic.version = 11 : i64} {
  func.func @lstm_kernel(%arg0: memref<8x8x4xf32, #tpu.memory_space<vmem>>, %arg1: memref<4x512xf32, #tpu.memory_space<vmem>>, %arg2: memref<128x512xf32, #tpu.memory_space<vmem>>, %arg3: memref<1x512xf32, #tpu.memory_space<vmem>>, %arg4: memref<128x1xf32, #tpu.memory_space<vmem>>, %arg5: memref<1x1xf32, #tpu.memory_space<vmem>>, %arg6: memref<8x1xf32, #tpu.memory_space<vmem>>, %arg7: memref<8x8x512xf32, #tpu.memory_space<vmem>>, %arg8: memref<8x128xf32, #tpu.memory_space<vmem>>, %arg9: memref<8x128xf32, #tpu.memory_space<vmem>>) attributes {dimension_semantics = [], scalar_prefetch = 0 : i64, scratch_operands = 3 : i64, tpu.core_type = #tpu.core_type<tc>} {
    %c0 = arith.constant 0 : index
    %c0_0 = arith.constant 0 : index
    %c0_1 = arith.constant 0 : index
    %0 = vector.load %arg0[%c0, %c0_0, %c0_1] : memref<8x8x4xf32, #tpu.memory_space<vmem>>, vector<8x8x4xf32>
    %1 = vector.shape_cast %0 : vector<8x8x4xf32> to vector<64x4xf32>
    %c0_2 = arith.constant 0 : index
    %c0_3 = arith.constant 0 : index
    %2 = vector.load %arg1[%c0_2, %c0_3] : memref<4x512xf32, #tpu.memory_space<vmem>>, vector<4x512xf32>
    %cst = arith.constant dense<0.000000e+00> : vector<64x512xf32>
    %3 = tpu.matmul %1, %2, %cst {dimension_numbers = #tpu.dot_dimension_numbers<[1], [0], [0], [1], [0, 0, 1, 1], [], []>} : vector<64x4xf32>, vector<4x512xf32>, vector<64x512xf32> -> vector<64x512xf32>
    %c0_4 = arith.constant 0 : index
    %c0_5 = arith.constant 0 : index
    %4 = vector.load %arg3[%c0_4, %c0_5] : memref<1x512xf32, #tpu.memory_space<vmem>>, vector<1x512xf32>
    %5 = vector.broadcast %4 : vector<1x512xf32> to vector<64x512xf32>
    %6 = arith.addf %3, %5 : vector<64x512xf32>
    %7 = vector.shape_cast %6 : vector<64x512xf32> to vector<8x8x512xf32>
    %c0_6 = arith.constant 0 : index
    %c0_7 = arith.constant 0 : index
    %c0_8 = arith.constant 0 : index
    %8 = vector.load %arg7[%c0_6, %c0_7, %c0_8] : memref<8x8x512xf32, #tpu.memory_space<vmem>>, vector<8x8x512xf32>
    tpu.vector_store %arg7[%c0_6, %c0_7, %c0_8], %7 {strides = array<i32>} : memref<8x8x512xf32, #tpu.memory_space<vmem>>, vector<8x8x512xf32>,
    %cst_9 = arith.constant 0.000000e+00 : f32
    %9 = vector.broadcast %cst_9 : f32 to vector<8x128xf32>
    %c0_10 = arith.constant 0 : index
    %c0_11 = arith.constant 0 : index
    %10 = vector.load %arg8[%c0_10, %c0_11] : memref<8x128xf32, #tpu.memory_space<vmem>>, vector<8x128xf32>
    tpu.vector_store %arg8[%c0_10, %c0_11], %9 {strides = array<i32>} : memref<8x128xf32, #tpu.memory_space<vmem>>, vector<8x128xf32>,
    %cst_12 = arith.constant 0.000000e+00 : f32
    %11 = vector.broadcast %cst_12 : f32 to vector<8x128xf32>
    %c0_13 = arith.constant 0 : index
    %c0_14 = arith.constant 0 : index
    %12 = vector.load %arg9[%c0_13, %c0_14] : memref<8x128xf32, #tpu.memory_space<vmem>>, vector<8x128xf32>
    tpu.vector_store %arg9[%c0_13, %c0_14], %11 {strides = array<i32>} : memref<8x128xf32, #tpu.memory_space<vmem>>, vector<8x128xf32>,
    %c0_i32 = arith.constant 0 : i32
    %c0_15 = arith.constant 0 : index
    %c0_16 = arith.constant 0 : index
    %13 = vector.load %arg8[%c0_15, %c0_16] : memref<8x128xf32, #tpu.memory_space<vmem>>, vector<8x128xf32>
    %c0_17 = arith.constant 0 : index
    %c0_18 = arith.constant 0 : index
    %14 = vector.load %arg9[%c0_17, %c0_18] : memref<8x128xf32, #tpu.memory_space<vmem>>, vector<8x128xf32>
    %15 = arith.index_cast %c0_i32 : i32 to index
    %c0_19 = arith.constant 0 : index
    %c0_20 = arith.constant 0 : index
    %16 = vector.load %arg7[%15, %c0_19, %c0_20] : memref<8x8x512xf32, #tpu.memory_space<vmem>>, vector<1x8x512xf32>
    %17 = vector.shape_cast %16 : vector<1x8x512xf32> to vector<8x512xf32>
    %c0_21 = arith.constant 0 : index
    %c0_22 = arith.constant 0 : index
    %18 = vector.load %arg2[%c0_21, %c0_22] : memref<128x512xf32, #tpu.memory_space<vmem>>, vector<128x512xf32>
    %cst_23 = arith.constant dense<0.000000e+00> : vector<8x512xf32>
    %19 = tpu.matmul %13, %18, %cst_23 {dimension_numbers = #tpu.dot_dimension_numbers<[1], [0], [0], [1], [0, 0, 1, 1], [], []>} : vector<8x128xf32>, vector<128x512xf32>, vector<8x512xf32> -> vector<8x512xf32>
    %20 = arith.addf %17, %19 : vector<8x512xf32>
    %21 = vector.extract_strided_slice %20 {offsets = [0, 0], sizes = [8, 128], strides = [1, 1]} : vector<8x512xf32> to vector<8x128xf32>
    %22 = arith.negf %21 : vector<8x128xf32>
    %23 = math.exp %22 : vector<8x128xf32>
    %cst_24 = arith.constant 1.000000e+00 : f32
    %24 = vector.broadcast %cst_24 : f32 to vector<8x128xf32>
    %25 = arith.addf %24, %23 : vector<8x128xf32>
    %26 = arith.divf %24, %25 : vector<8x128xf32>
    %27 = vector.extract_strided_slice %20 {offsets = [0, 128], sizes = [8, 128], strides = [1, 1]} : vector<8x512xf32> to vector<8x128xf32>
    %28 = arith.negf %27 : vector<8x128xf32>
    %29 = math.exp %28 : vector<8x128xf32>
    %cst_25 = arith.constant 1.000000e+00 : f32
    %30 = vector.broadcast %cst_25 : f32 to vector<8x128xf32>
    %31 = arith.addf %30, %29 : vector<8x128xf32>
    %32 = arith.divf %30, %31 : vector<8x128xf32>
    %33 = vector.extract_strided_slice %20 {offsets = [0, 256], sizes = [8, 128], strides = [1, 1]} : vector<8x512xf32> to vector<8x128xf32>
    %34 = math.tanh %33 : vector<8x128xf32>
    %35 = vector.extract_strided_slice %20 {offsets = [0, 384], sizes = [8, 128], strides = [1, 1]} : vector<8x512xf32> to vector<8x128xf32>
    %36 = arith.negf %35 : vector<8x128xf32>
    %37 = math.exp %36 : vector<8x128xf32>
    %cst_26 = arith.constant 1.000000e+00 : f32
    %38 = vector.broadcast %cst_26 : f32 to vector<8x128xf32>
    %39 = arith.addf %38, %37 : vector<8x128xf32>
    %40 = arith.divf %38, %39 : vector<8x128xf32>
    %41 = arith.mulf %32, %14 : vector<8x128xf32>
    %42 = arith.mulf %26, %34 : vector<8x128xf32>
    %43 = arith.addf %41, %42 : vector<8x128xf32>
    %44 = math.tanh %43 : vector<8x128xf32>
    %45 = arith.mulf %40, %44 : vector<8x128xf32>
    %c0_27 = arith.constant 0 : index
    %c0_28 = arith.constant 0 : index
    %46 = vector.load %arg9[%c0_27, %c0_28] : memref<8x128xf32, #tpu.memory_space<vmem>>, vector<8x128xf32>
    tpu.vector_store %arg9[%c0_27, %c0_28], %43 {strides = array<i32>} : memref<8x128xf32, #tpu.memory_space<vmem>>, vector<8x128xf32>,
    %c0_29 = arith.constant 0 : index
    %c0_30 = arith.constant 0 : index
    %47 = vector.load %arg8[%c0_29, %c0_30] : memref<8x128xf32, #tpu.memory_space<vmem>>, vector<8x128xf32>
    tpu.vector_store %arg8[%c0_29, %c0_30], %45 {strides = array<i32>} : memref<8x128xf32, #tpu.memory_space<vmem>>, vector<8x128xf32>,
    %c1_i32 = arith.constant 1 : i32
    %c0_31 = arith.constant 0 : index
    %c0_32 = arith.constant 0 : index
    %48 = vector.load %arg8[%c0_31, %c0_32] : memref<8x128xf32, #tpu.memory_space<vmem>>, vector<8x128xf32>
    %c0_33 = arith.constant 0 : index
    %c0_34 = arith.constant 0 : index
    %49 = vector.load %arg9[%c0_33, %c0_34] : memref<8x128xf32, #tpu.memory_space<vmem>>, vector<8x128xf32>
    %50 = arith.index_cast %c1_i32 : i32 to index
    %c0_35 = arith.constant 0 : index
    %c0_36 = arith.constant 0 : index
    %51 = vector.load %arg7[%50, %c0_35, %c0_36] : memref<8x8x512xf32, #tpu.memory_space<vmem>>, vector<1x8x512xf32>
    %52 = vector.shape_cast %51 : vector<1x8x512xf32> to vector<8x512xf32>
    %c0_37 = arith.constant 0 : index
    %c0_38 = arith.constant 0 : index
    %53 = vector.load %arg2[%c0_37, %c0_38] : memref<128x512xf32, #tpu.memory_space<vmem>>, vector<128x512xf32>
    %cst_39 = arith.constant dense<0.000000e+00> : vector<8x512xf32>
    %54 = tpu.matmul %48, %53, %cst_39 {dimension_numbers = #tpu.dot_dimension_numbers<[1], [0], [0], [1], [0, 0, 1, 1], [], []>} : vector<8x128xf32>, vector<128x512xf32>, vector<8x512xf32> -> vector<8x512xf32>
    %55 = arith.addf %52, %54 : vector<8x512xf32>
    %56 = vector.extract_strided_slice %55 {offsets = [0, 0], sizes = [8, 128], strides = [1, 1]} : vector<8x512xf32> to vector<8x128xf32>
    %57 = arith.negf %56 : vector<8x128xf32>
    %58 = math.exp %57 : vector<8x128xf32>
    %cst_40 = arith.constant 1.000000e+00 : f32
    %59 = vector.broadcast %cst_40 : f32 to vector<8x128xf32>
    %60 = arith.addf %59, %58 : vector<8x128xf32>
    %61 = arith.divf %59, %60 : vector<8x128xf32>
    %62 = vector.extract_strided_slice %55 {offsets = [0, 128], sizes = [8, 128], strides = [1, 1]} : vector<8x512xf32> to vector<8x128xf32>
    %63 = arith.negf %62 : vector<8x128xf32>
    %64 = math.exp %63 : vector<8x128xf32>
    %cst_41 = arith.constant 1.000000e+00 : f32
    %65 = vector.broadcast %cst_41 : f32 to vector<8x128xf32>
    %66 = arith.addf %65, %64 : vector<8x128xf32>
    %67 = arith.divf %65, %66 : vector<8x128xf32>
    %68 = vector.extract_strided_slice %55 {offsets = [0, 256], sizes = [8, 128], strides = [1, 1]} : vector<8x512xf32> to vector<8x128xf32>
    %69 = math.tanh %68 : vector<8x128xf32>
    %70 = vector.extract_strided_slice %55 {offsets = [0, 384], sizes = [8, 128], strides = [1, 1]} : vector<8x512xf32> to vector<8x128xf32>
    %71 = arith.negf %70 : vector<8x128xf32>
    %72 = math.exp %71 : vector<8x128xf32>
    %cst_42 = arith.constant 1.000000e+00 : f32
    %73 = vector.broadcast %cst_42 : f32 to vector<8x128xf32>
    %74 = arith.addf %73, %72 : vector<8x128xf32>
    %75 = arith.divf %73, %74 : vector<8x128xf32>
    %76 = arith.mulf %67, %49 : vector<8x128xf32>
    %77 = arith.mulf %61, %69 : vector<8x128xf32>
    %78 = arith.addf %76, %77 : vector<8x128xf32>
    %79 = math.tanh %78 : vector<8x128xf32>
    %80 = arith.mulf %75, %79 : vector<8x128xf32>
    %c0_43 = arith.constant 0 : index
    %c0_44 = arith.constant 0 : index
    %81 = vector.load %arg9[%c0_43, %c0_44] : memref<8x128xf32, #tpu.memory_space<vmem>>, vector<8x128xf32>
    tpu.vector_store %arg9[%c0_43, %c0_44], %78 {strides = array<i32>} : memref<8x128xf32, #tpu.memory_space<vmem>>, vector<8x128xf32>,
    %c0_45 = arith.constant 0 : index
    %c0_46 = arith.constant 0 : index
    %82 = vector.load %arg8[%c0_45, %c0_46] : memref<8x128xf32, #tpu.memory_space<vmem>>, vector<8x128xf32>
    tpu.vector_store %arg8[%c0_45, %c0_46], %80 {strides = array<i32>} : memref<8x128xf32, #tpu.memory_space<vmem>>, vector<8x128xf32>,
    %c2_i32 = arith.constant 2 : i32
    %c0_47 = arith.constant 0 : index
    %c0_48 = arith.constant 0 : index
    %83 = vector.load %arg8[%c0_47, %c0_48] : memref<8x128xf32, #tpu.memory_space<vmem>>, vector<8x128xf32>
    %c0_49 = arith.constant 0 : index
    %c0_50 = arith.constant 0 : index
    %84 = vector.load %arg9[%c0_49, %c0_50] : memref<8x128xf32, #tpu.memory_space<vmem>>, vector<8x128xf32>
    %85 = arith.index_cast %c2_i32 : i32 to index
    %c0_51 = arith.constant 0 : index
    %c0_52 = arith.constant 0 : index
    %86 = vector.load %arg7[%85, %c0_51, %c0_52] : memref<8x8x512xf32, #tpu.memory_space<vmem>>, vector<1x8x512xf32>
    %87 = vector.shape_cast %86 : vector<1x8x512xf32> to vector<8x512xf32>
    %c0_53 = arith.constant 0 : index
    %c0_54 = arith.constant 0 : index
    %88 = vector.load %arg2[%c0_53, %c0_54] : memref<128x512xf32, #tpu.memory_space<vmem>>, vector<128x512xf32>
    %cst_55 = arith.constant dense<0.000000e+00> : vector<8x512xf32>
    %89 = tpu.matmul %83, %88, %cst_55 {dimension_numbers = #tpu.dot_dimension_numbers<[1], [0], [0], [1], [0, 0, 1, 1], [], []>} : vector<8x128xf32>, vector<128x512xf32>, vector<8x512xf32> -> vector<8x512xf32>
    %90 = arith.addf %87, %89 : vector<8x512xf32>
    %91 = vector.extract_strided_slice %90 {offsets = [0, 0], sizes = [8, 128], strides = [1, 1]} : vector<8x512xf32> to vector<8x128xf32>
    %92 = arith.negf %91 : vector<8x128xf32>
    %93 = math.exp %92 : vector<8x128xf32>
    %cst_56 = arith.constant 1.000000e+00 : f32
    %94 = vector.broadcast %cst_56 : f32 to vector<8x128xf32>
    %95 = arith.addf %94, %93 : vector<8x128xf32>
    %96 = arith.divf %94, %95 : vector<8x128xf32>
    %97 = vector.extract_strided_slice %90 {offsets = [0, 128], sizes = [8, 128], strides = [1, 1]} : vector<8x512xf32> to vector<8x128xf32>
    %98 = arith.negf %97 : vector<8x128xf32>
    %99 = math.exp %98 : vector<8x128xf32>
    %cst_57 = arith.constant 1.000000e+00 : f32
    %100 = vector.broadcast %cst_57 : f32 to vector<8x128xf32>
    %101 = arith.addf %100, %99 : vector<8x128xf32>
    %102 = arith.divf %100, %101 : vector<8x128xf32>
    %103 = vector.extract_strided_slice %90 {offsets = [0, 256], sizes = [8, 128], strides = [1, 1]} : vector<8x512xf32> to vector<8x128xf32>
    %104 = math.tanh %103 : vector<8x128xf32>
    %105 = vector.extract_strided_slice %90 {offsets = [0, 384], sizes = [8, 128], strides = [1, 1]} : vector<8x512xf32> to vector<8x128xf32>
    %106 = arith.negf %105 : vector<8x128xf32>
    %107 = math.exp %106 : vector<8x128xf32>
    %cst_58 = arith.constant 1.000000e+00 : f32
    %108 = vector.broadcast %cst_58 : f32 to vector<8x128xf32>
    %109 = arith.addf %108, %107 : vector<8x128xf32>
    %110 = arith.divf %108, %109 : vector<8x128xf32>
    %111 = arith.mulf %102, %84 : vector<8x128xf32>
    %112 = arith.mulf %96, %104 : vector<8x128xf32>
    %113 = arith.addf %111, %112 : vector<8x128xf32>
    %114 = math.tanh %113 : vector<8x128xf32>
    %115 = arith.mulf %110, %114 : vector<8x128xf32>
    %c0_59 = arith.constant 0 : index
    %c0_60 = arith.constant 0 : index
    %116 = vector.load %arg9[%c0_59, %c0_60] : memref<8x128xf32, #tpu.memory_space<vmem>>, vector<8x128xf32>
    tpu.vector_store %arg9[%c0_59, %c0_60], %113 {strides = array<i32>} : memref<8x128xf32, #tpu.memory_space<vmem>>, vector<8x128xf32>,
    %c0_61 = arith.constant 0 : index
    %c0_62 = arith.constant 0 : index
    %117 = vector.load %arg8[%c0_61, %c0_62] : memref<8x128xf32, #tpu.memory_space<vmem>>, vector<8x128xf32>
    tpu.vector_store %arg8[%c0_61, %c0_62], %115 {strides = array<i32>} : memref<8x128xf32, #tpu.memory_space<vmem>>, vector<8x128xf32>,
    %c3_i32 = arith.constant 3 : i32
    %c0_63 = arith.constant 0 : index
    %c0_64 = arith.constant 0 : index
    %118 = vector.load %arg8[%c0_63, %c0_64] : memref<8x128xf32, #tpu.memory_space<vmem>>, vector<8x128xf32>
    %c0_65 = arith.constant 0 : index
    %c0_66 = arith.constant 0 : index
    %119 = vector.load %arg9[%c0_65, %c0_66] : memref<8x128xf32, #tpu.memory_space<vmem>>, vector<8x128xf32>
    %120 = arith.index_cast %c3_i32 : i32 to index
    %c0_67 = arith.constant 0 : index
    %c0_68 = arith.constant 0 : index
    %121 = vector.load %arg7[%120, %c0_67, %c0_68] : memref<8x8x512xf32, #tpu.memory_space<vmem>>, vector<1x8x512xf32>
    %122 = vector.shape_cast %121 : vector<1x8x512xf32> to vector<8x512xf32>
    %c0_69 = arith.constant 0 : index
    %c0_70 = arith.constant 0 : index
    %123 = vector.load %arg2[%c0_69, %c0_70] : memref<128x512xf32, #tpu.memory_space<vmem>>, vector<128x512xf32>
    %cst_71 = arith.constant dense<0.000000e+00> : vector<8x512xf32>
    %124 = tpu.matmul %118, %123, %cst_71 {dimension_numbers = #tpu.dot_dimension_numbers<[1], [0], [0], [1], [0, 0, 1, 1], [], []>} : vector<8x128xf32>, vector<128x512xf32>, vector<8x512xf32> -> vector<8x512xf32>
    %125 = arith.addf %122, %124 : vector<8x512xf32>
    %126 = vector.extract_strided_slice %125 {offsets = [0, 0], sizes = [8, 128], strides = [1, 1]} : vector<8x512xf32> to vector<8x128xf32>
    %127 = arith.negf %126 : vector<8x128xf32>
    %128 = math.exp %127 : vector<8x128xf32>
    %cst_72 = arith.constant 1.000000e+00 : f32
    %129 = vector.broadcast %cst_72 : f32 to vector<8x128xf32>
    %130 = arith.addf %129, %128 : vector<8x128xf32>
    %131 = arith.divf %129, %130 : vector<8x128xf32>
    %132 = vector.extract_strided_slice %125 {offsets = [0, 128], sizes = [8, 128], strides = [1, 1]} : vector<8x512xf32> to vector<8x128xf32>
    %133 = arith.negf %132 : vector<8x128xf32>
    %134 = math.exp %133 : vector<8x128xf32>
    %cst_73 = arith.constant 1.000000e+00 : f32
    %135 = vector.broadcast %cst_73 : f32 to vector<8x128xf32>
    %136 = arith.addf %135, %134 : vector<8x128xf32>
    %137 = arith.divf %135, %136 : vector<8x128xf32>
    %138 = vector.extract_strided_slice %125 {offsets = [0, 256], sizes = [8, 128], strides = [1, 1]} : vector<8x512xf32> to vector<8x128xf32>
    %139 = math.tanh %138 : vector<8x128xf32>
    %140 = vector.extract_strided_slice %125 {offsets = [0, 384], sizes = [8, 128], strides = [1, 1]} : vector<8x512xf32> to vector<8x128xf32>
    %141 = arith.negf %140 : vector<8x128xf32>
    %142 = math.exp %141 : vector<8x128xf32>
    %cst_74 = arith.constant 1.000000e+00 : f32
    %143 = vector.broadcast %cst_74 : f32 to vector<8x128xf32>
    %144 = arith.addf %143, %142 : vector<8x128xf32>
    %145 = arith.divf %143, %144 : vector<8x128xf32>
    %146 = arith.mulf %137, %119 : vector<8x128xf32>
    %147 = arith.mulf %131, %139 : vector<8x128xf32>
    %148 = arith.addf %146, %147 : vector<8x128xf32>
    %149 = math.tanh %148 : vector<8x128xf32>
    %150 = arith.mulf %145, %149 : vector<8x128xf32>
    %c0_75 = arith.constant 0 : index
    %c0_76 = arith.constant 0 : index
    %151 = vector.load %arg9[%c0_75, %c0_76] : memref<8x128xf32, #tpu.memory_space<vmem>>, vector<8x128xf32>
    tpu.vector_store %arg9[%c0_75, %c0_76], %148 {strides = array<i32>} : memref<8x128xf32, #tpu.memory_space<vmem>>, vector<8x128xf32>,
    %c0_77 = arith.constant 0 : index
    %c0_78 = arith.constant 0 : index
    %152 = vector.load %arg8[%c0_77, %c0_78] : memref<8x128xf32, #tpu.memory_space<vmem>>, vector<8x128xf32>
    tpu.vector_store %arg8[%c0_77, %c0_78], %150 {strides = array<i32>} : memref<8x128xf32, #tpu.memory_space<vmem>>, vector<8x128xf32>,
    %c4_i32 = arith.constant 4 : i32
    %c0_79 = arith.constant 0 : index
    %c0_80 = arith.constant 0 : index
    %153 = vector.load %arg8[%c0_79, %c0_80] : memref<8x128xf32, #tpu.memory_space<vmem>>, vector<8x128xf32>
    %c0_81 = arith.constant 0 : index
    %c0_82 = arith.constant 0 : index
    %154 = vector.load %arg9[%c0_81, %c0_82] : memref<8x128xf32, #tpu.memory_space<vmem>>, vector<8x128xf32>
    %155 = arith.index_cast %c4_i32 : i32 to index
    %c0_83 = arith.constant 0 : index
    %c0_84 = arith.constant 0 : index
    %156 = vector.load %arg7[%155, %c0_83, %c0_84] : memref<8x8x512xf32, #tpu.memory_space<vmem>>, vector<1x8x512xf32>
    %157 = vector.shape_cast %156 : vector<1x8x512xf32> to vector<8x512xf32>
    %c0_85 = arith.constant 0 : index
    %c0_86 = arith.constant 0 : index
    %158 = vector.load %arg2[%c0_85, %c0_86] : memref<128x512xf32, #tpu.memory_space<vmem>>, vector<128x512xf32>
    %cst_87 = arith.constant dense<0.000000e+00> : vector<8x512xf32>
    %159 = tpu.matmul %153, %158, %cst_87 {dimension_numbers = #tpu.dot_dimension_numbers<[1], [0], [0], [1], [0, 0, 1, 1], [], []>} : vector<8x128xf32>, vector<128x512xf32>, vector<8x512xf32> -> vector<8x512xf32>
    %160 = arith.addf %157, %159 : vector<8x512xf32>
    %161 = vector.extract_strided_slice %160 {offsets = [0, 0], sizes = [8, 128], strides = [1, 1]} : vector<8x512xf32> to vector<8x128xf32>
    %162 = arith.negf %161 : vector<8x128xf32>
    %163 = math.exp %162 : vector<8x128xf32>
    %cst_88 = arith.constant 1.000000e+00 : f32
    %164 = vector.broadcast %cst_88 : f32 to vector<8x128xf32>
    %165 = arith.addf %164, %163 : vector<8x128xf32>
    %166 = arith.divf %164, %165 : vector<8x128xf32>
    %167 = vector.extract_strided_slice %160 {offsets = [0, 128], sizes = [8, 128], strides = [1, 1]} : vector<8x512xf32> to vector<8x128xf32>
    %168 = arith.negf %167 : vector<8x128xf32>
    %169 = math.exp %168 : vector<8x128xf32>
    %cst_89 = arith.constant 1.000000e+00 : f32
    %170 = vector.broadcast %cst_89 : f32 to vector<8x128xf32>
    %171 = arith.addf %170, %169 : vector<8x128xf32>
    %172 = arith.divf %170, %171 : vector<8x128xf32>
    %173 = vector.extract_strided_slice %160 {offsets = [0, 256], sizes = [8, 128], strides = [1, 1]} : vector<8x512xf32> to vector<8x128xf32>
    %174 = math.tanh %173 : vector<8x128xf32>
    %175 = vector.extract_strided_slice %160 {offsets = [0, 384], sizes = [8, 128], strides = [1, 1]} : vector<8x512xf32> to vector<8x128xf32>
    %176 = arith.negf %175 : vector<8x128xf32>
    %177 = math.exp %176 : vector<8x128xf32>
    %cst_90 = arith.constant 1.000000e+00 : f32
    %178 = vector.broadcast %cst_90 : f32 to vector<8x128xf32>
    %179 = arith.addf %178, %177 : vector<8x128xf32>
    %180 = arith.divf %178, %179 : vector<8x128xf32>
    %181 = arith.mulf %172, %154 : vector<8x128xf32>
    %182 = arith.mulf %166, %174 : vector<8x128xf32>
    %183 = arith.addf %181, %182 : vector<8x128xf32>
    %184 = math.tanh %183 : vector<8x128xf32>
    %185 = arith.mulf %180, %184 : vector<8x128xf32>
    %c0_91 = arith.constant 0 : index
    %c0_92 = arith.constant 0 : index
    %186 = vector.load %arg9[%c0_91, %c0_92] : memref<8x128xf32, #tpu.memory_space<vmem>>, vector<8x128xf32>
    tpu.vector_store %arg9[%c0_91, %c0_92], %183 {strides = array<i32>} : memref<8x128xf32, #tpu.memory_space<vmem>>, vector<8x128xf32>,
    %c0_93 = arith.constant 0 : index
    %c0_94 = arith.constant 0 : index
    %187 = vector.load %arg8[%c0_93, %c0_94] : memref<8x128xf32, #tpu.memory_space<vmem>>, vector<8x128xf32>
    tpu.vector_store %arg8[%c0_93, %c0_94], %185 {strides = array<i32>} : memref<8x128xf32, #tpu.memory_space<vmem>>, vector<8x128xf32>,
    %c5_i32 = arith.constant 5 : i32
    %c0_95 = arith.constant 0 : index
    %c0_96 = arith.constant 0 : index
    %188 = vector.load %arg8[%c0_95, %c0_96] : memref<8x128xf32, #tpu.memory_space<vmem>>, vector<8x128xf32>
    %c0_97 = arith.constant 0 : index
    %c0_98 = arith.constant 0 : index
    %189 = vector.load %arg9[%c0_97, %c0_98] : memref<8x128xf32, #tpu.memory_space<vmem>>, vector<8x128xf32>
    %190 = arith.index_cast %c5_i32 : i32 to index
    %c0_99 = arith.constant 0 : index
    %c0_100 = arith.constant 0 : index
    %191 = vector.load %arg7[%190, %c0_99, %c0_100] : memref<8x8x512xf32, #tpu.memory_space<vmem>>, vector<1x8x512xf32>
    %192 = vector.shape_cast %191 : vector<1x8x512xf32> to vector<8x512xf32>
    %c0_101 = arith.constant 0 : index
    %c0_102 = arith.constant 0 : index
    %193 = vector.load %arg2[%c0_101, %c0_102] : memref<128x512xf32, #tpu.memory_space<vmem>>, vector<128x512xf32>
    %cst_103 = arith.constant dense<0.000000e+00> : vector<8x512xf32>
    %194 = tpu.matmul %188, %193, %cst_103 {dimension_numbers = #tpu.dot_dimension_numbers<[1], [0], [0], [1], [0, 0, 1, 1], [], []>} : vector<8x128xf32>, vector<128x512xf32>, vector<8x512xf32> -> vector<8x512xf32>
    %195 = arith.addf %192, %194 : vector<8x512xf32>
    %196 = vector.extract_strided_slice %195 {offsets = [0, 0], sizes = [8, 128], strides = [1, 1]} : vector<8x512xf32> to vector<8x128xf32>
    %197 = arith.negf %196 : vector<8x128xf32>
    %198 = math.exp %197 : vector<8x128xf32>
    %cst_104 = arith.constant 1.000000e+00 : f32
    %199 = vector.broadcast %cst_104 : f32 to vector<8x128xf32>
    %200 = arith.addf %199, %198 : vector<8x128xf32>
    %201 = arith.divf %199, %200 : vector<8x128xf32>
    %202 = vector.extract_strided_slice %195 {offsets = [0, 128], sizes = [8, 128], strides = [1, 1]} : vector<8x512xf32> to vector<8x128xf32>
    %203 = arith.negf %202 : vector<8x128xf32>
    %204 = math.exp %203 : vector<8x128xf32>
    %cst_105 = arith.constant 1.000000e+00 : f32
    %205 = vector.broadcast %cst_105 : f32 to vector<8x128xf32>
    %206 = arith.addf %205, %204 : vector<8x128xf32>
    %207 = arith.divf %205, %206 : vector<8x128xf32>
    %208 = vector.extract_strided_slice %195 {offsets = [0, 256], sizes = [8, 128], strides = [1, 1]} : vector<8x512xf32> to vector<8x128xf32>
    %209 = math.tanh %208 : vector<8x128xf32>
    %210 = vector.extract_strided_slice %195 {offsets = [0, 384], sizes = [8, 128], strides = [1, 1]} : vector<8x512xf32> to vector<8x128xf32>
    %211 = arith.negf %210 : vector<8x128xf32>
    %212 = math.exp %211 : vector<8x128xf32>
    %cst_106 = arith.constant 1.000000e+00 : f32
    %213 = vector.broadcast %cst_106 : f32 to vector<8x128xf32>
    %214 = arith.addf %213, %212 : vector<8x128xf32>
    %215 = arith.divf %213, %214 : vector<8x128xf32>
    %216 = arith.mulf %207, %189 : vector<8x128xf32>
    %217 = arith.mulf %201, %209 : vector<8x128xf32>
    %218 = arith.addf %216, %217 : vector<8x128xf32>
    %219 = math.tanh %218 : vector<8x128xf32>
    %220 = arith.mulf %215, %219 : vector<8x128xf32>
    %c0_107 = arith.constant 0 : index
    %c0_108 = arith.constant 0 : index
    %221 = vector.load %arg9[%c0_107, %c0_108] : memref<8x128xf32, #tpu.memory_space<vmem>>, vector<8x128xf32>
    tpu.vector_store %arg9[%c0_107, %c0_108], %218 {strides = array<i32>} : memref<8x128xf32, #tpu.memory_space<vmem>>, vector<8x128xf32>,
    %c0_109 = arith.constant 0 : index
    %c0_110 = arith.constant 0 : index
    %222 = vector.load %arg8[%c0_109, %c0_110] : memref<8x128xf32, #tpu.memory_space<vmem>>, vector<8x128xf32>
    tpu.vector_store %arg8[%c0_109, %c0_110], %220 {strides = array<i32>} : memref<8x128xf32, #tpu.memory_space<vmem>>, vector<8x128xf32>,
    %c6_i32 = arith.constant 6 : i32
    %c0_111 = arith.constant 0 : index
    %c0_112 = arith.constant 0 : index
    %223 = vector.load %arg8[%c0_111, %c0_112] : memref<8x128xf32, #tpu.memory_space<vmem>>, vector<8x128xf32>
    %c0_113 = arith.constant 0 : index
    %c0_114 = arith.constant 0 : index
    %224 = vector.load %arg9[%c0_113, %c0_114] : memref<8x128xf32, #tpu.memory_space<vmem>>, vector<8x128xf32>
    %225 = arith.index_cast %c6_i32 : i32 to index
    %c0_115 = arith.constant 0 : index
    %c0_116 = arith.constant 0 : index
    %226 = vector.load %arg7[%225, %c0_115, %c0_116] : memref<8x8x512xf32, #tpu.memory_space<vmem>>, vector<1x8x512xf32>
    %227 = vector.shape_cast %226 : vector<1x8x512xf32> to vector<8x512xf32>
    %c0_117 = arith.constant 0 : index
    %c0_118 = arith.constant 0 : index
    %228 = vector.load %arg2[%c0_117, %c0_118] : memref<128x512xf32, #tpu.memory_space<vmem>>, vector<128x512xf32>
    %cst_119 = arith.constant dense<0.000000e+00> : vector<8x512xf32>
    %229 = tpu.matmul %223, %228, %cst_119 {dimension_numbers = #tpu.dot_dimension_numbers<[1], [0], [0], [1], [0, 0, 1, 1], [], []>} : vector<8x128xf32>, vector<128x512xf32>, vector<8x512xf32> -> vector<8x512xf32>
    %230 = arith.addf %227, %229 : vector<8x512xf32>
    %231 = vector.extract_strided_slice %230 {offsets = [0, 0], sizes = [8, 128], strides = [1, 1]} : vector<8x512xf32> to vector<8x128xf32>
    %232 = arith.negf %231 : vector<8x128xf32>
    %233 = math.exp %232 : vector<8x128xf32>
    %cst_120 = arith.constant 1.000000e+00 : f32
    %234 = vector.broadcast %cst_120 : f32 to vector<8x128xf32>
    %235 = arith.addf %234, %233 : vector<8x128xf32>
    %236 = arith.divf %234, %235 : vector<8x128xf32>
    %237 = vector.extract_strided_slice %230 {offsets = [0, 128], sizes = [8, 128], strides = [1, 1]} : vector<8x512xf32> to vector<8x128xf32>
    %238 = arith.negf %237 : vector<8x128xf32>
    %239 = math.exp %238 : vector<8x128xf32>
    %cst_121 = arith.constant 1.000000e+00 : f32
    %240 = vector.broadcast %cst_121 : f32 to vector<8x128xf32>
    %241 = arith.addf %240, %239 : vector<8x128xf32>
    %242 = arith.divf %240, %241 : vector<8x128xf32>
    %243 = vector.extract_strided_slice %230 {offsets = [0, 256], sizes = [8, 128], strides = [1, 1]} : vector<8x512xf32> to vector<8x128xf32>
    %244 = math.tanh %243 : vector<8x128xf32>
    %245 = vector.extract_strided_slice %230 {offsets = [0, 384], sizes = [8, 128], strides = [1, 1]} : vector<8x512xf32> to vector<8x128xf32>
    %246 = arith.negf %245 : vector<8x128xf32>
    %247 = math.exp %246 : vector<8x128xf32>
    %cst_122 = arith.constant 1.000000e+00 : f32
    %248 = vector.broadcast %cst_122 : f32 to vector<8x128xf32>
    %249 = arith.addf %248, %247 : vector<8x128xf32>
    %250 = arith.divf %248, %249 : vector<8x128xf32>
    %251 = arith.mulf %242, %224 : vector<8x128xf32>
    %252 = arith.mulf %236, %244 : vector<8x128xf32>
    %253 = arith.addf %251, %252 : vector<8x128xf32>
    %254 = math.tanh %253 : vector<8x128xf32>
    %255 = arith.mulf %250, %254 : vector<8x128xf32>
    %c0_123 = arith.constant 0 : index
    %c0_124 = arith.constant 0 : index
    %256 = vector.load %arg9[%c0_123, %c0_124] : memref<8x128xf32, #tpu.memory_space<vmem>>, vector<8x128xf32>
    tpu.vector_store %arg9[%c0_123, %c0_124], %253 {strides = array<i32>} : memref<8x128xf32, #tpu.memory_space<vmem>>, vector<8x128xf32>,
    %c0_125 = arith.constant 0 : index
    %c0_126 = arith.constant 0 : index
    %257 = vector.load %arg8[%c0_125, %c0_126] : memref<8x128xf32, #tpu.memory_space<vmem>>, vector<8x128xf32>
    tpu.vector_store %arg8[%c0_125, %c0_126], %255 {strides = array<i32>} : memref<8x128xf32, #tpu.memory_space<vmem>>, vector<8x128xf32>,
    %c7_i32 = arith.constant 7 : i32
    %c0_127 = arith.constant 0 : index
    %c0_128 = arith.constant 0 : index
    %258 = vector.load %arg8[%c0_127, %c0_128] : memref<8x128xf32, #tpu.memory_space<vmem>>, vector<8x128xf32>
    %c0_129 = arith.constant 0 : index
    %c0_130 = arith.constant 0 : index
    %259 = vector.load %arg9[%c0_129, %c0_130] : memref<8x128xf32, #tpu.memory_space<vmem>>, vector<8x128xf32>
    %260 = arith.index_cast %c7_i32 : i32 to index
    %c0_131 = arith.constant 0 : index
    %c0_132 = arith.constant 0 : index
    %261 = vector.load %arg7[%260, %c0_131, %c0_132] : memref<8x8x512xf32, #tpu.memory_space<vmem>>, vector<1x8x512xf32>
    %262 = vector.shape_cast %261 : vector<1x8x512xf32> to vector<8x512xf32>
    %c0_133 = arith.constant 0 : index
    %c0_134 = arith.constant 0 : index
    %263 = vector.load %arg2[%c0_133, %c0_134] : memref<128x512xf32, #tpu.memory_space<vmem>>, vector<128x512xf32>
    %cst_135 = arith.constant dense<0.000000e+00> : vector<8x512xf32>
    %264 = tpu.matmul %258, %263, %cst_135 {dimension_numbers = #tpu.dot_dimension_numbers<[1], [0], [0], [1], [0, 0, 1, 1], [], []>} : vector<8x128xf32>, vector<128x512xf32>, vector<8x512xf32> -> vector<8x512xf32>
    %265 = arith.addf %262, %264 : vector<8x512xf32>
    %266 = vector.extract_strided_slice %265 {offsets = [0, 0], sizes = [8, 128], strides = [1, 1]} : vector<8x512xf32> to vector<8x128xf32>
    %267 = arith.negf %266 : vector<8x128xf32>
    %268 = math.exp %267 : vector<8x128xf32>
    %cst_136 = arith.constant 1.000000e+00 : f32
    %269 = vector.broadcast %cst_136 : f32 to vector<8x128xf32>
    %270 = arith.addf %269, %268 : vector<8x128xf32>
    %271 = arith.divf %269, %270 : vector<8x128xf32>
    %272 = vector.extract_strided_slice %265 {offsets = [0, 128], sizes = [8, 128], strides = [1, 1]} : vector<8x512xf32> to vector<8x128xf32>
    %273 = arith.negf %272 : vector<8x128xf32>
    %274 = math.exp %273 : vector<8x128xf32>
    %cst_137 = arith.constant 1.000000e+00 : f32
    %275 = vector.broadcast %cst_137 : f32 to vector<8x128xf32>
    %276 = arith.addf %275, %274 : vector<8x128xf32>
    %277 = arith.divf %275, %276 : vector<8x128xf32>
    %278 = vector.extract_strided_slice %265 {offsets = [0, 256], sizes = [8, 128], strides = [1, 1]} : vector<8x512xf32> to vector<8x128xf32>
    %279 = math.tanh %278 : vector<8x128xf32>
    %280 = vector.extract_strided_slice %265 {offsets = [0, 384], sizes = [8, 128], strides = [1, 1]} : vector<8x512xf32> to vector<8x128xf32>
    %281 = arith.negf %280 : vector<8x128xf32>
    %282 = math.exp %281 : vector<8x128xf32>
    %cst_138 = arith.constant 1.000000e+00 : f32
    %283 = vector.broadcast %cst_138 : f32 to vector<8x128xf32>
    %284 = arith.addf %283, %282 : vector<8x128xf32>
    %285 = arith.divf %283, %284 : vector<8x128xf32>
    %286 = arith.mulf %277, %259 : vector<8x128xf32>
    %287 = arith.mulf %271, %279 : vector<8x128xf32>
    %288 = arith.addf %286, %287 : vector<8x128xf32>
    %289 = math.tanh %288 : vector<8x128xf32>
    %290 = arith.mulf %285, %289 : vector<8x128xf32>
    %c0_139 = arith.constant 0 : index
    %c0_140 = arith.constant 0 : index
    %291 = vector.load %arg9[%c0_139, %c0_140] : memref<8x128xf32, #tpu.memory_space<vmem>>, vector<8x128xf32>
    tpu.vector_store %arg9[%c0_139, %c0_140], %288 {strides = array<i32>} : memref<8x128xf32, #tpu.memory_space<vmem>>, vector<8x128xf32>,
    %c0_141 = arith.constant 0 : index
    %c0_142 = arith.constant 0 : index
    %292 = vector.load %arg8[%c0_141, %c0_142] : memref<8x128xf32, #tpu.memory_space<vmem>>, vector<8x128xf32>
    tpu.vector_store %arg8[%c0_141, %c0_142], %290 {strides = array<i32>} : memref<8x128xf32, #tpu.memory_space<vmem>>, vector<8x128xf32>,
    %c8_i32 = arith.constant 8 : i32
    %c0_143 = arith.constant 0 : index
    %c0_144 = arith.constant 0 : index
    %293 = vector.load %arg8[%c0_143, %c0_144] : memref<8x128xf32, #tpu.memory_space<vmem>>, vector<8x128xf32>
    %c0_145 = arith.constant 0 : index
    %c0_146 = arith.constant 0 : index
    %294 = vector.load %arg4[%c0_145, %c0_146] : memref<128x1xf32, #tpu.memory_space<vmem>>, vector<128x1xf32>
    %cst_147 = arith.constant dense<0.000000e+00> : vector<8x1xf32>
    %295 = tpu.matmul %293, %294, %cst_147 {dimension_numbers = #tpu.dot_dimension_numbers<[1], [0], [0], [1], [0, 0, 1, 1], [], []>} : vector<8x128xf32>, vector<128x1xf32>, vector<8x1xf32> -> vector<8x1xf32>
    %c0_148 = arith.constant 0 : index
    %c0_149 = arith.constant 0 : index
    %296 = vector.load %arg5[%c0_148, %c0_149] : memref<1x1xf32, #tpu.memory_space<vmem>>, vector<1x1xf32>
    %297 = vector.broadcast %296 : vector<1x1xf32> to vector<8x1xf32>
    %298 = arith.addf %295, %297 : vector<8x1xf32>
    %299 = arith.negf %298 : vector<8x1xf32>
    %300 = math.exp %299 : vector<8x1xf32>
    %cst_150 = arith.constant 1.000000e+00 : f32
    %301 = vector.broadcast %cst_150 : f32 to vector<8x1xf32>
    %302 = arith.addf %301, %300 : vector<8x1xf32>
    %303 = arith.divf %301, %302 : vector<8x1xf32>
    %c0_151 = arith.constant 0 : index
    %c0_152 = arith.constant 0 : index
    %304 = vector.load %arg6[%c0_151, %c0_152] : memref<8x1xf32, #tpu.memory_space<vmem>>, vector<8x1xf32>
    tpu.vector_store %arg6[%c0_151, %c0_152], %303 {strides = array<i32>} : memref<8x1xf32, #tpu.memory_space<vmem>>, vector<8x1xf32>,
    return
  }
}

</mosaic_0001>

<llo_original>
// kernel: tpu_custom_call.1
$region0: #{tpu_custom_call.1}
  #allocation0 [shape = 'u32[]', space=smem, size = 0x4, offset = 0x4, fixed_abs, tag = 'smem constant byte address 0x4 - core index']
  #allocation1 [shape = 'u32[144,128]{1,0:T(1,128)}', space=vmem, size = 0x12000, scoped, tag = 'internal scratch']
  #allocation2 [shape = 'f32[8,8,512]{2,1,0:T(8,128)}', space=vmem, size = 0x20000, scoped, tag = 'scratch operand']
  #allocation3 [shape = 'f32[8,128]{1,0:T(8,128)}', space=vmem, size = 0x1000, scoped, tag = 'scratch operand']
  #allocation4 [shape = 'f32[8,128]{1,0:T(8,128)}', space=vmem, size = 0x1000, scoped, tag = 'scratch operand']
  #allocation5 [shape = 'f32[1,1]{1,0:T(1,128)S(1)}', space=vmem, size = 0x200, scoped, tag = 'scoped memory for tpu_custom_call.1']
  %s0 = inlined_call_operand.vmem [shape: f32[8,8,4], index: 0, kind: input, shape index: {}]
  %s1 = inlined_call_operand.vmem [shape: f32[4,512], index: 1, kind: input, shape index: {}]
  %s2 = inlined_call_operand.hbm [shape: f32[128,512], index: 2, kind: input, shape index: {}]
  %s3 = inlined_call_operand.vmem [shape: f32[1,512], index: 3, kind: input, shape index: {}]
  %s4 = inlined_call_operand.vmem [shape: f32[128,1], index: 4, kind: input, shape index: {}]
  %s5 = inlined_call_operand.<no memory space> [shape: f32[1,1], index: 5, kind: input, shape index: {}]
  %s6 = inlined_call_operand.vmem [shape: f32[8,1], index: 6, kind: output, shape index: {}]
  %s7 = sld [smem:[#allocation0]]
  $region38: #{tpu_custom_call.1} parent=0
    _
  %s9 = ssub.s32 1, %s7
  %s10 = scalar_select 0, %s9, %s7
  %v11 = vstv %s5
  %12 = vst [vmem:[#allocation5] sm:$0x1] %v11
  $region1: #{tpu_custom_call.1} parent=0
    #allocation6 [shape = 'u8[262144]{0}', space=vmem, size = 0x40000, scoped, tag = 'input window, operand 2, single buffered']
    #allocation7 [shape = 's32[1]{0}', space=sflag, size = 0x4, scoped, tag = 'scoped memory for tpu_custom_call.1']
    %13 = vsyncpa [#allocation7], 0
    // Predicated region
    $region2: #{tpu_custom_call.1} parent=1 // pred_check
      _
    $region3: #{tpu_custom_call.1} parent=1 // pred_check_branch
      %15 = sbr.rel (0) target = $region5
    $region4: #{tpu_custom_call.1} parent=1 // pred_region
      _
    $region5: #{tpu_custom_call.1} parent=1 // pred_fallthru
      _
    // Predicated region
    $region6: #{tpu_custom_call.1} parent=1 // pred_check
      _
    $region7: #{tpu_custom_call.1} parent=1 // pred_check_branch
      %17 = sbr.rel (0) target = $region9
    $region8: #{tpu_custom_call.1} parent=1 // pred_region
      _
    $region9: #{tpu_custom_call.1} parent=1 // pred_fallthru
      _
    // Predicated region
    $region10: #{tpu_custom_call.1} parent=1 // pred_check
      _
    $region11: #{tpu_custom_call.1} parent=1 // pred_check_branch
      %19 = sbr.rel (0) target = $region13
    $region12: #{tpu_custom_call.1} parent=1 // pred_region
      %s21 = ssub.s32 8192, 8192
      %22 = vsyncadd [#allocation7], %s21
      %s23 = sshll.u32 [#allocation6], 4
      %s24 = int_to_ptr.vmem [resolvable:$true] %s23
      %29 = dma.hbm_to_vmem [thread:$0]  %s2, 8192, %s24, [#allocation7], 512, 512, 32
    $region13: #{tpu_custom_call.1} parent=1 // pred_fallthru
      _
    // Predicated region
    $region14: #{tpu_custom_call.1} parent=1 // pred_check
      _
    $region15: #{tpu_custom_call.1} parent=1 // pred_check_branch
      %31 = sbr.rel (0) target = $region17
    $region16: #{tpu_custom_call.1} parent=1 // pred_region
      _
    $region17: #{tpu_custom_call.1} parent=1 // pred_fallthru
      _
    // Predicated region
    $region18: #{tpu_custom_call.1} parent=1 // pred_check
      _
    $region19: #{tpu_custom_call.1} parent=1 // pred_check_branch
      %33 = sbr.rel (0) target = $region21
    $region20: #{tpu_custom_call.1} parent=1 // pred_region
      _
    $region21: #{tpu_custom_call.1} parent=1 // pred_fallthru
      _
    // Predicated region
    $region22: #{tpu_custom_call.1} parent=1 // pred_check
      _
    $region23: #{tpu_custom_call.1} parent=1 // pred_check_branch
      %35 = sbr.rel (0) target = $region25
    $region24: #{tpu_custom_call.1} parent=1 // pred_region
      _
    $region25: #{tpu_custom_call.1} parent=1 // pred_fallthru
      _
    // Predicated region
    $region26: #{tpu_custom_call.1} parent=1 // pred_check
      _
    $region27: #{tpu_custom_call.1} parent=1 // pred_check_branch
      %37 = sbr.rel (0) target = $region29
    $region28: #{tpu_custom_call.1} parent=1 // pred_region
      %38 = dma.done [#allocation7], 8192
    $region29: #{tpu_custom_call.1} parent=1 // pred_fallthru
      _
    %v39 = vld [vmem:[%s0] sm:$0xff]
    %v40 = vld [vmem:[%s0 + $0x8] sm:$0xff]
    %v41 = vld [vmem:[%s0 + $0x10] sm:$0xff]
    %v42 = vld [vmem:[%s0 + $0x18] sm:$0xff]
    %v43 = vld [vmem:[%s0 + $0x20] sm:$0xff]
    %v44 = vld [vmem:[%s0 + $0x28] sm:$0xff]
    %v45 = vld [vmem:[%s0 + $0x30] sm:$0xff]
    %v46 = vld [vmem:[%s0 + $0x38] sm:$0xff]
    %v47 = vld [vmem:[%s1] sm:$0xff]
    %v48 = vld [vmem:[%s1 + $0x8] sm:$0xff]
    %v49 = vld [vmem:[%s3] sm:$0xf]
    %v51 = vlaneseq
    %v52 = vshrl.u32 %v51, 7
    %v53 = vsub.s32 0, %v52
    %v54 = vrot.slane %v49, %v53
    %v55 = vlaneseq
    %v56 = vshrl.u32 %v55, 7
    %v57 = vsub.s32 1, %v56
    %v58 = vrot.slane %v49, %v57
    %v59 = vlaneseq
    %v60 = vshrl.u32 %v59, 7
    %v61 = vsub.s32 2, %v60
    %v62 = vrot.slane %v49, %v61
    %v63 = vlaneseq
    %v64 = vshrl.u32 %v63, 7
    %v65 = vsub.s32 3, %v64
    %v66 = vrot.slane %v49, %v65
    %v73 = vcombine.high %v47, %v47
    %v74 = vcombine.high %v48, %v48
    %vm75 = vcmask 31744
    %v77 = vsel %vm75, %v39, 0
    %v80 = vsel %vm75, %v40, 0
    %v83 = vsel %vm75, %v41, 0
    %v86 = vsel %vm75, %v42, 0
    %v89 = vsel %vm75, %v43, 0
    %v92 = vsel %vm75, %v44, 0
    %v95 = vsel %vm75, %v45, 0
    %v98 = vsel %vm75, %v46, 0
    %vm100 = vcmask 1043456
    %v101 = vsel %vm100, %v47, 0
    %v103 = vsel %vm100, %v73, 0
    %v105 = vsel %vm100, %v48, 0
    %v107 = vsel %vm100, %v74, 0
    %109 = vmatprep.subr.mxu0 %v103
    %110 = vmatpush1.msra.mxu0 %v101
    %111 = vmatprep.subr.mxu0 0.0
    %112 = vmatpush1.msra.mxu0 0.0
    %113 = vmatprep.subr.mxu0 0.0
    %114 = vmatpush1.msra.mxu0 0.0
    %115 = vmatprep.subr.mxu0 0.0
    %116 = vmatpush1.msra.mxu0 0.0
    %117 = vmatprep.subr.mxu0 0.0
    %118 = vmatpush1.msra.mxu0 0.0
    %119 = vmatprep.subr.mxu0 0.0
    %120 = vmatpush1.msra.mxu0 0.0
    %121 = vmatprep.subr.mxu0 0.0
    %122 = vmatpush1.msra.mxu0 0.0
    %123 = vmatprep.subr.mxu0 0.0
    %124 = vmatpush1.msra.mxu0 0.0
    %125 = vmatprep.subr.mxu0 0.0
    %126 = vmatpush1.msra.mxu0 0.0
    %127 = vmatprep.subr.mxu0 0.0
    %128 = vmatpush1.msra.mxu0 0.0
    %129 = vmatprep.subr.mxu0 0.0
    %130 = vmatpush1.msra.mxu0 0.0
    %131 = vmatprep.subr.mxu0 0.0
    %132 = vmatpush1.msra.mxu0 0.0
    %133 = vmatprep.subr.mxu0 0.0
    %134 = vmatpush1.msra.mxu0 0.0
    %135 = vmatprep.subr.mxu0 0.0
    %136 = vmatpush1.msra.mxu0 0.0
    %137 = vmatprep.subr.mxu0 0.0
    %138 = vmatpush1.msra.mxu0 0.0
    %139 = vmatprep.subr.mxu0 0.0
    %140 = vmatpush1.msra.mxu0 0.0
    %141 = vmatprep.subr.mxu0 0.0
    %142 = vmatpush1.msra.mxu0 0.0
    %143 = vmatprep.subr.mxu0 0.0
    %144 = vmatpush1.msra.mxu0 0.0
    %145 = vmatprep.subr.mxu0 0.0
    %146 = vmatpush1.msra.mxu0 0.0
    %147 = vmatprep.subr.mxu0 0.0
    %148 = vmatpush1.msra.mxu0 0.0
    %149 = vmatprep.subr.mxu0 0.0
    %150 = vmatpush1.msra.mxu0 0.0
    %151 = vmatprep.subr.mxu0 0.0
    %152 = vmatpush1.msra.mxu0 0.0
    %153 = vmatprep.subr.mxu0 0.0
    %154 = vmatpush1.msra.mxu0 0.0
    %155 = vmatprep.subr.mxu0 0.0
    %156 = vmatpush1.msra.mxu0 0.0
    %157 = vmatprep.subr.mxu0 0.0
    %158 = vmatpush1.msra.mxu0 0.0
    %159 = vmatprep.subr.mxu0 0.0
    %160 = vmatpush1.msra.mxu0 0.0
    %161 = vmatprep.subr.mxu0 0.0
    %162 = vmatpush1.msra.mxu0 0.0
    %163 = vmatprep.subr.mxu0 0.0
    %164 = vmatpush1.msra.mxu0 0.0
    %165 = vmatprep.subr.mxu0 0.0
    %166 = vmatpush1.msra.mxu0 0.0
    %167 = vmatprep.subr.mxu0 0.0
    %168 = vmatpush1.msra.mxu0 0.0
    %169 = vmatprep.subr.mxu0 0.0
    %170 = vmatpush1.msra.mxu0 0.0
    %171 = vmatprep.subr.mxu0 0.0
    %172 = vmatpush1.msra.mxu0 0.0
    %173 = vmatprep.mubr.f32.mxu0 0.0
    %174 = vmatmul.mubr.f32.gmra.mrb[0].mxu0 %v77
    %v175 = vpop.f32.mrb[0].mxu0
    %v176 = vadd.f32 %v54, %v175
    %v177 = vpop.f32.mrb[0].mxu0
    %v178 = vadd.f32 %v58, %v177
    %179 = vmatprep.mubr.f32.mxu0 0.0
    %180 = vmatmul.mubr.f32.gmra.mrb[0].mxu0 %v80
    %v181 = vpop.f32.mrb[0].mxu0
    %v182 = vadd.f32 %v54, %v181
    %v183 = vpop.f32.mrb[0].mxu0
    %v184 = vadd.f32 %v58, %v183
    %185 = vmatprep.mubr.f32.mxu0 0.0
    %186 = vmatmul.mubr.f32.gmra.mrb[0].mxu0 %v83
    %v187 = vpop.f32.mrb[0].mxu0
    %v188 = vadd.f32 %v54, %v187
    %v189 = vpop.f32.mrb[0].mxu0
    %v190 = vadd.f32 %v58, %v189
    %191 = vmatprep.mubr.f32.mxu0 0.0
    %192 = vmatmul.mubr.f32.gmra.mrb[0].mxu0 %v86
    %v193 = vpop.f32.mrb[0].mxu0
    %v194 = vadd.f32 %v54, %v193
    %v195 = vpop.f32.mrb[0].mxu0
    %v196 = vadd.f32 %v58, %v195
    %197 = vmatprep.mubr.f32.mxu0 0.0
    %198 = vmatmul.mubr.f32.gmra.mrb[0].mxu0 %v89
    %v199 = vpop.f32.mrb[0].mxu0
    %v200 = vadd.f32 %v54, %v199
    %v201 = vpop.f32.mrb[0].mxu0
    %v202 = vadd.f32 %v58, %v201
    %203 = vmatprep.mubr.f32.mxu0 0.0
    %204 = vmatmul.mubr.f32.gmra.mrb[0].mxu0 %v92
    %v205 = vpop.f32.mrb[0].mxu0
    %v206 = vadd.f32 %v54, %v205
    %v207 = vpop.f32.mrb[0].mxu0
    %v208 = vadd.f32 %v58, %v207
    %209 = vmatprep.mubr.f32.mxu0 0.0
    %210 = vmatmul.mubr.f32.gmra.mrb[0].mxu0 %v95
    %v211 = vpop.f32.mrb[0].mxu0
    %v212 = vadd.f32 %v54, %v211
    %v213 = vpop.f32.mrb[0].mxu0
    %v214 = vadd.f32 %v58, %v213
    %215 = vmatprep.mubr.f32.mxu0 0.0
    %216 = vmatmul.mubr.f32.gmra.mrb[0].mxu0 %v98
    %v217 = vpop.f32.mrb[0].mxu0
    %v218 = vadd.f32 %v54, %v217
    %v219 = vpop.f32.mrb[0].mxu0
    %v220 = vadd.f32 %v58, %v219
    %221 = vdwg.mxu0
    %222 = vmatprep.subr.mxu0 %v107
    %223 = vmatpush1.msra.mxu0 %v105
    %224 = vmatprep.subr.mxu0 0.0
    %225 = vmatpush1.msra.mxu0 0.0
    %226 = vmatprep.subr.mxu0 0.0
    %227 = vmatpush1.msra.mxu0 0.0
    %228 = vmatprep.subr.mxu0 0.0
    %229 = vmatpush1.msra.mxu0 0.0
    %230 = vmatprep.subr.mxu0 0.0
    %231 = vmatpush1.msra.mxu0 0.0
    %232 = vmatprep.subr.mxu0 0.0
    %233 = vmatpush1.msra.mxu0 0.0
    %234 = vmatprep.subr.mxu0 0.0
    %235 = vmatpush1.msra.mxu0 0.0
    %236 = vmatprep.subr.mxu0 0.0
    %237 = vmatpush1.msra.mxu0 0.0
    %238 = vmatprep.subr.mxu0 0.0
    %239 = vmatpush1.msra.mxu0 0.0
    %240 = vmatprep.subr.mxu0 0.0
    %241 = vmatpush1.msra.mxu0 0.0
    %242 = vmatprep.subr.mxu0 0.0
    %243 = vmatpush1.msra.mxu0 0.0
    %244 = vmatprep.subr.mxu0 0.0
    %245 = vmatpush1.msra.mxu0 0.0
    %246 = vmatprep.subr.mxu0 0.0
    %247 = vmatpush1.msra.mxu0 0.0
    %248 = vmatprep.subr.mxu0 0.0
    %249 = vmatpush1.msra.mxu0 0.0
    %250 = vmatprep.subr.mxu0 0.0
    %251 = vmatpush1.msra.mxu0 0.0
    %252 = vmatprep.subr.mxu0 0.0
    %253 = vmatpush1.msra.mxu0 0.0
    %254 = vmatprep.subr.mxu0 0.0
    %255 = vmatpush1.msra.mxu0 0.0
    %256 = vmatprep.subr.mxu0 0.0
    %257 = vmatpush1.msra.mxu0 0.0
    %258 = vmatprep.subr.mxu0 0.0
    %259 = vmatpush1.msra.mxu0 0.0
    %260 = vmatprep.subr.mxu0 0.0
    %261 = vmatpush1.msra.mxu0 0.0
    %262 = vmatprep.subr.mxu0 0.0
    %263 = vmatpush1.msra.mxu0 0.0
    %264 = vmatprep.subr.mxu0 0.0
    %265 = vmatpush1.msra.mxu0 0.0
    %266 = vmatprep.subr.mxu0 0.0
    %267 = vmatpush1.msra.mxu0 0.0
    %268 = vmatprep.subr.mxu0 0.0
    %269 = vmatpush1.msra.mxu0 0.0
    %270 = vmatprep.subr.mxu0 0.0
    %271 = vmatpush1.msra.mxu0 0.0
    %272 = vmatprep.subr.mxu0 0.0
    %273 = vmatpush1.msra.mxu0 0.0
    %274 = vmatprep.subr.mxu0 0.0
    %275 = vmatpush1.msra.mxu0 0.0
    %276 = vmatprep.subr.mxu0 0.0
    %277 = vmatpush1.msra.mxu0 0.0
    %278 = vmatprep.subr.mxu0 0.0
    %279 = vmatpush1.msra.mxu0 0.0
    %280 = vmatprep.subr.mxu0 0.0
    %281 = vmatpush1.msra.mxu0 0.0
    %282 = vmatprep.subr.mxu0 0.0
    %283 = vmatpush1.msra.mxu0 0.0
    %284 = vmatprep.subr.mxu0 0.0
    %285 = vmatpush1.msra.mxu0 0.0
    %286 = vmatprep.mubr.f32.mxu0 0.0
    %287 = vmatmul.mubr.f32.gmra.mrb[0].mxu0 %v77
    %v288 = vpop.f32.mrb[0].mxu0
    %v289 = vadd.f32 %v62, %v288
    %v290 = vpop.f32.mrb[0].mxu0
    %v291 = vadd.f32 %v66, %v290
    %292 = vmatprep.mubr.f32.mxu0 0.0
    %293 = vmatmul.mubr.f32.gmra.mrb[0].mxu0 %v80
    %v294 = vpop.f32.mrb[0].mxu0
    %v295 = vadd.f32 %v62, %v294
    %v296 = vpop.f32.mrb[0].mxu0
    %v297 = vadd.f32 %v66, %v296
    %298 = vmatprep.mubr.f32.mxu0 0.0
    %299 = vmatmul.mubr.f32.gmra.mrb[0].mxu0 %v83
    %v300 = vpop.f32.mrb[0].mxu0
    %v301 = vadd.f32 %v62, %v300
    %v302 = vpop.f32.mrb[0].mxu0
    %v303 = vadd.f32 %v66, %v302
    %304 = vmatprep.mubr.f32.mxu0 0.0
    %305 = vmatmul.mubr.f32.gmra.mrb[0].mxu0 %v86
    %v306 = vpop.f32.mrb[0].mxu0
    %v307 = vadd.f32 %v62, %v306
    %v308 = vpop.f32.mrb[0].mxu0
    %v309 = vadd.f32 %v66, %v308
    %310 = vmatprep.mubr.f32.mxu0 0.0
    %311 = vmatmul.mubr.f32.gmra.mrb[0].mxu0 %v89
    %v312 = vpop.f32.mrb[0].mxu0
    %v313 = vadd.f32 %v62, %v312
    %v314 = vpop.f32.mrb[0].mxu0
    %v315 = vadd.f32 %v66, %v314
    %316 = vmatprep.mubr.f32.mxu0 0.0
    %317 = vmatmul.mubr.f32.gmra.mrb[0].mxu0 %v92
    %v318 = vpop.f32.mrb[0].mxu0
    %v319 = vadd.f32 %v62, %v318
    %v320 = vpop.f32.mrb[0].mxu0
    %v321 = vadd.f32 %v66, %v320
    %322 = vmatprep.mubr.f32.mxu0 0.0
    %323 = vmatmul.mubr.f32.gmra.mrb[0].mxu0 %v95
    %v324 = vpop.f32.mrb[0].mxu0
    %v325 = vadd.f32 %v62, %v324
    %v326 = vpop.f32.mrb[0].mxu0
    %v327 = vadd.f32 %v66, %v326
    %328 = vmatprep.mubr.f32.mxu0 0.0
    %329 = vmatmul.mubr.f32.gmra.mrb[0].mxu0 %v98
    %v330 = vpop.f32.mrb[0].mxu0
    %v331 = vadd.f32 %v62, %v330
    %v332 = vpop.f32.mrb[0].mxu0
    %v333 = vadd.f32 %v66, %v332
    %334 = vdwg.mxu0
    %335 = vst [vmem:[#allocation2] sm:$0xff] %v176
    %336 = vst [vmem:[#allocation2 + $0x8] sm:$0xff] %v178
    %337 = vst [vmem:[#allocation2 + $0x10] sm:$0xff] %v289
    %338 = vst [vmem:[#allocation2 + $0x18] sm:$0xff] %v291
    %339 = vst [vmem:[#allocation2 + $0x20] sm:$0xff] %v182
    %340 = vst [vmem:[#allocation2 + $0x28] sm:$0xff] %v184
    %341 = vst [vmem:[#allocation2 + $0x30] sm:$0xff] %v295
    %342 = vst [vmem:[#allocation2 + $0x38] sm:$0xff] %v297
    %343 = vst [vmem:[#allocation2 + $0x40] sm:$0xff] %v188
    %344 = vst [vmem:[#allocation2 + $0x48] sm:$0xff] %v190
    %345 = vst [vmem:[#allocation2 + $0x50] sm:$0xff] %v301
    %346 = vst [vmem:[#allocation2 + $0x58] sm:$0xff] %v303
    %347 = vst [vmem:[#allocation2 + $0x60] sm:$0xff] %v194
    %348 = vst [vmem:[#allocation2 + $0x68] sm:$0xff] %v196
    %349 = vst [vmem:[#allocation2 + $0x70] sm:$0xff] %v307
    %350 = vst [vmem:[#allocation2 + $0x78] sm:$0xff] %v309
    %351 = vst [vmem:[#allocation2 + $0x80] sm:$0xff] %v200
    %352 = vst [vmem:[#allocation2 + $0x88] sm:$0xff] %v202
    %353 = vst [vmem:[#allocation2 + $0x90] sm:$0xff] %v313
    %354 = vst [vmem:[#allocation2 + $0x98] sm:$0xff] %v315
    %355 = vst [vmem:[#allocation2 + $0xa0] sm:$0xff] %v206
    %356 = vst [vmem:[#allocation2 + $0xa8] sm:$0xff] %v208
    %357 = vst [vmem:[#allocation2 + $0xb0] sm:$0xff] %v319
    %358 = vst [vmem:[#allocation2 + $0xb8] sm:$0xff] %v321
    %359 = vst [vmem:[#allocation2 + $0xc0] sm:$0xff] %v212
    %360 = vst [vmem:[#allocation2 + $0xc8] sm:$0xff] %v214
    %361 = vst [vmem:[#allocation2 + $0xd0] sm:$0xff] %v325
    %362 = vst [vmem:[#allocation2 + $0xd8] sm:$0xff] %v327
    %363 = vst [vmem:[#allocation2 + $0xe0] sm:$0xff] %v218
    %364 = vst [vmem:[#allocation2 + $0xe8] sm:$0xff] %v220
    %365 = vst [vmem:[#allocation2 + $0xf0] sm:$0xff] %v331
    %366 = vst [vmem:[#allocation2 + $0xf8] sm:$0xff] %v333
    %367 = vst [vmem:[#allocation3] sm:$0xff] 0.0
    %368 = vst [vmem:[#allocation4] sm:$0xff] 0.0
    %v369 = vld [vmem:[#allocation3] sm:$0xff]
    %v370 = vld [vmem:[#allocation4] sm:$0xff]
    %v371 = vld [vmem:[#allocation2] sm:$0xff]
    %v372 = vld [vmem:[#allocation2 + $0x8] sm:$0xff]
    %v373 = vld [vmem:[#allocation2 + $0x10] sm:$0xff]
    %v374 = vld [vmem:[#allocation2 + $0x18] sm:$0xff]
    %v375 = vld [vmem:[#allocation6] sm:$0xff]
    %v376 = vld [vmem:[#allocation6 + $0x8] sm:$0xff]
    %v377 = vld [vmem:[#allocation6 + $0x10] sm:$0xff]
    %v378 = vld [vmem:[#allocation6 + $0x18] sm:$0xff]
    %v379 = vld [vmem:[#allocation6 + $0x20] sm:$0xff]
    %v380 = vld [vmem:[#allocation6 + $0x28] sm:$0xff]
    %v381 = vld [vmem:[#allocation6 + $0x30] sm:$0xff]
    %v382 = vld [vmem:[#allocation6 + $0x38] sm:$0xff]
    %v383 = vld [vmem:[#allocation6 + $0x40] sm:$0xff]
    %v384 = vld [vmem:[#allocation6 + $0x48] sm:$0xff]
    %v385 = vld [vmem:[#allocation6 + $0x50] sm:$0xff]
    %v386 = vld [vmem:[#allocation6 + $0x58] sm:$0xff]
    %v387 = vld [vmem:[#allocation6 + $0x60] sm:$0xff]
    %v388 = vld [vmem:[#allocation6 + $0x68] sm:$0xff]
    %v389 = vld [vmem:[#allocation6 + $0x70] sm:$0xff]
    %v390 = vld [vmem:[#allocation6 + $0x78] sm:$0xff]
    %v391 = vld [vmem:[#allocation6 + $0x80] sm:$0xff]
    %v392 = vld [vmem:[#allocation6 + $0x88] sm:$0xff]
    %v393 = vld [vmem:[#allocation6 + $0x90] sm:$0xff]
    %v394 = vld [vmem:[#allocation6 + $0x98] sm:$0xff]
    %v395 = vld [vmem:[#allocation6 + $0xa0] sm:$0xff]
    %v396 = vld [vmem:[#allocation6 + $0xa8] sm:$0xff]
    %v397 = vld [vmem:[#allocation6 + $0xb0] sm:$0xff]
    %v398 = vld [vmem:[#allocation6 + $0xb8] sm:$0xff]
    %v399 = vld [vmem:[#allocation6 + $0xc0] sm:$0xff]
    %v400 = vld [vmem:[#allocation6 + $0xc8] sm:$0xff]
    %v401 = vld [vmem:[#allocation6 + $0xd0] sm:$0xff]
    %v402 = vld [vmem:[#allocation6 + $0xd8] sm:$0xff]
    %v403 = vld [vmem:[#allocation6 + $0xe0] sm:$0xff]
    %v404 = vld [vmem:[#allocation6 + $0xe8] sm:$0xff]
    %v405 = vld [vmem:[#allocation6 + $0xf0] sm:$0xff]
    %v406 = vld [vmem:[#allocation6 + $0xf8] sm:$0xff]
    %v407 = vld [vmem:[#allocation6 + $0x100] sm:$0xff]
    %v408 = vld [vmem:[#allocation6 + $0x108] sm:$0xff]
    %v409 = vld [vmem:[#allocation6 + $0x110] sm:$0xff]
    %v410 = vld [vmem:[#allocation6 + $0x118] sm:$0xff]
    %v411 = vld [vmem:[#allocation6 + $0x120] sm:$0xff]
    %v412 = vld [vmem:[#allocation6 + $0x128] sm:$0xff]
    %v413 = vld [vmem:[#allocation6 + $0x130] sm:$0xff]
    %v414 = vld [vmem:[#allocation6 + $0x138] sm:$0xff]
    %v415 = vld [vmem:[#allocation6 + $0x140] sm:$0xff]
    %v416 = vld [vmem:[#allocation6 + $0x148] sm:$0xff]
    %v417 = vld [vmem:[#allocation6 + $0x150] sm:$0xff]
    %v418 = vld [vmem:[#allocation6 + $0x158] sm:$0xff]
    %v419 = vld [vmem:[#allocation6 + $0x160] sm:$0xff]
    %v420 = vld [vmem:[#allocation6 + $0x168] sm:$0xff]
    %v421 = vld [vmem:[#allocation6 + $0x170] sm:$0xff]
    %v422 = vld [vmem:[#allocation6 + $0x178] sm:$0xff]
    %v423 = vld [vmem:[#allocation6 + $0x180] sm:$0xff]
    %v424 = vld [vmem:[#allocation6 + $0x188] sm:$0xff]
    %v425 = vld [vmem:[#allocation6 + $0x190] sm:$0xff]
    %v426 = vld [vmem:[#allocation6 + $0x198] sm:$0xff]
    %v427 = vld [vmem:[#allocation6 + $0x1a0] sm:$0xff]
    %v428 = vld [vmem:[#allocation6 + $0x1a8] sm:$0xff]
    %v429 = vld [vmem:[#allocation6 + $0x1b0] sm:$0xff]
    %v430 = vld [vmem:[#allocation6 + $0x1b8] sm:$0xff]
    %v431 = vld [vmem:[#allocation6 + $0x1c0] sm:$0xff]
    %v432 = vld [vmem:[#allocation6 + $0x1c8] sm:$0xff]
    %v433 = vld [vmem:[#allocation6 + $0x1d0] sm:$0xff]
    %v434 = vld [vmem:[#allocation6 + $0x1d8] sm:$0xff]
    %v435 = vld [vmem:[#allocation6 + $0x1e0] sm:$0xff]
    %v436 = vld [vmem:[#allocation6 + $0x1e8] sm:$0xff]
    %v437 = vld [vmem:[#allocation6 + $0x1f0] sm:$0xff]
    %v438 = vld [vmem:[#allocation6 + $0x1f8] sm:$0xff]
    %439 = vmatprep.subr.mxu0 %v376
    %440 = vmatpush1.msra.mxu0 %v375
    %441 = vmatprep.subr.mxu0 %v380
    %442 = vmatpush1.msra.mxu0 %v379
    %443 = vmatprep.subr.mxu0 %v384
    %444 = vmatpush1.msra.mxu0 %v383
    %445 = vmatprep.subr.mxu0 %v388
    %446 = vmatpush1.msra.mxu0 %v387
    %447 = vmatprep.subr.mxu0 %v392
    %448 = vmatpush1.msra.mxu0 %v391
    %449 = vmatprep.subr.mxu0 %v396
    %450 = vmatpush1.msra.mxu0 %v395
    %451 = vmatprep.subr.mxu0 %v400
    %452 = vmatpush1.msra.mxu0 %v399
    %453 = vmatprep.subr.mxu0 %v404
    %454 = vmatpush1.msra.mxu0 %v403
    %455 = vmatprep.subr.mxu0 %v408
    %456 = vmatpush1.msra.mxu0 %v407
    %457 = vmatprep.subr.mxu0 %v412
    %458 = vmatpush1.msra.mxu0 %v411
    %459 = vmatprep.subr.mxu0 %v416
    %460 = vmatpush1.msra.mxu0 %v415
    %461 = vmatprep.subr.mxu0 %v420
    %462 = vmatpush1.msra.mxu0 %v419
    %463 = vmatprep.subr.mxu0 %v424
    %464 = vmatpush1.msra.mxu0 %v423
    %465 = vmatprep.subr.mxu0 %v428
    %466 = vmatpush1.msra.mxu0 %v427
    %467 = vmatprep.subr.mxu0 %v432
    %468 = vmatpush1.msra.mxu0 %v431
    %469 = vmatprep.subr.mxu0 %v436
    %470 = vmatpush1.msra.mxu0 %v435
    %471 = vmatprep.subr.mxu0 0.0
    %472 = vmatpush1.msra.mxu0 0.0
    %473 = vmatprep.subr.mxu0 0.0
    %474 = vmatpush1.msra.mxu0 0.0
    %475 = vmatprep.subr.mxu0 0.0
    %476 = vmatpush1.msra.mxu0 0.0
    %477 = vmatprep.subr.mxu0 0.0
    %478 = vmatpush1.msra.mxu0 0.0
    %479 = vmatprep.subr.mxu0 0.0
    %480 = vmatpush1.msra.mxu0 0.0
    %481 = vmatprep.subr.mxu0 0.0
    %482 = vmatpush1.msra.mxu0 0.0
    %483 = vmatprep.subr.mxu0 0.0
    %484 = vmatpush1.msra.mxu0 0.0
    %485 = vmatprep.subr.mxu0 0.0
    %486 = vmatpush1.msra.mxu0 0.0
    %487 = vmatprep.subr.mxu0 0.0
    %488 = vmatpush1.msra.mxu0 0.0
    %489 = vmatprep.subr.mxu0 0.0
    %490 = vmatpush1.msra.mxu0 0.0
    %491 = vmatprep.subr.mxu0 0.0
    %492 = vmatpush1.msra.mxu0 0.0
    %493 = vmatprep.subr.mxu0 0.0
    %494 = vmatpush1.msra.mxu0 0.0
    %495 = vmatprep.subr.mxu0 0.0
    %496 = vmatpush1.msra.mxu0 0.0
    %497 = vmatprep.subr.mxu0 0.0
    %498 = vmatpush1.msra.mxu0 0.0
    %499 = vmatprep.subr.mxu0 0.0
    %500 = vmatpush1.msra.mxu0 0.0
    %501 = vmatprep.subr.mxu0 0.0
    %502 = vmatpush1.msra.mxu0 0.0
    %503 = vmatprep.mubr.f32.mxu0 0.0
    %504 = vmatmul.mubr.f32.gmra.mrb[0].mxu0 %v369
    %v505 = vpop.f32.mrb[0].mxu0
    %v506 = vadd.f32 0.0, %v505
    %v507 = vpop.f32.mrb[0].mxu0
    %v508 = vadd.f32 0.0, %v507
    %509 = vdwg.mxu0
    %510 = vmatprep.subr.mxu0 %v378
    %511 = vmatpush1.msra.mxu0 %v377
    %512 = vmatprep.subr.mxu0 %v382
    %513 = vmatpush1.msra.mxu0 %v381
    %514 = vmatprep.subr.mxu0 %v386
    %515 = vmatpush1.msra.mxu0 %v385
    %516 = vmatprep.subr.mxu0 %v390
    %517 = vmatpush1.msra.mxu0 %v389
    %518 = vmatprep.subr.mxu0 %v394
    %519 = vmatpush1.msra.mxu0 %v393
    %520 = vmatprep.subr.mxu0 %v398
    %521 = vmatpush1.msra.mxu0 %v397
    %522 = vmatprep.subr.mxu0 %v402
    %523 = vmatpush1.msra.mxu0 %v401
    %524 = vmatprep.subr.mxu0 %v406
    %525 = vmatpush1.msra.mxu0 %v405
    %526 = vmatprep.subr.mxu0 %v410
    %527 = vmatpush1.msra.mxu0 %v409
    %528 = vmatprep.subr.mxu0 %v414
    %529 = vmatpush1.msra.mxu0 %v413
    %530 = vmatprep.subr.mxu0 %v418
    %531 = vmatpush1.msra.mxu0 %v417
    %532 = vmatprep.subr.mxu0 %v422
    %533 = vmatpush1.msra.mxu0 %v421
    %534 = vmatprep.subr.mxu0 %v426
    %535 = vmatpush1.msra.mxu0 %v425
    %536 = vmatprep.subr.mxu0 %v430
    %537 = vmatpush1.msra.mxu0 %v429
    %538 = vmatprep.subr.mxu0 %v434
    %539 = vmatpush1.msra.mxu0 %v433
    %540 = vmatprep.subr.mxu0 %v438
    %541 = vmatpush1.msra.mxu0 %v437
    %542 = vmatprep.subr.mxu0 0.0
    %543 = vmatpush1.msra.mxu0 0.0
    %544 = vmatprep.subr.mxu0 0.0
    %545 = vmatpush1.msra.mxu0 0.0
    %546 = vmatprep.subr.mxu0 0.0
    %547 = vmatpush1.msra.mxu0 0.0
    %548 = vmatprep.subr.mxu0 0.0
    %549 = vmatpush1.msra.mxu0 0.0
    %550 = vmatprep.subr.mxu0 0.0
    %551 = vmatpush1.msra.mxu0 0.0
    %552 = vmatprep.subr.mxu0 0.0
    %553 = vmatpush1.msra.mxu0 0.0
    %554 = vmatprep.subr.mxu0 0.0
    %555 = vmatpush1.msra.mxu0 0.0
    %556 = vmatprep.subr.mxu0 0.0
    %557 = vmatpush1.msra.mxu0 0.0
    %558 = vmatprep.subr.mxu0 0.0
    %559 = vmatpush1.msra.mxu0 0.0
    %560 = vmatprep.subr.mxu0 0.0
    %561 = vmatpush1.msra.mxu0 0.0
    %562 = vmatprep.subr.mxu0 0.0
    %563 = vmatpush1.msra.mxu0 0.0
    %564 = vmatprep.subr.mxu0 0.0
    %565 = vmatpush1.msra.mxu0 0.0
    %566 = vmatprep.subr.mxu0 0.0
    %567 = vmatpush1.msra.mxu0 0.0
    %568 = vmatprep.subr.mxu0 0.0
    %569 = vmatpush1.msra.mxu0 0.0
    %570 = vmatprep.subr.mxu0 0.0
    %571 = vmatpush1.msra.mxu0 0.0
    %572 = vmatprep.subr.mxu0 0.0
    %573 = vmatpush1.msra.mxu0 0.0
    %574 = vmatprep.mubr.f32.mxu0 0.0
    %575 = vmatmul.mubr.f32.gmra.mrb[0].mxu0 %v369
    %v576 = vpop.f32.mrb[0].mxu0
    %v577 = vadd.f32 0.0, %v576
    %v578 = vpop.f32.mrb[0].mxu0
    %v579 = vadd.f32 0.0, %v578
    %580 = vdwg.mxu0
    %v581 = vadd.f32 %v371, %v506
    %v582 = vadd.f32 %v372, %v508
    %v583 = vadd.f32 %v373, %v577
    %v584 = vadd.f32 %v374, %v579
    %v585 = vxor.u32 %v581, 2147483648
    %v586 = vmul.f32 %v585, 1.442695
    %v587 = vpow.pop %v586
    %v588 = vadd.f32 %v587, 1.0
    %v589 = vrcp.pop %v588
    %v590 = vmul.f32 1.0, %v589
    %v591 = vxor.u32 %v582, 2147483648
    %v592 = vmul.f32 %v591, 1.442695
    %v593 = vpow.pop %v592
    %v594 = vadd.f32 %v593, 1.0
    %v595 = vrcp.pop %v594
    %v596 = vmul.f32 1.0, %v595
    %v597 = vtanh.pop %v583
    %v598 = vxor.u32 %v584, 2147483648
    %v599 = vmul.f32 %v598, 1.442695
    %v600 = vpow.pop %v599
    %v601 = vadd.f32 %v600, 1.0
    %v602 = vrcp.pop %v601
    %v603 = vmul.f32 1.0, %v602
    %v604 = vmul.f32 %v596, %v370
    %v605 = vmul.f32 %v590, %v597
    %v606 = vadd.f32 %v604, %v605
    %v607 = vtanh.pop %v606
    %v608 = vmul.f32 %v603, %v607
    %609 = vst [vmem:[#allocation4] sm:$0xff] %v606
    %610 = vst [vmem:[#allocation3] sm:$0xff] %v608
    %v611 = vld [vmem:[#allocation3] sm:$0xff]
    %v612 = vld [vmem:[#allocation4] sm:$0xff]
    %s613 = scalar_lea.vmem [#allocation2], 32
    %v614 = vld [vmem:[%s613] sm:$0xff]
    %v615 = vld [vmem:[%s613 + $0x8] sm:$0xff]
    %v616 = vld [vmem:[%s613 + $0x10] sm:$0xff]
    %v617 = vld [vmem:[%s613 + $0x18] sm:$0xff]
    %v618 = vld [vmem:[#allocation6] sm:$0xff]
    %v619 = vld [vmem:[#allocation6 + $0x8] sm:$0xff]
    %v620 = vld [vmem:[#allocation6 + $0x10] sm:$0xff]
    %v621 = vld [vmem:[#allocation6 + $0x18] sm:$0xff]
    %v622 = vld [vmem:[#allocation6 + $0x20] sm:$0xff]
    %v623 = vld [vmem:[#allocation6 + $0x28] sm:$0xff]
    %v624 = vld [vmem:[#allocation6 + $0x30] sm:$0xff]
    %v625 = vld [vmem:[#allocation6 + $0x38] sm:$0xff]
    %v626 = vld [vmem:[#allocation6 + $0x40] sm:$0xff]
    %v627 = vld [vmem:[#allocation6 + $0x48] sm:$0xff]
    %v628 = vld [vmem:[#allocation6 + $0x50] sm:$0xff]
    %v629 = vld [vmem:[#allocation6 + $0x58] sm:$0xff]
    %v630 = vld [vmem:[#allocation6 + $0x60] sm:$0xff]
    %v631 = vld [vmem:[#allocation6 + $0x68] sm:$0xff]
    %v632 = vld [vmem:[#allocation6 + $0x70] sm:$0xff]
    %v633 = vld [vmem:[#allocation6 + $0x78] sm:$0xff]
    %v634 = vld [vmem:[#allocation6 + $0x80] sm:$0xff]
    %v635 = vld [vmem:[#allocation6 + $0x88] sm:$0xff]
    %v636 = vld [vmem:[#allocation6 + $0x90] sm:$0xff]
    %v637 = vld [vmem:[#allocation6 + $0x98] sm:$0xff]
    %v638 = vld [vmem:[#allocation6 + $0xa0] sm:$0xff]
    %v639 = vld [vmem:[#allocation6 + $0xa8] sm:$0xff]
    %v640 = vld [vmem:[#allocation6 + $0xb0] sm:$0xff]
    %v641 = vld [vmem:[#allocation6 + $0xb8] sm:$0xff]
    %v642 = vld [vmem:[#allocation6 + $0xc0] sm:$0xff]
    %v643 = vld [vmem:[#allocation6 + $0xc8] sm:$0xff]
    %v644 = vld [vmem:[#allocation6 + $0xd0] sm:$0xff]
    %v645 = vld [vmem:[#allocation6 + $0xd8] sm:$0xff]
    %v646 = vld [vmem:[#allocation6 + $0xe0] sm:$0xff]
    %v647 = vld [vmem:[#allocation6 + $0xe8] sm:$0xff]
    %v648 = vld [vmem:[#allocation6 + $0xf0] sm:$0xff]
    %v649 = vld [vmem:[#allocation6 + $0xf8] sm:$0xff]
    %v650 = vld [vmem:[#allocation6 + $0x100] sm:$0xff]
    %v651 = vld [vmem:[#allocation6 + $0x108] sm:$0xff]
    %v652 = vld [vmem:[#allocation6 + $0x110] sm:$0xff]
    %v653 = vld [vmem:[#allocation6 + $0x118] sm:$0xff]
    %v654 = vld [vmem:[#allocation6 + $0x120] sm:$0xff]
    %v655 = vld [vmem:[#allocation6 + $0x128] sm:$0xff]
    %v656 = vld [vmem:[#allocation6 + $0x130] sm:$0xff]
    %v657 = vld [vmem:[#allocation6 + $0x138] sm:$0xff]
    %v658 = vld [vmem:[#allocation6 + $0x140] sm:$0xff]
    %v659 = vld [vmem:[#allocation6 + $0x148] sm:$0xff]
    %v660 = vld [vmem:[#allocation6 + $0x150] sm:$0xff]
    %v661 = vld [vmem:[#allocation6 + $0x158] sm:$0xff]
    %v662 = vld [vmem:[#allocation6 + $0x160] sm:$0xff]
    %v663 = vld [vmem:[#allocation6 + $0x168] sm:$0xff]
    %v664 = vld [vmem:[#allocation6 + $0x170] sm:$0xff]
    %v665 = vld [vmem:[#allocation6 + $0x178] sm:$0xff]
    %v666 = vld [vmem:[#allocation6 + $0x180] sm:$0xff]
    %v667 = vld [vmem:[#allocation6 + $0x188] sm:$0xff]
    %v668 = vld [vmem:[#allocation6 + $0x190] sm:$0xff]
    %v669 = vld [vmem:[#allocation6 + $0x198] sm:$0xff]
    %v670 = vld [vmem:[#allocation6 + $0x1a0] sm:$0xff]
    %v671 = vld [vmem:[#allocation6 + $0x1a8] sm:$0xff]
    %v672 = vld [vmem:[#allocation6 + $0x1b0] sm:$0xff]
    %v673 = vld [vmem:[#allocation6 + $0x1b8] sm:$0xff]
    %v674 = vld [vmem:[#allocation6 + $0x1c0] sm:$0xff]
    %v675 = vld [vmem:[#allocation6 + $0x1c8] sm:$0xff]
    %v676 = vld [vmem:[#allocation6 + $0x1d0] sm:$0xff]
    %v677 = vld [vmem:[#allocation6 + $0x1d8] sm:$0xff]
    %v678 = vld [vmem:[#allocation6 + $0x1e0] sm:$0xff]
    %v679 = vld [vmem:[#allocation6 + $0x1e8] sm:$0xff]
    %v680 = vld [vmem:[#allocation6 + $0x1f0] sm:$0xff]
    %v681 = vld [vmem:[#allocation6 + $0x1f8] sm:$0xff]
    %682 = vmatprep.subr.mxu0 %v619
    %683 = vmatpush1.msra.mxu0 %v618
    %684 = vmatprep.subr.mxu0 %v623
    %685 = vmatpush1.msra.mxu0 %v622
    %686 = vmatprep.subr.mxu0 %v627
    %687 = vmatpush1.msra.mxu0 %v626
    %688 = vmatprep.subr.mxu0 %v631
    %689 = vmatpush1.msra.mxu0 %v630
    %690 = vmatprep.subr.mxu0 %v635
    %691 = vmatpush1.msra.mxu0 %v634
    %692 = vmatprep.subr.mxu0 %v639
    %693 = vmatpush1.msra.mxu0 %v638
    %694 = vmatprep.subr.mxu0 %v643
    %695 = vmatpush1.msra.mxu0 %v642
    %696 = vmatprep.subr.mxu0 %v647
    %697 = vmatpush1.msra.mxu0 %v646
    %698 = vmatprep.subr.mxu0 %v651
    %699 = vmatpush1.msra.mxu0 %v650
    %700 = vmatprep.subr.mxu0 %v655
    %701 = vmatpush1.msra.mxu0 %v654
    %702 = vmatprep.subr.mxu0 %v659
    %703 = vmatpush1.msra.mxu0 %v658
    %704 = vmatprep.subr.mxu0 %v663
    %705 = vmatpush1.msra.mxu0 %v662
    %706 = vmatprep.subr.mxu0 %v667
    %707 = vmatpush1.msra.mxu0 %v666
    %708 = vmatprep.subr.mxu0 %v671
    %709 = vmatpush1.msra.mxu0 %v670
    %710 = vmatprep.subr.mxu0 %v675
    %711 = vmatpush1.msra.mxu0 %v674
    %712 = vmatprep.subr.mxu0 %v679
    %713 = vmatpush1.msra.mxu0 %v678
    %714 = vmatprep.subr.mxu0 0.0
    %715 = vmatpush1.msra.mxu0 0.0
    %716 = vmatprep.subr.mxu0 0.0
    %717 = vmatpush1.msra.mxu0 0.0
    %718 = vmatprep.subr.mxu0 0.0
    %719 = vmatpush1.msra.mxu0 0.0
    %720 = vmatprep.subr.mxu0 0.0
    %721 = vmatpush1.msra.mxu0 0.0
    %722 = vmatprep.subr.mxu0 0.0
    %723 = vmatpush1.msra.mxu0 0.0
    %724 = vmatprep.subr.mxu0 0.0
    %725 = vmatpush1.msra.mxu0 0.0
    %726 = vmatprep.subr.mxu0 0.0
    %727 = vmatpush1.msra.mxu0 0.0
    %728 = vmatprep.subr.mxu0 0.0
    %729 = vmatpush1.msra.mxu0 0.0
    %730 = vmatprep.subr.mxu0 0.0
    %731 = vmatpush1.msra.mxu0 0.0
    %732 = vmatprep.subr.mxu0 0.0
    %733 = vmatpush1.msra.mxu0 0.0
    %734 = vmatprep.subr.mxu0 0.0
    %735 = vmatpush1.msra.mxu0 0.0
    %736 = vmatprep.subr.mxu0 0.0
    %737 = vmatpush1.msra.mxu0 0.0
    %738 = vmatprep.subr.mxu0 0.0
    %739 = vmatpush1.msra.mxu0 0.0
    %740 = vmatprep.subr.mxu0 0.0
    %741 = vmatpush1.msra.mxu0 0.0
    %742 = vmatprep.subr.mxu0 0.0
    %743 = vmatpush1.msra.mxu0 0.0
    %744 = vmatprep.subr.mxu0 0.0
    %745 = vmatpush1.msra.mxu0 0.0
    %746 = vmatprep.mubr.f32.mxu0 0.0
    %747 = vmatmul.mubr.f32.gmra.mrb[0].mxu0 %v611
    %v748 = vpop.f32.mrb[0].mxu0
    %v749 = vadd.f32 0.0, %v748
    %v750 = vpop.f32.mrb[0].mxu0
    %v751 = vadd.f32 0.0, %v750
    %752 = vdwg.mxu0
    %753 = vmatprep.subr.mxu0 %v621
    %754 = vmatpush1.msra.mxu0 %v620
    %755 = vmatprep.subr.mxu0 %v625
    %756 = vmatpush1.msra.mxu0 %v624
    %757 = vmatprep.subr.mxu0 %v629
    %758 = vmatpush1.msra.mxu0 %v628
    %759 = vmatprep.subr.mxu0 %v633
    %760 = vmatpush1.msra.mxu0 %v632
    %761 = vmatprep.subr.mxu0 %v637
    %762 = vmatpush1.msra.mxu0 %v636
    %763 = vmatprep.subr.mxu0 %v641
    %764 = vmatpush1.msra.mxu0 %v640
    %765 = vmatprep.subr.mxu0 %v645
    %766 = vmatpush1.msra.mxu0 %v644
    %767 = vmatprep.subr.mxu0 %v649
    %768 = vmatpush1.msra.mxu0 %v648
    %769 = vmatprep.subr.mxu0 %v653
    %770 = vmatpush1.msra.mxu0 %v652
    %771 = vmatprep.subr.mxu0 %v657
    %772 = vmatpush1.msra.mxu0 %v656
    %773 = vmatprep.subr.mxu0 %v661
    %774 = vmatpush1.msra.mxu0 %v660
    %775 = vmatprep.subr.mxu0 %v665
    %776 = vmatpush1.msra.mxu0 %v664
    %777 = vmatprep.subr.mxu0 %v669
    %778 = vmatpush1.msra.mxu0 %v668
    %779 = vmatprep.subr.mxu0 %v673
    %780 = vmatpush1.msra.mxu0 %v672
    %781 = vmatprep.subr.mxu0 %v677
    %782 = vmatpush1.msra.mxu0 %v676
    %783 = vmatprep.subr.mxu0 %v681
    %784 = vmatpush1.msra.mxu0 %v680
    %785 = vmatprep.subr.mxu0 0.0
    %786 = vmatpush1.msra.mxu0 0.0
    %787 = vmatprep.subr.mxu0 0.0
    %788 = vmatpush1.msra.mxu0 0.0
    %789 = vmatprep.subr.mxu0 0.0
    %790 = vmatpush1.msra.mxu0 0.0
    %791 = vmatprep.subr.mxu0 0.0
    %792 = vmatpush1.msra.mxu0 0.0
    %793 = vmatprep.subr.mxu0 0.0
    %794 = vmatpush1.msra.mxu0 0.0
    %795 = vmatprep.subr.mxu0 0.0
    %796 = vmatpush1.msra.mxu0 0.0
    %797 = vmatprep.subr.mxu0 0.0
    %798 = vmatpush1.msra.mxu0 0.0
    %799 = vmatprep.subr.mxu0 0.0
    %800 = vmatpush1.msra.mxu0 0.0
    %801 = vmatprep.subr.mxu0 0.0
    %802 = vmatpush1.msra.mxu0 0.0
    %803 = vmatprep.subr.mxu0 0.0
    %804 = vmatpush1.msra.mxu0 0.0
    %805 = vmatprep.subr.mxu0 0.0
    %806 = vmatpush1.msra.mxu0 0.0
    %807 = vmatprep.subr.mxu0 0.0
    %808 = vmatpush1.msra.mxu0 0.0
    %809 = vmatprep.subr.mxu0 0.0
    %810 = vmatpush1.msra.mxu0 0.0
    %811 = vmatprep.subr.mxu0 0.0
    %812 = vmatpush1.msra.mxu0 0.0
    %813 = vmatprep.subr.mxu0 0.0
    %814 = vmatpush1.msra.mxu0 0.0
    %815 = vmatprep.subr.mxu0 0.0
    %816 = vmatpush1.msra.mxu0 0.0
    %817 = vmatprep.mubr.f32.mxu0 0.0
    %818 = vmatmul.mubr.f32.gmra.mrb[0].mxu0 %v611
    %v819 = vpop.f32.mrb[0].mxu0
    %v820 = vadd.f32 0.0, %v819
    %v821 = vpop.f32.mrb[0].mxu0
    %v822 = vadd.f32 0.0, %v821
    %823 = vdwg.mxu0
    %v824 = vadd.f32 %v614, %v749
    %v825 = vadd.f32 %v615, %v751
    %v826 = vadd.f32 %v616, %v820
    %v827 = vadd.f32 %v617, %v822
    %v828 = vxor.u32 %v824, 2147483648
    %v829 = vmul.f32 %v828, 1.442695
    %v830 = vpow.pop %v829
    %v831 = vadd.f32 %v830, 1.0
    %v832 = vrcp.pop %v831
    %v833 = vmul.f32 1.0, %v832
    %v834 = vxor.u32 %v825, 2147483648
    %v835 = vmul.f32 %v834, 1.442695
    %v836 = vpow.pop %v835
    %v837 = vadd.f32 %v836, 1.0
    %v838 = vrcp.pop %v837
    %v839 = vmul.f32 1.0, %v838
    %v840 = vtanh.pop %v826
    %v841 = vxor.u32 %v827, 2147483648
    %v842 = vmul.f32 %v841, 1.442695
    %v843 = vpow.pop %v842
    %v844 = vadd.f32 %v843, 1.0
    %v845 = vrcp.pop %v844
    %v846 = vmul.f32 1.0, %v845
    %v847 = vmul.f32 %v839, %v612
    %v848 = vmul.f32 %v833, %v840
    %v849 = vadd.f32 %v847, %v848
    %v850 = vtanh.pop %v849
    %v851 = vmul.f32 %v846, %v850
    %852 = vst [vmem:[#allocation4] sm:$0xff] %v849
    %853 = vst [vmem:[#allocation3] sm:$0xff] %v851
    %v854 = vld [vmem:[#allocation3] sm:$0xff]
    %v855 = vld [vmem:[#allocation4] sm:$0xff]
    %s856 = scalar_lea.vmem [#allocation2], 64
    %v857 = vld [vmem:[%s856] sm:$0xff]
    %v858 = vld [vmem:[%s856 + $0x8] sm:$0xff]
    %v859 = vld [vmem:[%s856 + $0x10] sm:$0xff]
    %v860 = vld [vmem:[%s856 + $0x18] sm:$0xff]
    %v861 = vld [vmem:[#allocation6] sm:$0xff]
    %v862 = vld [vmem:[#allocation6 + $0x8] sm:$0xff]
    %v863 = vld [vmem:[#allocation6 + $0x10] sm:$0xff]
    %v864 = vld [vmem:[#allocation6 + $0x18] sm:$0xff]
    %v865 = vld [vmem:[#allocation6 + $0x20] sm:$0xff]
    %v866 = vld [vmem:[#allocation6 + $0x28] sm:$0xff]
    %v867 = vld [vmem:[#allocation6 + $0x30] sm:$0xff]
    %v868 = vld [vmem:[#allocation6 + $0x38] sm:$0xff]
    %v869 = vld [vmem:[#allocation6 + $0x40] sm:$0xff]
    %v870 = vld [vmem:[#allocation6 + $0x48] sm:$0xff]
    %v871 = vld [vmem:[#allocation6 + $0x50] sm:$0xff]
    %v872 = vld [vmem:[#allocation6 + $0x58] sm:$0xff]
    %v873 = vld [vmem:[#allocation6 + $0x60] sm:$0xff]
    %v874 = vld [vmem:[#allocation6 + $0x68] sm:$0xff]
    %v875 = vld [vmem:[#allocation6 + $0x70] sm:$0xff]
    %v876 = vld [vmem:[#allocation6 + $0x78] sm:$0xff]
    %v877 = vld [vmem:[#allocation6 + $0x80] sm:$0xff]
    %v878 = vld [vmem:[#allocation6 + $0x88] sm:$0xff]
    %v879 = vld [vmem:[#allocation6 + $0x90] sm:$0xff]
    %v880 = vld [vmem:[#allocation6 + $0x98] sm:$0xff]
    %v881 = vld [vmem:[#allocation6 + $0xa0] sm:$0xff]
    %v882 = vld [vmem:[#allocation6 + $0xa8] sm:$0xff]
    %v883 = vld [vmem:[#allocation6 + $0xb0] sm:$0xff]
    %v884 = vld [vmem:[#allocation6 + $0xb8] sm:$0xff]
    %v885 = vld [vmem:[#allocation6 + $0xc0] sm:$0xff]
    %v886 = vld [vmem:[#allocation6 + $0xc8] sm:$0xff]
    %v887 = vld [vmem:[#allocation6 + $0xd0] sm:$0xff]
    %v888 = vld [vmem:[#allocation6 + $0xd8] sm:$0xff]
    %v889 = vld [vmem:[#allocation6 + $0xe0] sm:$0xff]
    %v890 = vld [vmem:[#allocation6 + $0xe8] sm:$0xff]
    %v891 = vld [vmem:[#allocation6 + $0xf0] sm:$0xff]
    %v892 = vld [vmem:[#allocation6 + $0xf8] sm:$0xff]
    %v893 = vld [vmem:[#allocation6 + $0x100] sm:$0xff]
    %v894 = vld [vmem:[#allocation6 + $0x108] sm:$0xff]
    %v895 = vld [vmem:[#allocation6 + $0x110] sm:$0xff]
    %v896 = vld [vmem:[#allocation6 + $0x118] sm:$0xff]
    %v897 = vld [vmem:[#allocation6 + $0x120] sm:$0xff]
    %v898 = vld [vmem:[#allocation6 + $0x128] sm:$0xff]
    %v899 = vld [vmem:[#allocation6 + $0x130] sm:$0xff]
    %v900 = vld [vmem:[#allocation6 + $0x138] sm:$0xff]
    %v901 = vld [vmem:[#allocation6 + $0x140] sm:$0xff]
    %v902 = vld [vmem:[#allocation6 + $0x148] sm:$0xff]
    %v903 = vld [vmem:[#allocation6 + $0x150] sm:$0xff]
    %v904 = vld [vmem:[#allocation6 + $0x158] sm:$0xff]
    %v905 = vld [vmem:[#allocation6 + $0x160] sm:$0xff]
    %v906 = vld [vmem:[#allocation6 + $0x168] sm:$0xff]
    %v907 = vld [vmem:[#allocation6 + $0x170] sm:$0xff]
    %v908 = vld [vmem:[#allocation6 + $0x178] sm:$0xff]
    %v909 = vld [vmem:[#allocation6 + $0x180] sm:$0xff]
    %v910 = vld [vmem:[#allocation6 + $0x188] sm:$0xff]
    %v911 = vld [vmem:[#allocation6 + $0x190] sm:$0xff]
    %v912 = vld [vmem:[#allocation6 + $0x198] sm:$0xff]
    %v913 = vld [vmem:[#allocation6 + $0x1a0] sm:$0xff]
    %v914 = vld [vmem:[#allocation6 + $0x1a8] sm:$0xff]
    %v915 = vld [vmem:[#allocation6 + $0x1b0] sm:$0xff]
    %v916 = vld [vmem:[#allocation6 + $0x1b8] sm:$0xff]
    %v917 = vld [vmem:[#allocation6 + $0x1c0] sm:$0xff]
    %v918 = vld [vmem:[#allocation6 + $0x1c8] sm:$0xff]
    %v919 = vld [vmem:[#allocation6 + $0x1d0] sm:$0xff]
    %v920 = vld [vmem:[#allocation6 + $0x1d8] sm:$0xff]
    %v921 = vld [vmem:[#allocation6 + $0x1e0] sm:$0xff]
    %v922 = vld [vmem:[#allocation6 + $0x1e8] sm:$0xff]
    %v923 = vld [vmem:[#allocation6 + $0x1f0] sm:$0xff]
    %v924 = vld [vmem:[#allocation6 + $0x1f8] sm:$0xff]
    %925 = vmatprep.subr.mxu0 %v862
    %926 = vmatpush1.msra.mxu0 %v861
    %927 = vmatprep.subr.mxu0 %v866
    %928 = vmatpush1.msra.mxu0 %v865
    %929 = vmatprep.subr.mxu0 %v870
    %930 = vmatpush1.msra.mxu0 %v869
    %931 = vmatprep.subr.mxu0 %v874
    %932 = vmatpush1.msra.mxu0 %v873
    %933 = vmatprep.subr.mxu0 %v878
    %934 = vmatpush1.msra.mxu0 %v877
    %935 = vmatprep.subr.mxu0 %v882
    %936 = vmatpush1.msra.mxu0 %v881
    %937 = vmatprep.subr.mxu0 %v886
    %938 = vmatpush1.msra.mxu0 %v885
    %939 = vmatprep.subr.mxu0 %v890
    %940 = vmatpush1.msra.mxu0 %v889
    %941 = vmatprep.subr.mxu0 %v894
    %942 = vmatpush1.msra.mxu0 %v893
    %943 = vmatprep.subr.mxu0 %v898
    %944 = vmatpush1.msra.mxu0 %v897
    %945 = vmatprep.subr.mxu0 %v902
    %946 = vmatpush1.msra.mxu0 %v901
    %947 = vmatprep.subr.mxu0 %v906
    %948 = vmatpush1.msra.mxu0 %v905
    %949 = vmatprep.subr.mxu0 %v910
    %950 = vmatpush1.msra.mxu0 %v909
    %951 = vmatprep.subr.mxu0 %v914
    %952 = vmatpush1.msra.mxu0 %v913
    %953 = vmatprep.subr.mxu0 %v918
    %954 = vmatpush1.msra.mxu0 %v917
    %955 = vmatprep.subr.mxu0 %v922
    %956 = vmatpush1.msra.mxu0 %v921
    %957 = vmatprep.subr.mxu0 0.0
    %958 = vmatpush1.msra.mxu0 0.0
    %959 = vmatprep.subr.mxu0 0.0
    %960 = vmatpush1.msra.mxu0 0.0
    %961 = vmatprep.subr.mxu0 0.0
    %962 = vmatpush1.msra.mxu0 0.0
    %963 = vmatprep.subr.mxu0 0.0
    %964 = vmatpush1.msra.mxu0 0.0
    %965 = vmatprep.subr.mxu0 0.0
    %966 = vmatpush1.msra.mxu0 0.0
    %967 = vmatprep.subr.mxu0 0.0
    %968 = vmatpush1.msra.mxu0 0.0
    %969 = vmatprep.subr.mxu0 0.0
    %970 = vmatpush1.msra.mxu0 0.0
    %971 = vmatprep.subr.mxu0 0.0
    %972 = vmatpush1.msra.mxu0 0.0
    %973 = vmatprep.subr.mxu0 0.0
    %974 = vmatpush1.msra.mxu0 0.0
    %975 = vmatprep.subr.mxu0 0.0
    %976 = vmatpush1.msra.mxu0 0.0
    %977 = vmatprep.subr.mxu0 0.0
    %978 = vmatpush1.msra.mxu0 0.0
    %979 = vmatprep.subr.mxu0 0.0
    %980 = vmatpush1.msra.mxu0 0.0
    %981 = vmatprep.subr.mxu0 0.0
    %982 = vmatpush1.msra.mxu0 0.0
    %983 = vmatprep.subr.mxu0 0.0
    %984 = vmatpush1.msra.mxu0 0.0
    %985 = vmatprep.subr.mxu0 0.0
    %986 = vmatpush1.msra.mxu0 0.0
    %987 = vmatprep.subr.mxu0 0.0
    %988 = vmatpush1.msra.mxu0 0.0
    %989 = vmatprep.mubr.f32.mxu0 0.0
    %990 = vmatmul.mubr.f32.gmra.mrb[0].mxu0 %v854
    %v991 = vpop.f32.mrb[0].mxu0
    %v992 = vadd.f32 0.0, %v991
    %v993 = vpop.f32.mrb[0].mxu0
    %v994 = vadd.f32 0.0, %v993
    %995 = vdwg.mxu0
    %996 = vmatprep.subr.mxu0 %v864
    %997 = vmatpush1.msra.mxu0 %v863
    %998 = vmatprep.subr.mxu0 %v868
    %999 = vmatpush1.msra.mxu0 %v867
    %1000 = vmatprep.subr.mxu0 %v872
    %1001 = vmatpush1.msra.mxu0 %v871
    %1002 = vmatprep.subr.mxu0 %v876
    %1003 = vmatpush1.msra.mxu0 %v875
    %1004 = vmatprep.subr.mxu0 %v880
    %1005 = vmatpush1.msra.mxu0 %v879
    %1006 = vmatprep.subr.mxu0 %v884
    %1007 = vmatpush1.msra.mxu0 %v883
    %1008 = vmatprep.subr.mxu0 %v888
    %1009 = vmatpush1.msra.mxu0 %v887
    %1010 = vmatprep.subr.mxu0 %v892
    %1011 = vmatpush1.msra.mxu0 %v891
    %1012 = vmatprep.subr.mxu0 %v896
    %1013 = vmatpush1.msra.mxu0 %v895
    %1014 = vmatprep.subr.mxu0 %v900
    %1015 = vmatpush1.msra.mxu0 %v899
    %1016 = vmatprep.subr.mxu0 %v904
    %1017 = vmatpush1.msra.mxu0 %v903
    %1018 = vmatprep.subr.mxu0 %v908
    %1019 = vmatpush1.msra.mxu0 %v907
    %1020 = vmatprep.subr.mxu0 %v912
    %1021 = vmatpush1.msra.mxu0 %v911
    %1022 = vmatprep.subr.mxu0 %v916
    %1023 = vmatpush1.msra.mxu0 %v915
    %1024 = vmatprep.subr.mxu0 %v920
    %1025 = vmatpush1.msra.mxu0 %v919
    %1026 = vmatprep.subr.mxu0 %v924
    %1027 = vmatpush1.msra.mxu0 %v923
    %1028 = vmatprep.subr.mxu0 0.0
    %1029 = vmatpush1.msra.mxu0 0.0
    %1030 = vmatprep.subr.mxu0 0.0
    %1031 = vmatpush1.msra.mxu0 0.0
    %1032 = vmatprep.subr.mxu0 0.0
    %1033 = vmatpush1.msra.mxu0 0.0
    %1034 = vmatprep.subr.mxu0 0.0
    %1035 = vmatpush1.msra.mxu0 0.0
    %1036 = vmatprep.subr.mxu0 0.0
    %1037 = vmatpush1.msra.mxu0 0.0
    %1038 = vmatprep.subr.mxu0 0.0
    %1039 = vmatpush1.msra.mxu0 0.0
    %1040 = vmatprep.subr.mxu0 0.0
    %1041 = vmatpush1.msra.mxu0 0.0
    %1042 = vmatprep.subr.mxu0 0.0
    %1043 = vmatpush1.msra.mxu0 0.0
    %1044 = vmatprep.subr.mxu0 0.0
    %1045 = vmatpush1.msra.mxu0 0.0
    %1046 = vmatprep.subr.mxu0 0.0
    %1047 = vmatpush1.msra.mxu0 0.0
    %1048 = vmatprep.subr.mxu0 0.0
    %1049 = vmatpush1.msra.mxu0 0.0
    %1050 = vmatprep.subr.mxu0 0.0
    %1051 = vmatpush1.msra.mxu0 0.0
    %1052 = vmatprep.subr.mxu0 0.0
    %1053 = vmatpush1.msra.mxu0 0.0
    %1054 = vmatprep.subr.mxu0 0.0
    %1055 = vmatpush1.msra.mxu0 0.0
    %1056 = vmatprep.subr.mxu0 0.0
    %1057 = vmatpush1.msra.mxu0 0.0
    %1058 = vmatprep.subr.mxu0 0.0
    %1059 = vmatpush1.msra.mxu0 0.0
    %1060 = vmatprep.mubr.f32.mxu0 0.0
    %1061 = vmatmul.mubr.f32.gmra.mrb[0].mxu0 %v854
    %v1062 = vpop.f32.mrb[0].mxu0
    %v1063 = vadd.f32 0.0, %v1062
    %v1064 = vpop.f32.mrb[0].mxu0
    %v1065 = vadd.f32 0.0, %v1064
    %1066 = vdwg.mxu0
    %v1067 = vadd.f32 %v857, %v992
    %v1068 = vadd.f32 %v858, %v994
    %v1069 = vadd.f32 %v859, %v1063
    %v1070 = vadd.f32 %v860, %v1065
    %v1071 = vxor.u32 %v1067, 2147483648
    %v1072 = vmul.f32 %v1071, 1.442695
    %v1073 = vpow.pop %v1072
    %v1074 = vadd.f32 %v1073, 1.0
    %v1075 = vrcp.pop %v1074
    %v1076 = vmul.f32 1.0, %v1075
    %v1077 = vxor.u32 %v1068, 2147483648
    %v1078 = vmul.f32 %v1077, 1.442695
    %v1079 = vpow.pop %v1078
    %v1080 = vadd.f32 %v1079, 1.0
    %v1081 = vrcp.pop %v1080
    %v1082 = vmul.f32 1.0, %v1081
    %v1083 = vtanh.pop %v1069
    %v1084 = vxor.u32 %v1070, 2147483648
    %v1085 = vmul.f32 %v1084, 1.442695
    %v1086 = vpow.pop %v1085
    %v1087 = vadd.f32 %v1086, 1.0
    %v1088 = vrcp.pop %v1087
    %v1089 = vmul.f32 1.0, %v1088
    %v1090 = vmul.f32 %v1082, %v855
    %v1091 = vmul.f32 %v1076, %v1083
    %v1092 = vadd.f32 %v1090, %v1091
    %v1093 = vtanh.pop %v1092
    %v1094 = vmul.f32 %v1089, %v1093
    %1095 = vst [vmem:[#allocation4] sm:$0xff] %v1092
    %1096 = vst [vmem:[#allocation3] sm:$0xff] %v1094
    %v1097 = vld [vmem:[#allocation3] sm:$0xff]
    %v1098 = vld [vmem:[#allocation4] sm:$0xff]
    %s1099 = scalar_lea.vmem [#allocation2], 96
    %v1100 = vld [vmem:[%s1099] sm:$0xff]
    %v1101 = vld [vmem:[%s1099 + $0x8] sm:$0xff]
    %v1102 = vld [vmem:[%s1099 + $0x10] sm:$0xff]
    %v1103 = vld [vmem:[%s1099 + $0x18] sm:$0xff]
    %v1104 = vld [vmem:[#allocation6] sm:$0xff]
    %v1105 = vld [vmem:[#allocation6 + $0x8] sm:$0xff]
    %v1106 = vld [vmem:[#allocation6 + $0x10] sm:$0xff]
    %v1107 = vld [vmem:[#allocation6 + $0x18] sm:$0xff]
    %v1108 = vld [vmem:[#allocation6 + $0x20] sm:$0xff]
    %v1109 = vld [vmem:[#allocation6 + $0x28] sm:$0xff]
    %v1110 = vld [vmem:[#allocation6 + $0x30] sm:$0xff]
    %v1111 = vld [vmem:[#allocation6 + $0x38] sm:$0xff]
    %v1112 = vld [vmem:[#allocation6 + $0x40] sm:$0xff]
    %v1113 = vld [vmem:[#allocation6 + $0x48] sm:$0xff]
    %v1114 = vld [vmem:[#allocation6 + $0x50] sm:$0xff]
    %v1115 = vld [vmem:[#allocation6 + $0x58] sm:$0xff]
    %v1116 = vld [vmem:[#allocation6 + $0x60] sm:$0xff]
    %v1117 = vld [vmem:[#allocation6 + $0x68] sm:$0xff]
    %v1118 = vld [vmem:[#allocation6 + $0x70] sm:$0xff]
    %v1119 = vld [vmem:[#allocation6 + $0x78] sm:$0xff]
    %v1120 = vld [vmem:[#allocation6 + $0x80] sm:$0xff]
    %v1121 = vld [vmem:[#allocation6 + $0x88] sm:$0xff]
    %v1122 = vld [vmem:[#allocation6 + $0x90] sm:$0xff]
    %v1123 = vld [vmem:[#allocation6 + $0x98] sm:$0xff]
    %v1124 = vld [vmem:[#allocation6 + $0xa0] sm:$0xff]
    %v1125 = vld [vmem:[#allocation6 + $0xa8] sm:$0xff]
    %v1126 = vld [vmem:[#allocation6 + $0xb0] sm:$0xff]
    %v1127 = vld [vmem:[#allocation6 + $0xb8] sm:$0xff]
    %v1128 = vld [vmem:[#allocation6 + $0xc0] sm:$0xff]
    %v1129 = vld [vmem:[#allocation6 + $0xc8] sm:$0xff]
    %v1130 = vld [vmem:[#allocation6 + $0xd0] sm:$0xff]
    %v1131 = vld [vmem:[#allocation6 + $0xd8] sm:$0xff]
    %v1132 = vld [vmem:[#allocation6 + $0xe0] sm:$0xff]
    %v1133 = vld [vmem:[#allocation6 + $0xe8] sm:$0xff]
    %v1134 = vld [vmem:[#allocation6 + $0xf0] sm:$0xff]
    %v1135 = vld [vmem:[#allocation6 + $0xf8] sm:$0xff]
    %v1136 = vld [vmem:[#allocation6 + $0x100] sm:$0xff]
    %v1137 = vld [vmem:[#allocation6 + $0x108] sm:$0xff]
    %v1138 = vld [vmem:[#allocation6 + $0x110] sm:$0xff]
    %v1139 = vld [vmem:[#allocation6 + $0x118] sm:$0xff]
    %v1140 = vld [vmem:[#allocation6 + $0x120] sm:$0xff]
    %v1141 = vld [vmem:[#allocation6 + $0x128] sm:$0xff]
    %v1142 = vld [vmem:[#allocation6 + $0x130] sm:$0xff]
    %v1143 = vld [vmem:[#allocation6 + $0x138] sm:$0xff]
    %v1144 = vld [vmem:[#allocation6 + $0x140] sm:$0xff]
    %v1145 = vld [vmem:[#allocation6 + $0x148] sm:$0xff]
    %v1146 = vld [vmem:[#allocation6 + $0x150] sm:$0xff]
    %v1147 = vld [vmem:[#allocation6 + $0x158] sm:$0xff]
    %v1148 = vld [vmem:[#allocation6 + $0x160] sm:$0xff]
    %v1149 = vld [vmem:[#allocation6 + $0x168] sm:$0xff]
    %v1150 = vld [vmem:[#allocation6 + $0x170] sm:$0xff]
    %v1151 = vld [vmem:[#allocation6 + $0x178] sm:$0xff]
    %v1152 = vld [vmem:[#allocation6 + $0x180] sm:$0xff]
    %v1153 = vld [vmem:[#allocation6 + $0x188] sm:$0xff]
    %v1154 = vld [vmem:[#allocation6 + $0x190] sm:$0xff]
    %v1155 = vld [vmem:[#allocation6 + $0x198] sm:$0xff]
    %v1156 = vld [vmem:[#allocation6 + $0x1a0] sm:$0xff]
    %v1157 = vld [vmem:[#allocation6 + $0x1a8] sm:$0xff]
    %v1158 = vld [vmem:[#allocation6 + $0x1b0] sm:$0xff]
    %v1159 = vld [vmem:[#allocation6 + $0x1b8] sm:$0xff]
    %v1160 = vld [vmem:[#allocation6 + $0x1c0] sm:$0xff]
    %v1161 = vld [vmem:[#allocation6 + $0x1c8] sm:$0xff]
    %v1162 = vld [vmem:[#allocation6 + $0x1d0] sm:$0xff]
    %v1163 = vld [vmem:[#allocation6 + $0x1d8] sm:$0xff]
    %v1164 = vld [vmem:[#allocation6 + $0x1e0] sm:$0xff]
    %v1165 = vld [vmem:[#allocation6 + $0x1e8] sm:$0xff]
    %v1166 = vld [vmem:[#allocation6 + $0x1f0] sm:$0xff]
    %v1167 = vld [vmem:[#allocation6 + $0x1f8] sm:$0xff]
    %1168 = vmatprep.subr.mxu0 %v1105
    %1169 = vmatpush1.msra.mxu0 %v1104
    %1170 = vmatprep.subr.mxu0 %v1109
    %1171 = vmatpush1.msra.mxu0 %v1108
    %1172 = vmatprep.subr.mxu0 %v1113
    %1173 = vmatpush1.msra.mxu0 %v1112
    %1174 = vmatprep.subr.mxu0 %v1117
    %1175 = vmatpush1.msra.mxu0 %v1116
    %1176 = vmatprep.subr.mxu0 %v1121
    %1177 = vmatpush1.msra.mxu0 %v1120
    %1178 = vmatprep.subr.mxu0 %v1125
    %1179 = vmatpush1.msra.mxu0 %v1124
    %1180 = vmatprep.subr.mxu0 %v1129
    %1181 = vmatpush1.msra.mxu0 %v1128
    %1182 = vmatprep.subr.mxu0 %v1133
    %1183 = vmatpush1.msra.mxu0 %v1132
    %1184 = vmatprep.subr.mxu0 %v1137
    %1185 = vmatpush1.msra.mxu0 %v1136
    %1186 = vmatprep.subr.mxu0 %v1141
    %1187 = vmatpush1.msra.mxu0 %v1140
    %1188 = vmatprep.subr.mxu0 %v1145
    %1189 = vmatpush1.msra.mxu0 %v1144
    %1190 = vmatprep.subr.mxu0 %v1149
    %1191 = vmatpush1.msra.mxu0 %v1148
    %1192 = vmatprep.subr.mxu0 %v1153
    %1193 = vmatpush1.msra.mxu0 %v1152
    %1194 = vmatprep.subr.mxu0 %v1157
    %1195 = vmatpush1.msra.mxu0 %v1156
    %1196 = vmatprep.subr.mxu0 %v1161
    %1197 = vmatpush1.msra.mxu0 %v1160
    %1198 = vmatprep.subr.mxu0 %v1165
    %1199 = vmatpush1.msra.mxu0 %v1164
    %1200 = vmatprep.subr.mxu0 0.0
    %1201 = vmatpush1.msra.mxu0 0.0
    %1202 = vmatprep.subr.mxu0 0.0
    %1203 = vmatpush1.msra.mxu0 0.0
    %1204 = vmatprep.subr.mxu0 0.0
    %1205 = vmatpush1.msra.mxu0 0.0
    %1206 = vmatprep.subr.mxu0 0.0
    %1207 = vmatpush1.msra.mxu0 0.0
    %1208 = vmatprep.subr.mxu0 0.0
    %1209 = vmatpush1.msra.mxu0 0.0
    %1210 = vmatprep.subr.mxu0 0.0
    %1211 = vmatpush1.msra.mxu0 0.0
    %1212 = vmatprep.subr.mxu0 0.0
    %1213 = vmatpush1.msra.mxu0 0.0
    %1214 = vmatprep.subr.mxu0 0.0
    %1215 = vmatpush1.msra.mxu0 0.0
    %1216 = vmatprep.subr.mxu0 0.0
    %1217 = vmatpush1.msra.mxu0 0.0
    %1218 = vmatprep.subr.mxu0 0.0
    %1219 = vmatpush1.msra.mxu0 0.0
    %1220 = vmatprep.subr.mxu0 0.0
    %1221 = vmatpush1.msra.mxu0 0.0
    %1222 = vmatprep.subr.mxu0 0.0
    %1223 = vmatpush1.msra.mxu0 0.0
    %1224 = vmatprep.subr.mxu0 0.0
    %1225 = vmatpush1.msra.mxu0 0.0
    %1226 = vmatprep.subr.mxu0 0.0
    %1227 = vmatpush1.msra.mxu0 0.0
    %1228 = vmatprep.subr.mxu0 0.0
    %1229 = vmatpush1.msra.mxu0 0.0
    %1230 = vmatprep.subr.mxu0 0.0
    %1231 = vmatpush1.msra.mxu0 0.0
    %1232 = vmatprep.mubr.f32.mxu0 0.0
    %1233 = vmatmul.mubr.f32.gmra.mrb[0].mxu0 %v1097
    %v1234 = vpop.f32.mrb[0].mxu0
    %v1235 = vadd.f32 0.0, %v1234
    %v1236 = vpop.f32.mrb[0].mxu0
    %v1237 = vadd.f32 0.0, %v1236
    %1238 = vdwg.mxu0
    %1239 = vmatprep.subr.mxu0 %v1107
    %1240 = vmatpush1.msra.mxu0 %v1106
    %1241 = vmatprep.subr.mxu0 %v1111
    %1242 = vmatpush1.msra.mxu0 %v1110
    %1243 = vmatprep.subr.mxu0 %v1115
    %1244 = vmatpush1.msra.mxu0 %v1114
    %1245 = vmatprep.subr.mxu0 %v1119
    %1246 = vmatpush1.msra.mxu0 %v1118
    %1247 = vmatprep.subr.mxu0 %v1123
    %1248 = vmatpush1.msra.mxu0 %v1122
    %1249 = vmatprep.subr.mxu0 %v1127
    %1250 = vmatpush1.msra.mxu0 %v1126
    %1251 = vmatprep.subr.mxu0 %v1131
    %1252 = vmatpush1.msra.mxu0 %v1130
    %1253 = vmatprep.subr.mxu0 %v1135
    %1254 = vmatpush1.msra.mxu0 %v1134
    %1255 = vmatprep.subr.mxu0 %v1139
    %1256 = vmatpush1.msra.mxu0 %v1138
    %1257 = vmatprep.subr.mxu0 %v1143
    %1258 = vmatpush1.msra.mxu0 %v1142
    %1259 = vmatprep.subr.mxu0 %v1147
    %1260 = vmatpush1.msra.mxu0 %v1146
    %1261 = vmatprep.subr.mxu0 %v1151
    %1262 = vmatpush1.msra.mxu0 %v1150
    %1263 = vmatprep.subr.mxu0 %v1155
    %1264 = vmatpush1.msra.mxu0 %v1154
    %1265 = vmatprep.subr.mxu0 %v1159
    %1266 = vmatpush1.msra.mxu0 %v1158
    %1267 = vmatprep.subr.mxu0 %v1163
    %1268 = vmatpush1.msra.mxu0 %v1162
    %1269 = vmatprep.subr.mxu0 %v1167
    %1270 = vmatpush1.msra.mxu0 %v1166
    %1271 = vmatprep.subr.mxu0 0.0
    %1272 = vmatpush1.msra.mxu0 0.0
    %1273 = vmatprep.subr.mxu0 0.0
    %1274 = vmatpush1.msra.mxu0 0.0
    %1275 = vmatprep.subr.mxu0 0.0
    %1276 = vmatpush1.msra.mxu0 0.0
    %1277 = vmatprep.subr.mxu0 0.0
    %1278 = vmatpush1.msra.mxu0 0.0
    %1279 = vmatprep.subr.mxu0 0.0
    %1280 = vmatpush1.msra.mxu0 0.0
    %1281 = vmatprep.subr.mxu0 0.0
    %1282 = vmatpush1.msra.mxu0 0.0
    %1283 = vmatprep.subr.mxu0 0.0
    %1284 = vmatpush1.msra.mxu0 0.0
    %1285 = vmatprep.subr.mxu0 0.0
    %1286 = vmatpush1.msra.mxu0 0.0
    %1287 = vmatprep.subr.mxu0 0.0
    %1288 = vmatpush1.msra.mxu0 0.0
    %1289 = vmatprep.subr.mxu0 0.0
    %1290 = vmatpush1.msra.mxu0 0.0
    %1291 = vmatprep.subr.mxu0 0.0
    %1292 = vmatpush1.msra.mxu0 0.0
    %1293 = vmatprep.subr.mxu0 0.0
    %1294 = vmatpush1.msra.mxu0 0.0
    %1295 = vmatprep.subr.mxu0 0.0
    %1296 = vmatpush1.msra.mxu0 0.0
    %1297 = vmatprep.subr.mxu0 0.0
    %1298 = vmatpush1.msra.mxu0 0.0
    %1299 = vmatprep.subr.mxu0 0.0
    %1300 = vmatpush1.msra.mxu0 0.0
    %1301 = vmatprep.subr.mxu0 0.0
    %1302 = vmatpush1.msra.mxu0 0.0
    %1303 = vmatprep.mubr.f32.mxu0 0.0
    %1304 = vmatmul.mubr.f32.gmra.mrb[0].mxu0 %v1097
    %v1305 = vpop.f32.mrb[0].mxu0
    %v1306 = vadd.f32 0.0, %v1305
    %v1307 = vpop.f32.mrb[0].mxu0
    %v1308 = vadd.f32 0.0, %v1307
    %1309 = vdwg.mxu0
    %v1310 = vadd.f32 %v1100, %v1235
    %v1311 = vadd.f32 %v1101, %v1237
    %v1312 = vadd.f32 %v1102, %v1306
    %v1313 = vadd.f32 %v1103, %v1308
    %v1314 = vxor.u32 %v1310, 2147483648
    %v1315 = vmul.f32 %v1314, 1.442695
    %v1316 = vpow.pop %v1315
    %v1317 = vadd.f32 %v1316, 1.0
    %v1318 = vrcp.pop %v1317
    %v1319 = vmul.f32 1.0, %v1318
    %v1320 = vxor.u32 %v1311, 2147483648
    %v1321 = vmul.f32 %v1320, 1.442695
    %v1322 = vpow.pop %v1321
    %v1323 = vadd.f32 %v1322, 1.0
    %v1324 = vrcp.pop %v1323
    %v1325 = vmul.f32 1.0, %v1324
    %v1326 = vtanh.pop %v1312
    %v1327 = vxor.u32 %v1313, 2147483648
    %v1328 = vmul.f32 %v1327, 1.442695
    %v1329 = vpow.pop %v1328
    %v1330 = vadd.f32 %v1329, 1.0
    %v1331 = vrcp.pop %v1330
    %v1332 = vmul.f32 1.0, %v1331
    %v1333 = vmul.f32 %v1325, %v1098
    %v1334 = vmul.f32 %v1319, %v1326
    %v1335 = vadd.f32 %v1333, %v1334
    %v1336 = vtanh.pop %v1335
    %v1337 = vmul.f32 %v1332, %v1336
    %1338 = vst [vmem:[#allocation4] sm:$0xff] %v1335
    %1339 = vst [vmem:[#allocation3] sm:$0xff] %v1337
    %v1340 = vld [vmem:[#allocation3] sm:$0xff]
    %v1341 = vld [vmem:[#allocation4] sm:$0xff]
    %s1342 = scalar_lea.vmem [#allocation2], 128
    %v1343 = vld [vmem:[%s1342] sm:$0xff]
    %v1344 = vld [vmem:[%s1342 + $0x8] sm:$0xff]
    %v1345 = vld [vmem:[%s1342 + $0x10] sm:$0xff]
    %v1346 = vld [vmem:[%s1342 + $0x18] sm:$0xff]
    %v1347 = vld [vmem:[#allocation6] sm:$0xff]
    %v1348 = vld [vmem:[#allocation6 + $0x8] sm:$0xff]
    %v1349 = vld [vmem:[#allocation6 + $0x10] sm:$0xff]
    %v1350 = vld [vmem:[#allocation6 + $0x18] sm:$0xff]
    %v1351 = vld [vmem:[#allocation6 + $0x20] sm:$0xff]
    %v1352 = vld [vmem:[#allocation6 + $0x28] sm:$0xff]
    %v1353 = vld [vmem:[#allocation6 + $0x30] sm:$0xff]
    %v1354 = vld [vmem:[#allocation6 + $0x38] sm:$0xff]
    %v1355 = vld [vmem:[#allocation6 + $0x40] sm:$0xff]
    %v1356 = vld [vmem:[#allocation6 + $0x48] sm:$0xff]
    %v1357 = vld [vmem:[#allocation6 + $0x50] sm:$0xff]
    %v1358 = vld [vmem:[#allocation6 + $0x58] sm:$0xff]
    %v1359 = vld [vmem:[#allocation6 + $0x60] sm:$0xff]
    %v1360 = vld [vmem:[#allocation6 + $0x68] sm:$0xff]
    %v1361 = vld [vmem:[#allocation6 + $0x70] sm:$0xff]
    %v1362 = vld [vmem:[#allocation6 + $0x78] sm:$0xff]
    %v1363 = vld [vmem:[#allocation6 + $0x80] sm:$0xff]
    %v1364 = vld [vmem:[#allocation6 + $0x88] sm:$0xff]
    %v1365 = vld [vmem:[#allocation6 + $0x90] sm:$0xff]
    %v1366 = vld [vmem:[#allocation6 + $0x98] sm:$0xff]
    %v1367 = vld [vmem:[#allocation6 + $0xa0] sm:$0xff]
    %v1368 = vld [vmem:[#allocation6 + $0xa8] sm:$0xff]
    %v1369 = vld [vmem:[#allocation6 + $0xb0] sm:$0xff]
    %v1370 = vld [vmem:[#allocation6 + $0xb8] sm:$0xff]
    %v1371 = vld [vmem:[#allocation6 + $0xc0] sm:$0xff]
    %v1372 = vld [vmem:[#allocation6 + $0xc8] sm:$0xff]
    %v1373 = vld [vmem:[#allocation6 + $0xd0] sm:$0xff]
    %v1374 = vld [vmem:[#allocation6 + $0xd8] sm:$0xff]
    %v1375 = vld [vmem:[#allocation6 + $0xe0] sm:$0xff]
    %v1376 = vld [vmem:[#allocation6 + $0xe8] sm:$0xff]
    %v1377 = vld [vmem:[#allocation6 + $0xf0] sm:$0xff]
    %v1378 = vld [vmem:[#allocation6 + $0xf8] sm:$0xff]
    %v1379 = vld [vmem:[#allocation6 + $0x100] sm:$0xff]
    %v1380 = vld [vmem:[#allocation6 + $0x108] sm:$0xff]
    %v1381 = vld [vmem:[#allocation6 + $0x110] sm:$0xff]
    %v1382 = vld [vmem:[#allocation6 + $0x118] sm:$0xff]
    %v1383 = vld [vmem:[#allocation6 + $0x120] sm:$0xff]
    %v1384 = vld [vmem:[#allocation6 + $0x128] sm:$0xff]
    %v1385 = vld [vmem:[#allocation6 + $0x130] sm:$0xff]
    %v1386 = vld [vmem:[#allocation6 + $0x138] sm:$0xff]
    %v1387 = vld [vmem:[#allocation6 + $0x140] sm:$0xff]
    %v1388 = vld [vmem:[#allocation6 + $0x148] sm:$0xff]
    %v1389 = vld [vmem:[#allocation6 + $0x150] sm:$0xff]
    %v1390 = vld [vmem:[#allocation6 + $0x158] sm:$0xff]
    %v1391 = vld [vmem:[#allocation6 + $0x160] sm:$0xff]
    %v1392 = vld [vmem:[#allocation6 + $0x168] sm:$0xff]
    %v1393 = vld [vmem:[#allocation6 + $0x170] sm:$0xff]
    %v1394 = vld [vmem:[#allocation6 + $0x178] sm:$0xff]
    %v1395 = vld [vmem:[#allocation6 + $0x180] sm:$0xff]
    %v1396 = vld [vmem:[#allocation6 + $0x188] sm:$0xff]
    %v1397 = vld [vmem:[#allocation6 + $0x190] sm:$0xff]
    %v1398 = vld [vmem:[#allocation6 + $0x198] sm:$0xff]
    %v1399 = vld [vmem:[#allocation6 + $0x1a0] sm:$0xff]
    %v1400 = vld [vmem:[#allocation6 + $0x1a8] sm:$0xff]
    %v1401 = vld [vmem:[#allocation6 + $0x1b0] sm:$0xff]
    %v1402 = vld [vmem:[#allocation6 + $0x1b8] sm:$0xff]
    %v1403 = vld [vmem:[#allocation6 + $0x1c0] sm:$0xff]
    %v1404 = vld [vmem:[#allocation6 + $0x1c8] sm:$0xff]
    %v1405 = vld [vmem:[#allocation6 + $0x1d0] sm:$0xff]
    %v1406 = vld [vmem:[#allocation6 + $0x1d8] sm:$0xff]
    %v1407 = vld [vmem:[#allocation6 + $0x1e0] sm:$0xff]
    %v1408 = vld [vmem:[#allocation6 + $0x1e8] sm:$0xff]
    %v1409 = vld [vmem:[#allocation6 + $0x1f0] sm:$0xff]
    %v1410 = vld [vmem:[#allocation6 + $0x1f8] sm:$0xff]
    %1411 = vmatprep.subr.mxu0 %v1348
    %1412 = vmatpush1.msra.mxu0 %v1347
    %1413 = vmatprep.subr.mxu0 %v1352
    %1414 = vmatpush1.msra.mxu0 %v1351
    %1415 = vmatprep.subr.mxu0 %v1356
    %1416 = vmatpush1.msra.mxu0 %v1355
    %1417 = vmatprep.subr.mxu0 %v1360
    %1418 = vmatpush1.msra.mxu0 %v1359
    %1419 = vmatprep.subr.mxu0 %v1364
    %1420 = vmatpush1.msra.mxu0 %v1363
    %1421 = vmatprep.subr.mxu0 %v1368
    %1422 = vmatpush1.msra.mxu0 %v1367
    %1423 = vmatprep.subr.mxu0 %v1372
    %1424 = vmatpush1.msra.mxu0 %v1371
    %1425 = vmatprep.subr.mxu0 %v1376
    %1426 = vmatpush1.msra.mxu0 %v1375
    %1427 = vmatprep.subr.mxu0 %v1380
    %1428 = vmatpush1.msra.mxu0 %v1379
    %1429 = vmatprep.subr.mxu0 %v1384
    %1430 = vmatpush1.msra.mxu0 %v1383
    %1431 = vmatprep.subr.mxu0 %v1388
    %1432 = vmatpush1.msra.mxu0 %v1387
    %1433 = vmatprep.subr.mxu0 %v1392
    %1434 = vmatpush1.msra.mxu0 %v1391
    %1435 = vmatprep.subr.mxu0 %v1396
    %1436 = vmatpush1.msra.mxu0 %v1395
    %1437 = vmatprep.subr.mxu0 %v1400
    %1438 = vmatpush1.msra.mxu0 %v1399
    %1439 = vmatprep.subr.mxu0 %v1404
    %1440 = vmatpush1.msra.mxu0 %v1403
    %1441 = vmatprep.subr.mxu0 %v1408
    %1442 = vmatpush1.msra.mxu0 %v1407
    %1443 = vmatprep.subr.mxu0 0.0
    %1444 = vmatpush1.msra.mxu0 0.0
    %1445 = vmatprep.subr.mxu0 0.0
    %1446 = vmatpush1.msra.mxu0 0.0
    %1447 = vmatprep.subr.mxu0 0.0
    %1448 = vmatpush1.msra.mxu0 0.0
    %1449 = vmatprep.subr.mxu0 0.0
    %1450 = vmatpush1.msra.mxu0 0.0
    %1451 = vmatprep.subr.mxu0 0.0
    %1452 = vmatpush1.msra.mxu0 0.0
    %1453 = vmatprep.subr.mxu0 0.0
    %1454 = vmatpush1.msra.mxu0 0.0
    %1455 = vmatprep.subr.mxu0 0.0
    %1456 = vmatpush1.msra.mxu0 0.0
    %1457 = vmatprep.subr.mxu0 0.0
    %1458 = vmatpush1.msra.mxu0 0.0
    %1459 = vmatprep.subr.mxu0 0.0
    %1460 = vmatpush1.msra.mxu0 0.0
    %1461 = vmatprep.subr.mxu0 0.0
    %1462 = vmatpush1.msra.mxu0 0.0
    %1463 = vmatprep.subr.mxu0 0.0
    %1464 = vmatpush1.msra.mxu0 0.0
    %1465 = vmatprep.subr.mxu0 0.0
    %1466 = vmatpush1.msra.mxu0 0.0
    %1467 = vmatprep.subr.mxu0 0.0
    %1468 = vmatpush1.msra.mxu0 0.0
    %1469 = vmatprep.subr.mxu0 0.0
    %1470 = vmatpush1.msra.mxu0 0.0
    %1471 = vmatprep.subr.mxu0 0.0
    %1472 = vmatpush1.msra.mxu0 0.0
    %1473 = vmatprep.subr.mxu0 0.0
    %1474 = vmatpush1.msra.mxu0 0.0
    %1475 = vmatprep.mubr.f32.mxu0 0.0
    %1476 = vmatmul.mubr.f32.gmra.mrb[0].mxu0 %v1340
    %v1477 = vpop.f32.mrb[0].mxu0
    %v1478 = vadd.f32 0.0, %v1477
    %v1479 = vpop.f32.mrb[0].mxu0
    %v1480 = vadd.f32 0.0, %v1479
    %1481 = vdwg.mxu0
    %1482 = vmatprep.subr.mxu0 %v1350
    %1483 = vmatpush1.msra.mxu0 %v1349
    %1484 = vmatprep.subr.mxu0 %v1354
    %1485 = vmatpush1.msra.mxu0 %v1353
    %1486 = vmatprep.subr.mxu0 %v1358
    %1487 = vmatpush1.msra.mxu0 %v1357
    %1488 = vmatprep.subr.mxu0 %v1362
    %1489 = vmatpush1.msra.mxu0 %v1361
    %1490 = vmatprep.subr.mxu0 %v1366
    %1491 = vmatpush1.msra.mxu0 %v1365
    %1492 = vmatprep.subr.mxu0 %v1370
    %1493 = vmatpush1.msra.mxu0 %v1369
    %1494 = vmatprep.subr.mxu0 %v1374
    %1495 = vmatpush1.msra.mxu0 %v1373
    %1496 = vmatprep.subr.mxu0 %v1378
    %1497 = vmatpush1.msra.mxu0 %v1377
    %1498 = vmatprep.subr.mxu0 %v1382
    %1499 = vmatpush1.msra.mxu0 %v1381
    %1500 = vmatprep.subr.mxu0 %v1386
    %1501 = vmatpush1.msra.mxu0 %v1385
    %1502 = vmatprep.subr.mxu0 %v1390
    %1503 = vmatpush1.msra.mxu0 %v1389
    %1504 = vmatprep.subr.mxu0 %v1394
    %1505 = vmatpush1.msra.mxu0 %v1393
    %1506 = vmatprep.subr.mxu0 %v1398
    %1507 = vmatpush1.msra.mxu0 %v1397
    %1508 = vmatprep.subr.mxu0 %v1402
    %1509 = vmatpush1.msra.mxu0 %v1401
    %1510 = vmatprep.subr.mxu0 %v1406
    %1511 = vmatpush1.msra.mxu0 %v1405
    %1512 = vmatprep.subr.mxu0 %v1410
    %1513 = vmatpush1.msra.mxu0 %v1409
    %1514 = vmatprep.subr.mxu0 0.0
    %1515 = vmatpush1.msra.mxu0 0.0
    %1516 = vmatprep.subr.mxu0 0.0
    %1517 = vmatpush1.msra.mxu0 0.0
    %1518 = vmatprep.subr.mxu0 0.0
    %1519 = vmatpush1.msra.mxu0 0.0
    %1520 = vmatprep.subr.mxu0 0.0
    %1521 = vmatpush1.msra.mxu0 0.0
    %1522 = vmatprep.subr.mxu0 0.0
    %1523 = vmatpush1.msra.mxu0 0.0
    %1524 = vmatprep.subr.mxu0 0.0
    %1525 = vmatpush1.msra.mxu0 0.0
    %1526 = vmatprep.subr.mxu0 0.0
    %1527 = vmatpush1.msra.mxu0 0.0
    %1528 = vmatprep.subr.mxu0 0.0
    %1529 = vmatpush1.msra.mxu0 0.0
    %1530 = vmatprep.subr.mxu0 0.0
    %1531 = vmatpush1.msra.mxu0 0.0
    %1532 = vmatprep.subr.mxu0 0.0
    %1533 = vmatpush1.msra.mxu0 0.0
    %1534 = vmatprep.subr.mxu0 0.0
    %1535 = vmatpush1.msra.mxu0 0.0
    %1536 = vmatprep.subr.mxu0 0.0
    %1537 = vmatpush1.msra.mxu0 0.0
    %1538 = vmatprep.subr.mxu0 0.0
    %1539 = vmatpush1.msra.mxu0 0.0
    %1540 = vmatprep.subr.mxu0 0.0
    %1541 = vmatpush1.msra.mxu0 0.0
    %1542 = vmatprep.subr.mxu0 0.0
    %1543 = vmatpush1.msra.mxu0 0.0
    %1544 = vmatprep.subr.mxu0 0.0
    %1545 = vmatpush1.msra.mxu0 0.0
    %1546 = vmatprep.mubr.f32.mxu0 0.0
    %1547 = vmatmul.mubr.f32.gmra.mrb[0].mxu0 %v1340
    %v1548 = vpop.f32.mrb[0].mxu0
    %v1549 = vadd.f32 0.0, %v1548
    %v1550 = vpop.f32.mrb[0].mxu0
    %v1551 = vadd.f32 0.0, %v1550
    %1552 = vdwg.mxu0
    %v1553 = vadd.f32 %v1343, %v1478
    %v1554 = vadd.f32 %v1344, %v1480
    %v1555 = vadd.f32 %v1345, %v1549
    %v1556 = vadd.f32 %v1346, %v1551
    %v1557 = vxor.u32 %v1553, 2147483648
    %v1558 = vmul.f32 %v1557, 1.442695
    %v1559 = vpow.pop %v1558
    %v1560 = vadd.f32 %v1559, 1.0
    %v1561 = vrcp.pop %v1560
    %v1562 = vmul.f32 1.0, %v1561
    %v1563 = vxor.u32 %v1554, 2147483648
    %v1564 = vmul.f32 %v1563, 1.442695
    %v1565 = vpow.pop %v1564
    %v1566 = vadd.f32 %v1565, 1.0
    %v1567 = vrcp.pop %v1566
    %v1568 = vmul.f32 1.0, %v1567
    %v1569 = vtanh.pop %v1555
    %v1570 = vxor.u32 %v1556, 2147483648
    %v1571 = vmul.f32 %v1570, 1.442695
    %v1572 = vpow.pop %v1571
    %v1573 = vadd.f32 %v1572, 1.0
    %v1574 = vrcp.pop %v1573
    %v1575 = vmul.f32 1.0, %v1574
    %v1576 = vmul.f32 %v1568, %v1341
    %v1577 = vmul.f32 %v1562, %v1569
    %v1578 = vadd.f32 %v1576, %v1577
    %v1579 = vtanh.pop %v1578
    %v1580 = vmul.f32 %v1575, %v1579
    %1581 = vst [vmem:[#allocation4] sm:$0xff] %v1578
    %1582 = vst [vmem:[#allocation3] sm:$0xff] %v1580
    %v1583 = vld [vmem:[#allocation3] sm:$0xff]
    %v1584 = vld [vmem:[#allocation4] sm:$0xff]
    %s1585 = scalar_lea.vmem [#allocation2], 160
    %v1586 = vld [vmem:[%s1585] sm:$0xff]
    %v1587 = vld [vmem:[%s1585 + $0x8] sm:$0xff]
    %v1588 = vld [vmem:[%s1585 + $0x10] sm:$0xff]
    %v1589 = vld [vmem:[%s1585 + $0x18] sm:$0xff]
    %v1590 = vld [vmem:[#allocation6] sm:$0xff]
    %v1591 = vld [vmem:[#allocation6 + $0x8] sm:$0xff]
    %v1592 = vld [vmem:[#allocation6 + $0x10] sm:$0xff]
    %v1593 = vld [vmem:[#allocation6 + $0x18] sm:$0xff]
    %v1594 = vld [vmem:[#allocation6 + $0x20] sm:$0xff]
    %v1595 = vld [vmem:[#allocation6 + $0x28] sm:$0xff]
    %v1596 = vld [vmem:[#allocation6 + $0x30] sm:$0xff]
    %v1597 = vld [vmem:[#allocation6 + $0x38] sm:$0xff]
    %v1598 = vld [vmem:[#allocation6 + $0x40] sm:$0xff]
    %v1599 = vld [vmem:[#allocation6 + $0x48] sm:$0xff]
    %v1600 = vld [vmem:[#allocation6 + $0x50] sm:$0xff]
    %v1601 = vld [vmem:[#allocation6 + $0x58] sm:$0xff]
    %v1602 = vld [vmem:[#allocation6 + $0x60] sm:$0xff]
    %v1603 = vld [vmem:[#allocation6 + $0x68] sm:$0xff]
    %v1604 = vld [vmem:[#allocation6 + $0x70] sm:$0xff]
    %v1605 = vld [vmem:[#allocation6 + $0x78] sm:$0xff]
    %v1606 = vld [vmem:[#allocation6 + $0x80] sm:$0xff]
    %v1607 = vld [vmem:[#allocation6 + $0x88] sm:$0xff]
    %v1608 = vld [vmem:[#allocation6 + $0x90] sm:$0xff]
    %v1609 = vld [vmem:[#allocation6 + $0x98] sm:$0xff]
    %v1610 = vld [vmem:[#allocation6 + $0xa0] sm:$0xff]
    %v1611 = vld [vmem:[#allocation6 + $0xa8] sm:$0xff]
    %v1612 = vld [vmem:[#allocation6 + $0xb0] sm:$0xff]
    %v1613 = vld [vmem:[#allocation6 + $0xb8] sm:$0xff]
    %v1614 = vld [vmem:[#allocation6 + $0xc0] sm:$0xff]
    %v1615 = vld [vmem:[#allocation6 + $0xc8] sm:$0xff]
    %v1616 = vld [vmem:[#allocation6 + $0xd0] sm:$0xff]
    %v1617 = vld [vmem:[#allocation6 + $0xd8] sm:$0xff]
    %v1618 = vld [vmem:[#allocation6 + $0xe0] sm:$0xff]
    %v1619 = vld [vmem:[#allocation6 + $0xe8] sm:$0xff]
    %v1620 = vld [vmem:[#allocation6 + $0xf0] sm:$0xff]
    %v1621 = vld [vmem:[#allocation6 + $0xf8] sm:$0xff]
    %v1622 = vld [vmem:[#allocation6 + $0x100] sm:$0xff]
    %v1623 = vld [vmem:[#allocation6 + $0x108] sm:$0xff]
    %v1624 = vld [vmem:[#allocation6 + $0x110] sm:$0xff]
    %v1625 = vld [vmem:[#allocation6 + $0x118] sm:$0xff]
    %v1626 = vld [vmem:[#allocation6 + $0x120] sm:$0xff]
    %v1627 = vld [vmem:[#allocation6 + $0x128] sm:$0xff]
    %v1628 = vld [vmem:[#allocation6 + $0x130] sm:$0xff]
    %v1629 = vld [vmem:[#allocation6 + $0x138] sm:$0xff]
    %v1630 = vld [vmem:[#allocation6 + $0x140] sm:$0xff]
    %v1631 = vld [vmem:[#allocation6 + $0x148] sm:$0xff]
    %v1632 = vld [vmem:[#allocation6 + $0x150] sm:$0xff]
    %v1633 = vld [vmem:[#allocation6 + $0x158] sm:$0xff]
    %v1634 = vld [vmem:[#allocation6 + $0x160] sm:$0xff]
    %v1635 = vld [vmem:[#allocation6 + $0x168] sm:$0xff]
    %v1636 = vld [vmem:[#allocation6 + $0x170] sm:$0xff]
    %v1637 = vld [vmem:[#allocation6 + $0x178] sm:$0xff]
    %v1638 = vld [vmem:[#allocation6 + $0x180] sm:$0xff]
    %v1639 = vld [vmem:[#allocation6 + $0x188] sm:$0xff]
    %v1640 = vld [vmem:[#allocation6 + $0x190] sm:$0xff]
    %v1641 = vld [vmem:[#allocation6 + $0x198] sm:$0xff]
    %v1642 = vld [vmem:[#allocation6 + $0x1a0] sm:$0xff]
    %v1643 = vld [vmem:[#allocation6 + $0x1a8] sm:$0xff]
    %v1644 = vld [vmem:[#allocation6 + $0x1b0] sm:$0xff]
    %v1645 = vld [vmem:[#allocation6 + $0x1b8] sm:$0xff]
    %v1646 = vld [vmem:[#allocation6 + $0x1c0] sm:$0xff]
    %v1647 = vld [vmem:[#allocation6 + $0x1c8] sm:$0xff]
    %v1648 = vld [vmem:[#allocation6 + $0x1d0] sm:$0xff]
    %v1649 = vld [vmem:[#allocation6 + $0x1d8] sm:$0xff]
    %v1650 = vld [vmem:[#allocation6 + $0x1e0] sm:$0xff]
    %v1651 = vld [vmem:[#allocation6 + $0x1e8] sm:$0xff]
    %v1652 = vld [vmem:[#allocation6 + $0x1f0] sm:$0xff]
    %v1653 = vld [vmem:[#allocation6 + $0x1f8] sm:$0xff]
    %1654 = vmatprep.subr.mxu0 %v1591
    %1655 = vmatpush1.msra.mxu0 %v1590
    %1656 = vmatprep.subr.mxu0 %v1595
    %1657 = vmatpush1.msra.mxu0 %v1594
    %1658 = vmatprep.subr.mxu0 %v1599
    %1659 = vmatpush1.msra.mxu0 %v1598
    %1660 = vmatprep.subr.mxu0 %v1603
    %1661 = vmatpush1.msra.mxu0 %v1602
    %1662 = vmatprep.subr.mxu0 %v1607
    %1663 = vmatpush1.msra.mxu0 %v1606
    %1664 = vmatprep.subr.mxu0 %v1611
    %1665 = vmatpush1.msra.mxu0 %v1610
    %1666 = vmatprep.subr.mxu0 %v1615
    %1667 = vmatpush1.msra.mxu0 %v1614
    %1668 = vmatprep.subr.mxu0 %v1619
    %1669 = vmatpush1.msra.mxu0 %v1618
    %1670 = vmatprep.subr.mxu0 %v1623
    %1671 = vmatpush1.msra.mxu0 %v1622
    %1672 = vmatprep.subr.mxu0 %v1627
    %1673 = vmatpush1.msra.mxu0 %v1626
    %1674 = vmatprep.subr.mxu0 %v1631
    %1675 = vmatpush1.msra.mxu0 %v1630
    %1676 = vmatprep.subr.mxu0 %v1635
    %1677 = vmatpush1.msra.mxu0 %v1634
    %1678 = vmatprep.subr.mxu0 %v1639
    %1679 = vmatpush1.msra.mxu0 %v1638
    %1680 = vmatprep.subr.mxu0 %v1643
    %1681 = vmatpush1.msra.mxu0 %v1642
    %1682 = vmatprep.subr.mxu0 %v1647
    %1683 = vmatpush1.msra.mxu0 %v1646
    %1684 = vmatprep.subr.mxu0 %v1651
    %1685 = vmatpush1.msra.mxu0 %v1650
    %1686 = vmatprep.subr.mxu0 0.0
    %1687 = vmatpush1.msra.mxu0 0.0
    %1688 = vmatprep.subr.mxu0 0.0
    %1689 = vmatpush1.msra.mxu0 0.0
    %1690 = vmatprep.subr.mxu0 0.0
    %1691 = vmatpush1.msra.mxu0 0.0
    %1692 = vmatprep.subr.mxu0 0.0
    %1693 = vmatpush1.msra.mxu0 0.0
    %1694 = vmatprep.subr.mxu0 0.0
    %1695 = vmatpush1.msra.mxu0 0.0
    %1696 = vmatprep.subr.mxu0 0.0
    %1697 = vmatpush1.msra.mxu0 0.0
    %1698 = vmatprep.subr.mxu0 0.0
    %1699 = vmatpush1.msra.mxu0 0.0
    %1700 = vmatprep.subr.mxu0 0.0
    %1701 = vmatpush1.msra.mxu0 0.0
    %1702 = vmatprep.subr.mxu0 0.0
    %1703 = vmatpush1.msra.mxu0 0.0
    %1704 = vmatprep.subr.mxu0 0.0
    %1705 = vmatpush1.msra.mxu0 0.0
    %1706 = vmatprep.subr.mxu0 0.0
    %1707 = vmatpush1.msra.mxu0 0.0
    %1708 = vmatprep.subr.mxu0 0.0
    %1709 = vmatpush1.msra.mxu0 0.0
    %1710 = vmatprep.subr.mxu0 0.0
    %1711 = vmatpush1.msra.mxu0 0.0
    %1712 = vmatprep.subr.mxu0 0.0
    %1713 = vmatpush1.msra.mxu0 0.0
    %1714 = vmatprep.subr.mxu0 0.0
    %1715 = vmatpush1.msra.mxu0 0.0
    %1716 = vmatprep.subr.mxu0 0.0
    %1717 = vmatpush1.msra.mxu0 0.0
    %1718 = vmatprep.mubr.f32.mxu0 0.0
    %1719 = vmatmul.mubr.f32.gmra.mrb[0].mxu0 %v1583
    %v1720 = vpop.f32.mrb[0].mxu0
    %v1721 = vadd.f32 0.0, %v1720
    %v1722 = vpop.f32.mrb[0].mxu0
    %v1723 = vadd.f32 0.0, %v1722
    %1724 = vdwg.mxu0
    %1725 = vmatprep.subr.mxu0 %v1593
    %1726 = vmatpush1.msra.mxu0 %v1592
    %1727 = vmatprep.subr.mxu0 %v1597
    %1728 = vmatpush1.msra.mxu0 %v1596
    %1729 = vmatprep.subr.mxu0 %v1601
    %1730 = vmatpush1.msra.mxu0 %v1600
    %1731 = vmatprep.subr.mxu0 %v1605
    %1732 = vmatpush1.msra.mxu0 %v1604
    %1733 = vmatprep.subr.mxu0 %v1609
    %1734 = vmatpush1.msra.mxu0 %v1608
    %1735 = vmatprep.subr.mxu0 %v1613
    %1736 = vmatpush1.msra.mxu0 %v1612
    %1737 = vmatprep.subr.mxu0 %v1617
    %1738 = vmatpush1.msra.mxu0 %v1616
    %1739 = vmatprep.subr.mxu0 %v1621
    %1740 = vmatpush1.msra.mxu0 %v1620
    %1741 = vmatprep.subr.mxu0 %v1625
    %1742 = vmatpush1.msra.mxu0 %v1624
    %1743 = vmatprep.subr.mxu0 %v1629
    %1744 = vmatpush1.msra.mxu0 %v1628
    %1745 = vmatprep.subr.mxu0 %v1633
    %1746 = vmatpush1.msra.mxu0 %v1632
    %1747 = vmatprep.subr.mxu0 %v1637
    %1748 = vmatpush1.msra.mxu0 %v1636
    %1749 = vmatprep.subr.mxu0 %v1641
    %1750 = vmatpush1.msra.mxu0 %v1640
    %1751 = vmatprep.subr.mxu0 %v1645
    %1752 = vmatpush1.msra.mxu0 %v1644
    %1753 = vmatprep.subr.mxu0 %v1649
    %1754 = vmatpush1.msra.mxu0 %v1648
    %1755 = vmatprep.subr.mxu0 %v1653
    %1756 = vmatpush1.msra.mxu0 %v1652
    %1757 = vmatprep.subr.mxu0 0.0
    %1758 = vmatpush1.msra.mxu0 0.0
    %1759 = vmatprep.subr.mxu0 0.0
    %1760 = vmatpush1.msra.mxu0 0.0
    %1761 = vmatprep.subr.mxu0 0.0
    %1762 = vmatpush1.msra.mxu0 0.0
    %1763 = vmatprep.subr.mxu0 0.0
    %1764 = vmatpush1.msra.mxu0 0.0
    %1765 = vmatprep.subr.mxu0 0.0
    %1766 = vmatpush1.msra.mxu0 0.0
    %1767 = vmatprep.subr.mxu0 0.0
    %1768 = vmatpush1.msra.mxu0 0.0
    %1769 = vmatprep.subr.mxu0 0.0
    %1770 = vmatpush1.msra.mxu0 0.0
    %1771 = vmatprep.subr.mxu0 0.0
    %1772 = vmatpush1.msra.mxu0 0.0
    %1773 = vmatprep.subr.mxu0 0.0
    %1774 = vmatpush1.msra.mxu0 0.0
    %1775 = vmatprep.subr.mxu0 0.0
    %1776 = vmatpush1.msra.mxu0 0.0
    %1777 = vmatprep.subr.mxu0 0.0
    %1778 = vmatpush1.msra.mxu0 0.0
    %1779 = vmatprep.subr.mxu0 0.0
    %1780 = vmatpush1.msra.mxu0 0.0
    %1781 = vmatprep.subr.mxu0 0.0
    %1782 = vmatpush1.msra.mxu0 0.0
    %1783 = vmatprep.subr.mxu0 0.0
    %1784 = vmatpush1.msra.mxu0 0.0
    %1785 = vmatprep.subr.mxu0 0.0
    %1786 = vmatpush1.msra.mxu0 0.0
    %1787 = vmatprep.subr.mxu0 0.0
    %1788 = vmatpush1.msra.mxu0 0.0
    %1789 = vmatprep.mubr.f32.mxu0 0.0
    %1790 = vmatmul.mubr.f32.gmra.mrb[0].mxu0 %v1583
    %v1791 = vpop.f32.mrb[0].mxu0
    %v1792 = vadd.f32 0.0, %v1791
    %v1793 = vpop.f32.mrb[0].mxu0
    %v1794 = vadd.f32 0.0, %v1793
    %1795 = vdwg.mxu0
    %v1796 = vadd.f32 %v1586, %v1721
    %v1797 = vadd.f32 %v1587, %v1723
    %v1798 = vadd.f32 %v1588, %v1792
    %v1799 = vadd.f32 %v1589, %v1794
    %v1800 = vxor.u32 %v1796, 2147483648
    %v1801 = vmul.f32 %v1800, 1.442695
    %v1802 = vpow.pop %v1801
    %v1803 = vadd.f32 %v1802, 1.0
    %v1804 = vrcp.pop %v1803
    %v1805 = vmul.f32 1.0, %v1804
    %v1806 = vxor.u32 %v1797, 2147483648
    %v1807 = vmul.f32 %v1806, 1.442695
    %v1808 = vpow.pop %v1807
    %v1809 = vadd.f32 %v1808, 1.0
    %v1810 = vrcp.pop %v1809
    %v1811 = vmul.f32 1.0, %v1810
    %v1812 = vtanh.pop %v1798
    %v1813 = vxor.u32 %v1799, 2147483648
    %v1814 = vmul.f32 %v1813, 1.442695
    %v1815 = vpow.pop %v1814
    %v1816 = vadd.f32 %v1815, 1.0
    %v1817 = vrcp.pop %v1816
    %v1818 = vmul.f32 1.0, %v1817
    %v1819 = vmul.f32 %v1811, %v1584
    %v1820 = vmul.f32 %v1805, %v1812
    %v1821 = vadd.f32 %v1819, %v1820
    %v1822 = vtanh.pop %v1821
    %v1823 = vmul.f32 %v1818, %v1822
    %1824 = vst [vmem:[#allocation4] sm:$0xff] %v1821
    %1825 = vst [vmem:[#allocation3] sm:$0xff] %v1823
    %v1826 = vld [vmem:[#allocation3] sm:$0xff]
    %v1827 = vld [vmem:[#allocation4] sm:$0xff]
    %s1828 = scalar_lea.vmem [#allocation2], 192
    %v1829 = vld [vmem:[%s1828] sm:$0xff]
    %v1830 = vld [vmem:[%s1828 + $0x8] sm:$0xff]
    %v1831 = vld [vmem:[%s1828 + $0x10] sm:$0xff]
    %v1832 = vld [vmem:[%s1828 + $0x18] sm:$0xff]
    %v1833 = vld [vmem:[#allocation6] sm:$0xff]
    %v1834 = vld [vmem:[#allocation6 + $0x8] sm:$0xff]
    %v1835 = vld [vmem:[#allocation6 + $0x10] sm:$0xff]
    %v1836 = vld [vmem:[#allocation6 + $0x18] sm:$0xff]
    %v1837 = vld [vmem:[#allocation6 + $0x20] sm:$0xff]
    %v1838 = vld [vmem:[#allocation6 + $0x28] sm:$0xff]
    %v1839 = vld [vmem:[#allocation6 + $0x30] sm:$0xff]
    %v1840 = vld [vmem:[#allocation6 + $0x38] sm:$0xff]
    %v1841 = vld [vmem:[#allocation6 + $0x40] sm:$0xff]
    %v1842 = vld [vmem:[#allocation6 + $0x48] sm:$0xff]
    %v1843 = vld [vmem:[#allocation6 + $0x50] sm:$0xff]
    %v1844 = vld [vmem:[#allocation6 + $0x58] sm:$0xff]
    %v1845 = vld [vmem:[#allocation6 + $0x60] sm:$0xff]
    %v1846 = vld [vmem:[#allocation6 + $0x68] sm:$0xff]
    %v1847 = vld [vmem:[#allocation6 + $0x70] sm:$0xff]
    %v1848 = vld [vmem:[#allocation6 + $0x78] sm:$0xff]
    %v1849 = vld [vmem:[#allocation6 + $0x80] sm:$0xff]
    %v1850 = vld [vmem:[#allocation6 + $0x88] sm:$0xff]
    %v1851 = vld [vmem:[#allocation6 + $0x90] sm:$0xff]
    %v1852 = vld [vmem:[#allocation6 + $0x98] sm:$0xff]
    %v1853 = vld [vmem:[#allocation6 + $0xa0] sm:$0xff]
    %v1854 = vld [vmem:[#allocation6 + $0xa8] sm:$0xff]
    %v1855 = vld [vmem:[#allocation6 + $0xb0] sm:$0xff]
    %v1856 = vld [vmem:[#allocation6 + $0xb8] sm:$0xff]
    %v1857 = vld [vmem:[#allocation6 + $0xc0] sm:$0xff]
    %v1858 = vld [vmem:[#allocation6 + $0xc8] sm:$0xff]
    %v1859 = vld [vmem:[#allocation6 + $0xd0] sm:$0xff]
    %v1860 = vld [vmem:[#allocation6 + $0xd8] sm:$0xff]
    %v1861 = vld [vmem:[#allocation6 + $0xe0] sm:$0xff]
    %v1862 = vld [vmem:[#allocation6 + $0xe8] sm:$0xff]
    %v1863 = vld [vmem:[#allocation6 + $0xf0] sm:$0xff]
    %v1864 = vld [vmem:[#allocation6 + $0xf8] sm:$0xff]
    %v1865 = vld [vmem:[#allocation6 + $0x100] sm:$0xff]
    %v1866 = vld [vmem:[#allocation6 + $0x108] sm:$0xff]
    %v1867 = vld [vmem:[#allocation6 + $0x110] sm:$0xff]
    %v1868 = vld [vmem:[#allocation6 + $0x118] sm:$0xff]
    %v1869 = vld [vmem:[#allocation6 + $0x120] sm:$0xff]
    %v1870 = vld [vmem:[#allocation6 + $0x128] sm:$0xff]
    %v1871 = vld [vmem:[#allocation6 + $0x130] sm:$0xff]
    %v1872 = vld [vmem:[#allocation6 + $0x138] sm:$0xff]
    %v1873 = vld [vmem:[#allocation6 + $0x140] sm:$0xff]
    %v1874 = vld [vmem:[#allocation6 + $0x148] sm:$0xff]
    %v1875 = vld [vmem:[#allocation6 + $0x150] sm:$0xff]
    %v1876 = vld [vmem:[#allocation6 + $0x158] sm:$0xff]
    %v1877 = vld [vmem:[#allocation6 + $0x160] sm:$0xff]
    %v1878 = vld [vmem:[#allocation6 + $0x168] sm:$0xff]
    %v1879 = vld [vmem:[#allocation6 + $0x170] sm:$0xff]
    %v1880 = vld [vmem:[#allocation6 + $0x178] sm:$0xff]
    %v1881 = vld [vmem:[#allocation6 + $0x180] sm:$0xff]
    %v1882 = vld [vmem:[#allocation6 + $0x188] sm:$0xff]
    %v1883 = vld [vmem:[#allocation6 + $0x190] sm:$0xff]
    %v1884 = vld [vmem:[#allocation6 + $0x198] sm:$0xff]
    %v1885 = vld [vmem:[#allocation6 + $0x1a0] sm:$0xff]
    %v1886 = vld [vmem:[#allocation6 + $0x1a8] sm:$0xff]
    %v1887 = vld [vmem:[#allocation6 + $0x1b0] sm:$0xff]
    %v1888 = vld [vmem:[#allocation6 + $0x1b8] sm:$0xff]
    %v1889 = vld [vmem:[#allocation6 + $0x1c0] sm:$0xff]
    %v1890 = vld [vmem:[#allocation6 + $0x1c8] sm:$0xff]
    %v1891 = vld [vmem:[#allocation6 + $0x1d0] sm:$0xff]
    %v1892 = vld [vmem:[#allocation6 + $0x1d8] sm:$0xff]
    %v1893 = vld [vmem:[#allocation6 + $0x1e0] sm:$0xff]
    %v1894 = vld [vmem:[#allocation6 + $0x1e8] sm:$0xff]
    %v1895 = vld [vmem:[#allocation6 + $0x1f0] sm:$0xff]
    %v1896 = vld [vmem:[#allocation6 + $0x1f8] sm:$0xff]
    %1897 = vmatprep.subr.mxu0 %v1834
    %1898 = vmatpush1.msra.mxu0 %v1833
    %1899 = vmatprep.subr.mxu0 %v1838
    %1900 = vmatpush1.msra.mxu0 %v1837
    %1901 = vmatprep.subr.mxu0 %v1842
    %1902 = vmatpush1.msra.mxu0 %v1841
    %1903 = vmatprep.subr.mxu0 %v1846
    %1904 = vmatpush1.msra.mxu0 %v1845
    %1905 = vmatprep.subr.mxu0 %v1850
    %1906 = vmatpush1.msra.mxu0 %v1849
    %1907 = vmatprep.subr.mxu0 %v1854
    %1908 = vmatpush1.msra.mxu0 %v1853
    %1909 = vmatprep.subr.mxu0 %v1858
    %1910 = vmatpush1.msra.mxu0 %v1857
    %1911 = vmatprep.subr.mxu0 %v1862
    %1912 = vmatpush1.msra.mxu0 %v1861
    %1913 = vmatprep.subr.mxu0 %v1866
    %1914 = vmatpush1.msra.mxu0 %v1865
    %1915 = vmatprep.subr.mxu0 %v1870
    %1916 = vmatpush1.msra.mxu0 %v1869
    %1917 = vmatprep.subr.mxu0 %v1874
    %1918 = vmatpush1.msra.mxu0 %v1873
    %1919 = vmatprep.subr.mxu0 %v1878
    %1920 = vmatpush1.msra.mxu0 %v1877
    %1921 = vmatprep.subr.mxu0 %v1882
    %1922 = vmatpush1.msra.mxu0 %v1881
    %1923 = vmatprep.subr.mxu0 %v1886
    %1924 = vmatpush1.msra.mxu0 %v1885
    %1925 = vmatprep.subr.mxu0 %v1890
    %1926 = vmatpush1.msra.mxu0 %v1889
    %1927 = vmatprep.subr.mxu0 %v1894
    %1928 = vmatpush1.msra.mxu0 %v1893
    %1929 = vmatprep.subr.mxu0 0.0
    %1930 = vmatpush1.msra.mxu0 0.0
    %1931 = vmatprep.subr.mxu0 0.0
    %1932 = vmatpush1.msra.mxu0 0.0
    %1933 = vmatprep.subr.mxu0 0.0
    %1934 = vmatpush1.msra.mxu0 0.0
    %1935 = vmatprep.subr.mxu0 0.0
    %1936 = vmatpush1.msra.mxu0 0.0
    %1937 = vmatprep.subr.mxu0 0.0
    %1938 = vmatpush1.msra.mxu0 0.0
    %1939 = vmatprep.subr.mxu0 0.0
    %1940 = vmatpush1.msra.mxu0 0.0
    %1941 = vmatprep.subr.mxu0 0.0
    %1942 = vmatpush1.msra.mxu0 0.0
    %1943 = vmatprep.subr.mxu0 0.0
    %1944 = vmatpush1.msra.mxu0 0.0
    %1945 = vmatprep.subr.mxu0 0.0
    %1946 = vmatpush1.msra.mxu0 0.0
    %1947 = vmatprep.subr.mxu0 0.0
    %1948 = vmatpush1.msra.mxu0 0.0
    %1949 = vmatprep.subr.mxu0 0.0
    %1950 = vmatpush1.msra.mxu0 0.0
    %1951 = vmatprep.subr.mxu0 0.0
    %1952 = vmatpush1.msra.mxu0 0.0
    %1953 = vmatprep.subr.mxu0 0.0
    %1954 = vmatpush1.msra.mxu0 0.0
    %1955 = vmatprep.subr.mxu0 0.0
    %1956 = vmatpush1.msra.mxu0 0.0
    %1957 = vmatprep.subr.mxu0 0.0
    %1958 = vmatpush1.msra.mxu0 0.0
    %1959 = vmatprep.subr.mxu0 0.0
    %1960 = vmatpush1.msra.mxu0 0.0
    %1961 = vmatprep.mubr.f32.mxu0 0.0
    %1962 = vmatmul.mubr.f32.gmra.mrb[0].mxu0 %v1826
    %v1963 = vpop.f32.mrb[0].mxu0
    %v1964 = vadd.f32 0.0, %v1963
    %v1965 = vpop.f32.mrb[0].mxu0
    %v1966 = vadd.f32 0.0, %v1965
    %1967 = vdwg.mxu0
    %1968 = vmatprep.subr.mxu0 %v1836
    %1969 = vmatpush1.msra.mxu0 %v1835
    %1970 = vmatprep.subr.mxu0 %v1840
    %1971 = vmatpush1.msra.mxu0 %v1839
    %1972 = vmatprep.subr.mxu0 %v1844
    %1973 = vmatpush1.msra.mxu0 %v1843
    %1974 = vmatprep.subr.mxu0 %v1848
    %1975 = vmatpush1.msra.mxu0 %v1847
    %1976 = vmatprep.subr.mxu0 %v1852
    %1977 = vmatpush1.msra.mxu0 %v1851
    %1978 = vmatprep.subr.mxu0 %v1856
    %1979 = vmatpush1.msra.mxu0 %v1855
    %1980 = vmatprep.subr.mxu0 %v1860
    %1981 = vmatpush1.msra.mxu0 %v1859
    %1982 = vmatprep.subr.mxu0 %v1864
    %1983 = vmatpush1.msra.mxu0 %v1863
    %1984 = vmatprep.subr.mxu0 %v1868
    %1985 = vmatpush1.msra.mxu0 %v1867
    %1986 = vmatprep.subr.mxu0 %v1872
    %1987 = vmatpush1.msra.mxu0 %v1871
    %1988 = vmatprep.subr.mxu0 %v1876
    %1989 = vmatpush1.msra.mxu0 %v1875
    %1990 = vmatprep.subr.mxu0 %v1880
    %1991 = vmatpush1.msra.mxu0 %v1879
    %1992 = vmatprep.subr.mxu0 %v1884
    %1993 = vmatpush1.msra.mxu0 %v1883
    %1994 = vmatprep.subr.mxu0 %v1888
    %1995 = vmatpush1.msra.mxu0 %v1887
    %1996 = vmatprep.subr.mxu0 %v1892
    %1997 = vmatpush1.msra.mxu0 %v1891
    %1998 = vmatprep.subr.mxu0 %v1896
    %1999 = vmatpush1.msra.mxu0 %v1895
    %2000 = vmatprep.subr.mxu0 0.0
    %2001 = vmatpush1.msra.mxu0 0.0
    %2002 = vmatprep.subr.mxu0 0.0
    %2003 = vmatpush1.msra.mxu0 0.0
    %2004 = vmatprep.subr.mxu0 0.0
    %2005 = vmatpush1.msra.mxu0 0.0
    %2006 = vmatprep.subr.mxu0 0.0
    %2007 = vmatpush1.msra.mxu0 0.0
    %2008 = vmatprep.subr.mxu0 0.0
    %2009 = vmatpush1.msra.mxu0 0.0
    %2010 = vmatprep.subr.mxu0 0.0
    %2011 = vmatpush1.msra.mxu0 0.0
    %2012 = vmatprep.subr.mxu0 0.0
    %2013 = vmatpush1.msra.mxu0 0.0
    %2014 = vmatprep.subr.mxu0 0.0
    %2015 = vmatpush1.msra.mxu0 0.0
    %2016 = vmatprep.subr.mxu0 0.0
    %2017 = vmatpush1.msra.mxu0 0.0
    %2018 = vmatprep.subr.mxu0 0.0
    %2019 = vmatpush1.msra.mxu0 0.0
    %2020 = vmatprep.subr.mxu0 0.0
    %2021 = vmatpush1.msra.mxu0 0.0
    %2022 = vmatprep.subr.mxu0 0.0
    %2023 = vmatpush1.msra.mxu0 0.0
    %2024 = vmatprep.subr.mxu0 0.0
    %2025 = vmatpush1.msra.mxu0 0.0
    %2026 = vmatprep.subr.mxu0 0.0
    %2027 = vmatpush1.msra.mxu0 0.0
    %2028 = vmatprep.subr.mxu0 0.0
    %2029 = vmatpush1.msra.mxu0 0.0
    %2030 = vmatprep.subr.mxu0 0.0
    %2031 = vmatpush1.msra.mxu0 0.0
    %2032 = vmatprep.mubr.f32.mxu0 0.0
    %2033 = vmatmul.mubr.f32.gmra.mrb[0].mxu0 %v1826
    %v2034 = vpop.f32.mrb[0].mxu0
    %v2035 = vadd.f32 0.0, %v2034
    %v2036 = vpop.f32.mrb[0].mxu0
    %v2037 = vadd.f32 0.0, %v2036
    %2038 = vdwg.mxu0
    %v2039 = vadd.f32 %v1829, %v1964
    %v2040 = vadd.f32 %v1830, %v1966
    %v2041 = vadd.f32 %v1831, %v2035
    %v2042 = vadd.f32 %v1832, %v2037
    %v2043 = vxor.u32 %v2039, 2147483648
    %v2044 = vmul.f32 %v2043, 1.442695
    %v2045 = vpow.pop %v2044
    %v2046 = vadd.f32 %v2045, 1.0
    %v2047 = vrcp.pop %v2046
    %v2048 = vmul.f32 1.0, %v2047
    %v2049 = vxor.u32 %v2040, 2147483648
    %v2050 = vmul.f32 %v2049, 1.442695
    %v2051 = vpow.pop %v2050
    %v2052 = vadd.f32 %v2051, 1.0
    %v2053 = vrcp.pop %v2052
    %v2054 = vmul.f32 1.0, %v2053
    %v2055 = vtanh.pop %v2041
    %v2056 = vxor.u32 %v2042, 2147483648
    %v2057 = vmul.f32 %v2056, 1.442695
    %v2058 = vpow.pop %v2057
    %v2059 = vadd.f32 %v2058, 1.0
    %v2060 = vrcp.pop %v2059
    %v2061 = vmul.f32 1.0, %v2060
    %v2062 = vmul.f32 %v2054, %v1827
    %v2063 = vmul.f32 %v2048, %v2055
    %v2064 = vadd.f32 %v2062, %v2063
    %v2065 = vtanh.pop %v2064
    %v2066 = vmul.f32 %v2061, %v2065
    %2067 = vst [vmem:[#allocation4] sm:$0xff] %v2064
    %2068 = vst [vmem:[#allocation3] sm:$0xff] %v2066
    %v2069 = vld [vmem:[#allocation3] sm:$0xff]
    %v2070 = vld [vmem:[#allocation4] sm:$0xff]
    %s2071 = scalar_lea.vmem [#allocation2], 224
    %v2072 = vld [vmem:[%s2071] sm:$0xff]
    %v2073 = vld [vmem:[%s2071 + $0x8] sm:$0xff]
    %v2074 = vld [vmem:[%s2071 + $0x10] sm:$0xff]
    %v2075 = vld [vmem:[%s2071 + $0x18] sm:$0xff]
    %v2076 = vld [vmem:[#allocation6] sm:$0xff]
    %v2077 = vld [vmem:[#allocation6 + $0x8] sm:$0xff]
    %v2078 = vld [vmem:[#allocation6 + $0x10] sm:$0xff]
    %v2079 = vld [vmem:[#allocation6 + $0x18] sm:$0xff]
    %v2080 = vld [vmem:[#allocation6 + $0x20] sm:$0xff]
    %v2081 = vld [vmem:[#allocation6 + $0x28] sm:$0xff]
    %v2082 = vld [vmem:[#allocation6 + $0x30] sm:$0xff]
    %v2083 = vld [vmem:[#allocation6 + $0x38] sm:$0xff]
    %v2084 = vld [vmem:[#allocation6 + $0x40] sm:$0xff]
    %v2085 = vld [vmem:[#allocation6 + $0x48] sm:$0xff]
    %v2086 = vld [vmem:[#allocation6 + $0x50] sm:$0xff]
    %v2087 = vld [vmem:[#allocation6 + $0x58] sm:$0xff]
    %v2088 = vld [vmem:[#allocation6 + $0x60] sm:$0xff]
    %v2089 = vld [vmem:[#allocation6 + $0x68] sm:$0xff]
    %v2090 = vld [vmem:[#allocation6 + $0x70] sm:$0xff]
    %v2091 = vld [vmem:[#allocation6 + $0x78] sm:$0xff]
    %v2092 = vld [vmem:[#allocation6 + $0x80] sm:$0xff]
    %v2093 = vld [vmem:[#allocation6 + $0x88] sm:$0xff]
    %v2094 = vld [vmem:[#allocation6 + $0x90] sm:$0xff]
    %v2095 = vld [vmem:[#allocation6 + $0x98] sm:$0xff]
    %v2096 = vld [vmem:[#allocation6 + $0xa0] sm:$0xff]
    %v2097 = vld [vmem:[#allocation6 + $0xa8] sm:$0xff]
    %v2098 = vld [vmem:[#allocation6 + $0xb0] sm:$0xff]
    %v2099 = vld [vmem:[#allocation6 + $0xb8] sm:$0xff]
    %v2100 = vld [vmem:[#allocation6 + $0xc0] sm:$0xff]
    %v2101 = vld [vmem:[#allocation6 + $0xc8] sm:$0xff]
    %v2102 = vld [vmem:[#allocation6 + $0xd0] sm:$0xff]
    %v2103 = vld [vmem:[#allocation6 + $0xd8] sm:$0xff]
    %v2104 = vld [vmem:[#allocation6 + $0xe0] sm:$0xff]
    %v2105 = vld [vmem:[#allocation6 + $0xe8] sm:$0xff]
    %v2106 = vld [vmem:[#allocation6 + $0xf0] sm:$0xff]
    %v2107 = vld [vmem:[#allocation6 + $0xf8] sm:$0xff]
    %v2108 = vld [vmem:[#allocation6 + $0x100] sm:$0xff]
    %v2109 = vld [vmem:[#allocation6 + $0x108] sm:$0xff]
    %v2110 = vld [vmem:[#allocation6 + $0x110] sm:$0xff]
    %v2111 = vld [vmem:[#allocation6 + $0x118] sm:$0xff]
    %v2112 = vld [vmem:[#allocation6 + $0x120] sm:$0xff]
    %v2113 = vld [vmem:[#allocation6 + $0x128] sm:$0xff]
    %v2114 = vld [vmem:[#allocation6 + $0x130] sm:$0xff]
    %v2115 = vld [vmem:[#allocation6 + $0x138] sm:$0xff]
    %v2116 = vld [vmem:[#allocation6 + $0x140] sm:$0xff]
    %v2117 = vld [vmem:[#allocation6 + $0x148] sm:$0xff]
    %v2118 = vld [vmem:[#allocation6 + $0x150] sm:$0xff]
    %v2119 = vld [vmem:[#allocation6 + $0x158] sm:$0xff]
    %v2120 = vld [vmem:[#allocation6 + $0x160] sm:$0xff]
    %v2121 = vld [vmem:[#allocation6 + $0x168] sm:$0xff]
    %v2122 = vld [vmem:[#allocation6 + $0x170] sm:$0xff]
    %v2123 = vld [vmem:[#allocation6 + $0x178] sm:$0xff]
    %v2124 = vld [vmem:[#allocation6 + $0x180] sm:$0xff]
    %v2125 = vld [vmem:[#allocation6 + $0x188] sm:$0xff]
    %v2126 = vld [vmem:[#allocation6 + $0x190] sm:$0xff]
    %v2127 = vld [vmem:[#allocation6 + $0x198] sm:$0xff]
    %v2128 = vld [vmem:[#allocation6 + $0x1a0] sm:$0xff]
    %v2129 = vld [vmem:[#allocation6 + $0x1a8] sm:$0xff]
    %v2130 = vld [vmem:[#allocation6 + $0x1b0] sm:$0xff]
    %v2131 = vld [vmem:[#allocation6 + $0x1b8] sm:$0xff]
    %v2132 = vld [vmem:[#allocation6 + $0x1c0] sm:$0xff]
    %v2133 = vld [vmem:[#allocation6 + $0x1c8] sm:$0xff]
    %v2134 = vld [vmem:[#allocation6 + $0x1d0] sm:$0xff]
    %v2135 = vld [vmem:[#allocation6 + $0x1d8] sm:$0xff]
    %v2136 = vld [vmem:[#allocation6 + $0x1e0] sm:$0xff]
    %v2137 = vld [vmem:[#allocation6 + $0x1e8] sm:$0xff]
    %v2138 = vld [vmem:[#allocation6 + $0x1f0] sm:$0xff]
    %v2139 = vld [vmem:[#allocation6 + $0x1f8] sm:$0xff]
    %2140 = vmatprep.subr.mxu0 %v2077
    %2141 = vmatpush1.msra.mxu0 %v2076
    %2142 = vmatprep.subr.mxu0 %v2081
    %2143 = vmatpush1.msra.mxu0 %v2080
    %2144 = vmatprep.subr.mxu0 %v2085
    %2145 = vmatpush1.msra.mxu0 %v2084
    %2146 = vmatprep.subr.mxu0 %v2089
    %2147 = vmatpush1.msra.mxu0 %v2088
    %2148 = vmatprep.subr.mxu0 %v2093
    %2149 = vmatpush1.msra.mxu0 %v2092
    %2150 = vmatprep.subr.mxu0 %v2097
    %2151 = vmatpush1.msra.mxu0 %v2096
    %2152 = vmatprep.subr.mxu0 %v2101
    %2153 = vmatpush1.msra.mxu0 %v2100
    %2154 = vmatprep.subr.mxu0 %v2105
    %2155 = vmatpush1.msra.mxu0 %v2104
    %2156 = vmatprep.subr.mxu0 %v2109
    %2157 = vmatpush1.msra.mxu0 %v2108
    %2158 = vmatprep.subr.mxu0 %v2113
    %2159 = vmatpush1.msra.mxu0 %v2112
    %2160 = vmatprep.subr.mxu0 %v2117
    %2161 = vmatpush1.msra.mxu0 %v2116
    %2162 = vmatprep.subr.mxu0 %v2121
    %2163 = vmatpush1.msra.mxu0 %v2120
    %2164 = vmatprep.subr.mxu0 %v2125
    %2165 = vmatpush1.msra.mxu0 %v2124
    %2166 = vmatprep.subr.mxu0 %v2129
    %2167 = vmatpush1.msra.mxu0 %v2128
    %2168 = vmatprep.subr.mxu0 %v2133
    %2169 = vmatpush1.msra.mxu0 %v2132
    %2170 = vmatprep.subr.mxu0 %v2137
    %2171 = vmatpush1.msra.mxu0 %v2136
    %2172 = vmatprep.subr.mxu0 0.0
    %2173 = vmatpush1.msra.mxu0 0.0
    %2174 = vmatprep.subr.mxu0 0.0
    %2175 = vmatpush1.msra.mxu0 0.0
    %2176 = vmatprep.subr.mxu0 0.0
    %2177 = vmatpush1.msra.mxu0 0.0
    %2178 = vmatprep.subr.mxu0 0.0
    %2179 = vmatpush1.msra.mxu0 0.0
    %2180 = vmatprep.subr.mxu0 0.0
    %2181 = vmatpush1.msra.mxu0 0.0
    %2182 = vmatprep.subr.mxu0 0.0
    %2183 = vmatpush1.msra.mxu0 0.0
    %2184 = vmatprep.subr.mxu0 0.0
    %2185 = vmatpush1.msra.mxu0 0.0
    %2186 = vmatprep.subr.mxu0 0.0
    %2187 = vmatpush1.msra.mxu0 0.0
    %2188 = vmatprep.subr.mxu0 0.0
    %2189 = vmatpush1.msra.mxu0 0.0
    %2190 = vmatprep.subr.mxu0 0.0
    %2191 = vmatpush1.msra.mxu0 0.0
    %2192 = vmatprep.subr.mxu0 0.0
    %2193 = vmatpush1.msra.mxu0 0.0
    %2194 = vmatprep.subr.mxu0 0.0
    %2195 = vmatpush1.msra.mxu0 0.0
    %2196 = vmatprep.subr.mxu0 0.0
    %2197 = vmatpush1.msra.mxu0 0.0
    %2198 = vmatprep.subr.mxu0 0.0
    %2199 = vmatpush1.msra.mxu0 0.0
    %2200 = vmatprep.subr.mxu0 0.0
    %2201 = vmatpush1.msra.mxu0 0.0
    %2202 = vmatprep.subr.mxu0 0.0
    %2203 = vmatpush1.msra.mxu0 0.0
    %2204 = vmatprep.mubr.f32.mxu0 0.0
    %2205 = vmatmul.mubr.f32.gmra.mrb[0].mxu0 %v2069
    %v2206 = vpop.f32.mrb[0].mxu0
    %v2207 = vadd.f32 0.0, %v2206
    %v2208 = vpop.f32.mrb[0].mxu0
    %v2209 = vadd.f32 0.0, %v2208
    %2210 = vdwg.mxu0
    %2211 = vmatprep.subr.mxu0 %v2079
    %2212 = vmatpush1.msra.mxu0 %v2078
    %2213 = vmatprep.subr.mxu0 %v2083
    %2214 = vmatpush1.msra.mxu0 %v2082
    %2215 = vmatprep.subr.mxu0 %v2087
    %2216 = vmatpush1.msra.mxu0 %v2086
    %2217 = vmatprep.subr.mxu0 %v2091
    %2218 = vmatpush1.msra.mxu0 %v2090
    %2219 = vmatprep.subr.mxu0 %v2095
    %2220 = vmatpush1.msra.mxu0 %v2094
    %2221 = vmatprep.subr.mxu0 %v2099
    %2222 = vmatpush1.msra.mxu0 %v2098
    %2223 = vmatprep.subr.mxu0 %v2103
    %2224 = vmatpush1.msra.mxu0 %v2102
    %2225 = vmatprep.subr.mxu0 %v2107
    %2226 = vmatpush1.msra.mxu0 %v2106
    %2227 = vmatprep.subr.mxu0 %v2111
    %2228 = vmatpush1.msra.mxu0 %v2110
    %2229 = vmatprep.subr.mxu0 %v2115
    %2230 = vmatpush1.msra.mxu0 %v2114
    %2231 = vmatprep.subr.mxu0 %v2119
    %2232 = vmatpush1.msra.mxu0 %v2118
    %2233 = vmatprep.subr.mxu0 %v2123
    %2234 = vmatpush1.msra.mxu0 %v2122
    %2235 = vmatprep.subr.mxu0 %v2127
    %2236 = vmatpush1.msra.mxu0 %v2126
    %2237 = vmatprep.subr.mxu0 %v2131
    %2238 = vmatpush1.msra.mxu0 %v2130
    %2239 = vmatprep.subr.mxu0 %v2135
    %2240 = vmatpush1.msra.mxu0 %v2134
    %2241 = vmatprep.subr.mxu0 %v2139
    %2242 = vmatpush1.msra.mxu0 %v2138
    %2243 = vmatprep.subr.mxu0 0.0
    %2244 = vmatpush1.msra.mxu0 0.0
    %2245 = vmatprep.subr.mxu0 0.0
    %2246 = vmatpush1.msra.mxu0 0.0
    %2247 = vmatprep.subr.mxu0 0.0
    %2248 = vmatpush1.msra.mxu0 0.0
    %2249 = vmatprep.subr.mxu0 0.0
    %2250 = vmatpush1.msra.mxu0 0.0
    %2251 = vmatprep.subr.mxu0 0.0
    %2252 = vmatpush1.msra.mxu0 0.0
    %2253 = vmatprep.subr.mxu0 0.0
    %2254 = vmatpush1.msra.mxu0 0.0
    %2255 = vmatprep.subr.mxu0 0.0
    %2256 = vmatpush1.msra.mxu0 0.0
    %2257 = vmatprep.subr.mxu0 0.0
    %2258 = vmatpush1.msra.mxu0 0.0
    %2259 = vmatprep.subr.mxu0 0.0
    %2260 = vmatpush1.msra.mxu0 0.0
    %2261 = vmatprep.subr.mxu0 0.0
    %2262 = vmatpush1.msra.mxu0 0.0
    %2263 = vmatprep.subr.mxu0 0.0
    %2264 = vmatpush1.msra.mxu0 0.0
    %2265 = vmatprep.subr.mxu0 0.0
    %2266 = vmatpush1.msra.mxu0 0.0
    %2267 = vmatprep.subr.mxu0 0.0
    %2268 = vmatpush1.msra.mxu0 0.0
    %2269 = vmatprep.subr.mxu0 0.0
    %2270 = vmatpush1.msra.mxu0 0.0
    %2271 = vmatprep.subr.mxu0 0.0
    %2272 = vmatpush1.msra.mxu0 0.0
    %2273 = vmatprep.subr.mxu0 0.0
    %2274 = vmatpush1.msra.mxu0 0.0
    %2275 = vmatprep.mubr.f32.mxu0 0.0
    %2276 = vmatmul.mubr.f32.gmra.mrb[0].mxu0 %v2069
    %v2277 = vpop.f32.mrb[0].mxu0
    %v2278 = vadd.f32 0.0, %v2277
    %v2279 = vpop.f32.mrb[0].mxu0
    %v2280 = vadd.f32 0.0, %v2279
    %2281 = vdwg.mxu0
    %v2282 = vadd.f32 %v2072, %v2207
    %v2283 = vadd.f32 %v2073, %v2209
    %v2284 = vadd.f32 %v2074, %v2278
    %v2285 = vadd.f32 %v2075, %v2280
    %v2286 = vxor.u32 %v2282, 2147483648
    %v2287 = vmul.f32 %v2286, 1.442695
    %v2288 = vpow.pop %v2287
    %v2289 = vadd.f32 %v2288, 1.0
    %v2290 = vrcp.pop %v2289
    %v2291 = vmul.f32 1.0, %v2290
    %v2292 = vxor.u32 %v2283, 2147483648
    %v2293 = vmul.f32 %v2292, 1.442695
    %v2294 = vpow.pop %v2293
    %v2295 = vadd.f32 %v2294, 1.0
    %v2296 = vrcp.pop %v2295
    %v2297 = vmul.f32 1.0, %v2296
    %v2298 = vtanh.pop %v2284
    %v2299 = vxor.u32 %v2285, 2147483648
    %v2300 = vmul.f32 %v2299, 1.442695
    %v2301 = vpow.pop %v2300
    %v2302 = vadd.f32 %v2301, 1.0
    %v2303 = vrcp.pop %v2302
    %v2304 = vmul.f32 1.0, %v2303
    %v2305 = vmul.f32 %v2297, %v2070
    %v2306 = vmul.f32 %v2291, %v2298
    %v2307 = vadd.f32 %v2305, %v2306
    %v2308 = vtanh.pop %v2307
    %v2309 = vmul.f32 %v2304, %v2308
    %2310 = vst [vmem:[#allocation4] sm:$0xff] %v2307
    %2311 = vst [vmem:[#allocation3] sm:$0xff] %v2309
    %v2312 = vld [vmem:[#allocation3] sm:$0xff]
    %v2313 = vld [vmem:[%s4] sm:$0xff]
    %v2314 = vld [vmem:[%s4 + $0x8] sm:$0xff]
    %v2315 = vld [vmem:[%s4 + $0x10] sm:$0xff]
    %v2316 = vld [vmem:[%s4 + $0x18] sm:$0xff]
    %v2317 = vld [vmem:[%s4 + $0x20] sm:$0xff]
    %v2318 = vld [vmem:[%s4 + $0x28] sm:$0xff]
    %v2319 = vld [vmem:[%s4 + $0x30] sm:$0xff]
    %v2320 = vld [vmem:[%s4 + $0x38] sm:$0xff]
    %v2321 = vld [vmem:[%s4 + $0x40] sm:$0xff]
    %v2322 = vld [vmem:[%s4 + $0x48] sm:$0xff]
    %v2323 = vld [vmem:[%s4 + $0x50] sm:$0xff]
    %v2324 = vld [vmem:[%s4 + $0x58] sm:$0xff]
    %v2325 = vld [vmem:[%s4 + $0x60] sm:$0xff]
    %v2326 = vld [vmem:[%s4 + $0x68] sm:$0xff]
    %v2327 = vld [vmem:[%s4 + $0x70] sm:$0xff]
    %v2328 = vld [vmem:[%s4 + $0x78] sm:$0xff]
    %v2329 = vld [vmem:[#allocation5] sm:$0x1]
    %v2331 = vlaneseq
    %v2332 = vshrl.u32 %v2331, 7
    %v2333 = vsub.s32 0, %v2332
    %v2334 = vrot.slane %v2329, %v2333
    %2336 = vmatprep.subr.mxu0 0.0
    %2337 = vmatpush1.msra.mxu0 %v2313
    %2338 = vmatprep.subr.mxu0 0.0
    %2339 = vmatpush1.msra.mxu0 %v2314
    %2340 = vmatprep.subr.mxu0 0.0
    %2341 = vmatpush1.msra.mxu0 %v2315
    %2342 = vmatprep.subr.mxu0 0.0
    %2343 = vmatpush1.msra.mxu0 %v2316
    %2344 = vmatprep.subr.mxu0 0.0
    %2345 = vmatpush1.msra.mxu0 %v2317
    %2346 = vmatprep.subr.mxu0 0.0
    %2347 = vmatpush1.msra.mxu0 %v2318
    %2348 = vmatprep.subr.mxu0 0.0
    %2349 = vmatpush1.msra.mxu0 %v2319
    %2350 = vmatprep.subr.mxu0 0.0
    %2351 = vmatpush1.msra.mxu0 %v2320
    %2352 = vmatprep.subr.mxu0 0.0
    %2353 = vmatpush1.msra.mxu0 %v2321
    %2354 = vmatprep.subr.mxu0 0.0
    %2355 = vmatpush1.msra.mxu0 %v2322
    %2356 = vmatprep.subr.mxu0 0.0
    %2357 = vmatpush1.msra.mxu0 %v2323
    %2358 = vmatprep.subr.mxu0 0.0
    %2359 = vmatpush1.msra.mxu0 %v2324
    %2360 = vmatprep.subr.mxu0 0.0
    %2361 = vmatpush1.msra.mxu0 %v2325
    %2362 = vmatprep.subr.mxu0 0.0
    %2363 = vmatpush1.msra.mxu0 %v2326
    %2364 = vmatprep.subr.mxu0 0.0
    %2365 = vmatpush1.msra.mxu0 %v2327
    %2366 = vmatprep.subr.mxu0 0.0
    %2367 = vmatpush1.msra.mxu0 %v2328
    %2368 = vmatprep.subr.mxu0 0.0
    %2369 = vmatpush1.msra.mxu0 0.0
    %2370 = vmatprep.subr.mxu0 0.0
    %2371 = vmatpush1.msra.mxu0 0.0
    %2372 = vmatprep.subr.mxu0 0.0
    %2373 = vmatpush1.msra.mxu0 0.0
    %2374 = vmatprep.subr.mxu0 0.0
    %2375 = vmatpush1.msra.mxu0 0.0
    %2376 = vmatprep.subr.mxu0 0.0
    %2377 = vmatpush1.msra.mxu0 0.0
    %2378 = vmatprep.subr.mxu0 0.0
    %2379 = vmatpush1.msra.mxu0 0.0
    %2380 = vmatprep.subr.mxu0 0.0
    %2381 = vmatpush1.msra.mxu0 0.0
    %2382 = vmatprep.subr.mxu0 0.0
    %2383 = vmatpush1.msra.mxu0 0.0
    %2384 = vmatprep.subr.mxu0 0.0
    %2385 = vmatpush1.msra.mxu0 0.0
    %2386 = vmatprep.subr.mxu0 0.0
    %2387 = vmatpush1.msra.mxu0 0.0
    %2388 = vmatprep.subr.mxu0 0.0
    %2389 = vmatpush1.msra.mxu0 0.0
    %2390 = vmatprep.subr.mxu0 0.0
    %2391 = vmatpush1.msra.mxu0 0.0
    %2392 = vmatprep.subr.mxu0 0.0
    %2393 = vmatpush1.msra.mxu0 0.0
    %2394 = vmatprep.subr.mxu0 0.0
    %2395 = vmatpush1.msra.mxu0 0.0
    %2396 = vmatprep.subr.mxu0 0.0
    %2397 = vmatpush1.msra.mxu0 0.0
    %2398 = vmatprep.subr.mxu0 0.0
    %2399 = vmatpush1.msra.mxu0 0.0
    %2400 = vmatprep.mubr.f32.mxu0 0.0
    %2401 = vmatmul.mubr.f32.gmra.mrb[0].mxu0 %v2312
    %v2402 = vpop.f32.mrb[0].mxu0
    %v2403 = vadd.f32 %v2334, %v2402
    %v2404 = vpop.f32.mrb[0].mxu0
    %2405 = vdwg.mxu0
    %v2406 = vxor.u32 %v2403, 2147483648
    %v2407 = vmul.f32 %v2406, 1.442695
    %v2408 = vpow.pop %v2407
    %v2409 = vadd.f32 %v2408, 1.0
    %v2410 = vrcp.pop %v2409
    %v2411 = vmul.f32 1.0, %v2410
    %vm2412 = vcmask 7168
    %2413 = vst.msk [vmem:[%s6] sm:$0xff] %vm2412, %v2411
    // Predicated region
    $region30: #{tpu_custom_call.1} parent=1 // pred_check
      _
    $region31: #{tpu_custom_call.1} parent=1 // pred_check_branch
      %2415 = sbr.rel (0) target = $region33
    $region32: #{tpu_custom_call.1} parent=1 // pred_region
      _
    $region33: #{tpu_custom_call.1} parent=1 // pred_fallthru
      _
    // Predicated region
    $region34: #{tpu_custom_call.1} parent=1 // pred_check
      _
    $region35: #{tpu_custom_call.1} parent=1 // pred_check_branch
      %2417 = sbr.rel (0) target = $region37
    $region36: #{tpu_custom_call.1} parent=1 // pred_region
      _
    $region37: #{tpu_custom_call.1} parent=1 // pred_fallthru
      _
    %2418 = vsyncpa [#allocation7], 1

</llo_original>
